<compile_context>
chip_gen: v6e
topology: v6e:2x2x1
jax: 0.10.0
libtpu: 0.0.40
codegen_flags: <defaults>
</compile_context>

<pallas_src>
import numpy as np
import jax
import jax.numpy as jnp
from jax.experimental import pallas as pl
from jax.experimental.pallas import tpu as pltpu

# ----------------------- synthetic small configuration -----------------------
B = 2                    # batch
T = 32                   # cfg.INPUT.NUM_PRE_CLIPS
N = 16                   # cfg.MODEL.VLG.NUM_CLIPS
CIN = 64                 # FEATPOOL.INPUT_SIZE
HIDDEN = 32              # FEATPOOL.HIDDEN_SIZE
CMID = 32                # PREDICTOR.HIDDEN_SIZE
POOLING_COUNTS = [4, 2]  # FEAT2D.POOLING_COUNTS
KPRED = 3                # PREDICTOR.KERNEL_SIZE
NLAYERS = 2              # PREDICTOR.NUM_STACK_LAYERS
QUERY_DIM = 16           # raw word-feature dim
QUERY_LEN = 8            # words per query
# FEATPOOL.POS = 'none', PREDICTOR.POS = 'none', dropouts = 0 (eval mode)

# Derived spatial layout (flattened padded 2D proposal map, row stride WP).
FIRST_PAD = (KPRED - 1) * NLAYERS // 2      # 2
HP = N + 2 * FIRST_PAD                      # 20 padded map rows
WP = N + 2 * FIRST_PAD                      # 20 padded map cols (= row stride)
HO = HP - KPRED + 1                         # 18 conv1 output rows
WO = HO                                     # 18 conv1 valid cols per row
HO2 = HO - KPRED + 1                        # 16 conv2 output rows (== N)
WO2 = HO2                                   # 16 conv2 valid cols per row
NTAP = KPRED * KPRED                        # 9 conv taps
MAXOFF = (KPRED - 1) * WP + (KPRED - 1)     # 42 max tap lane offset

S2PAD = 384   # conv2 / output compute width  (3*128)
S1PAD = 512   # conv1 compute width           (4*128)
S0PAD = 640   # scattered padded 2D map width (5*128)

# Static layout guards (changing N / KPRED / NLAYERS / POOLING_COUNTS without
# re-deriving these would silently corrupt results).
assert HIDDEN == CMID, "misc packing assumes HIDDEN == CMID"
assert S2PAD % 128 == 0 and S1PAD % 128 == 0 and S0PAD % 128 == 0
assert S2PAD >= (HO2 - 1) * WP + WO2          # all valid conv2 outputs fit
assert S1PAD >= S2PAD + MAXOFF                # conv2 taps read inside y1
assert S0PAD >= S1PAD + MAXOFF                # conv1 taps read inside x2d
assert (N - 1 + FIRST_PAD) * WP + (N - 1 + FIRST_PAD) < S0PAD  # scatter fits


# ------------------------------- Pallas kernel --------------------------------
def vlg_kernel(feats_ref,    # (CIN, T)              bf16 video features
               ppad_ref,     # (T, N+2)              bf16 avg-pool + conv1d pad
               wvcat_ref,    # (HIDDEN, 3*CIN)       bf16 conv1d taps, K-stacked
               apad_ref,     # (N, S0PAD)            bf16 span-avg + 2D scatter
               w1cat_ref,    # (CMID, 9*HIDDEN)      bf16 3x3 conv1, K-stacked
               w2cat_ref,    # (CMID, 9*CMID)        bf16 3x3 conv2, K-stacked
               misc_ref,     # (32, 8)  f32 cols: bv | b1 | b2 | wiou | biou
               masks_ref,    # (3, S1PAD) f32 rows: w0m | w1m | mask2d
               out_ref,      # (1, S2PAD) f32
               enc_scr,      # VMEM (3*CIN, N)        bf16
               x2d_scr,      # VMEM (HIDDEN, S0PAD)   bf16
               slab1_scr,    # VMEM (9*HIDDEN, S1PAD) bf16
               y1_scr,       # VMEM (CMID, S1PAD)     bf16
               slab2_scr):   # VMEM (9*CMID, S2PAD)   bf16
    f32 = jnp.float32
    bf16 = jnp.bfloat16

    bv = misc_ref[:, 0:1]
    b1 = misc_ref[:, 1:2]
    b2 = misc_ref[:, 2:3]
    wiou = misc_ref[:, 3:4]
    biou = misc_ref[0:1, 4:5]
    w0m = masks_ref[0:1, :]            # (1, S1PAD)
    w1m = masks_ref[1:2, :S2PAD]       # (1, S2PAD)
    m2d = masks_ref[2:3, :S2PAD]       # (1, S2PAD)

    # ---- video encoder: AvgPool1d + Conv1d(k=3, pad=1) + ReLU, K-stacked ----
    pooled = jnp.dot(feats_ref[...], ppad_ref[...],
                     preferred_element_type=f32)          # (CIN, N+2)
    for a in range(KPRED):                                # 3 shifted tap views
        enc_scr[a * CIN:(a + 1) * CIN, :] = pooled[:, a:a + N].astype(bf16)
    x = jnp.maximum(
        jnp.dot(wvcat_ref[...], enc_scr[...], preferred_element_type=f32) + bv,
        0.0)                                              # (HIDDEN, N)
    # TODO(synk): GCNeXt context_aggregator is not defined in the provided
    # source; treated as identity.

    # ---- anchor span-average pooling + scatter into the padded 2D map ----
    # TODO(synk): Graph_Matching_Module / Cross_Attention_Pooling /
    # lstm_encoder are not defined in the provided source; pooling is a
    # span-average stand-in and the query branch is not consumed.
    x2d_scr[...] = jnp.dot(x.astype(bf16), apad_ref[...],
                           preferred_element_type=f32).astype(bf16)

    # ---- predictor conv1: build K-stacked slab once, then ONE MXU dot ----
    for t in range(NTAP):
        off = (t // KPRED) * WP + (t % KPRED)
        slab1_scr[t * HIDDEN:(t + 1) * HIDDEN, :] = x2d_scr[:, off:off + S1PAD]
    acc1 = jnp.dot(w1cat_ref[...], slab1_scr[...],
                   preferred_element_type=f32)            # (CMID, S1PAD)
    # relu-then-mask matches the original (Sequential ends in ReLU, then *w0);
    # w0 entries are >= 0 (asserted host-side).
    y1_scr[...] = (jnp.maximum(acc1 + b1, 0.0) * w0m).astype(bf16)

    # ---- predictor conv2: same single-dot form on the VMEM-resident y1 ----
    for t in range(NTAP):
        off = (t // KPRED) * WP + (t % KPRED)
        slab2_scr[t * CMID:(t + 1) * CMID, :] = y1_scr[:, off:off + S2PAD]
    acc2 = jnp.dot(w2cat_ref[...], slab2_scr[...],
                   preferred_element_type=f32)            # (CMID, S2PAD)
    y2 = jnp.maximum(acc2 + b2, 0.0) * w1m

    # ---- 1x1 iou conv = VPU channel reduction, sigmoid, * mask2d ----
    s = jnp.sum(y2 * wiou, axis=0, keepdims=True) + biou  # (1, S2PAD)
    out_ref[...] = (jax.nn.sigmoid(s) * m2d).astype(out_ref.dtype)


# --------------------------------- wrapper ------------------------------------
def vlg_forward(params, feats, queries, wordlens, consts):
    # TODO(synk): the LSTM language encoder is not defined in the provided
    # source; queries / wordlens are accepted for interface parity only.
    del queries, wordlens
    Bz = feats.shape[0]
    feats_t = jnp.transpose(feats, (0, 2, 1)).astype(jnp.bfloat16)  # (B,CIN,T)

    def rep(shape):   # constant operand: same (full-array) block every step
        nd = len(shape)
        return pl.BlockSpec(shape, lambda b, _nd=nd: (0,) * _nd)

    in_specs = [
        pl.BlockSpec((None, CIN, T), lambda b: (b, 0, 0)),   # feats (per batch)
        rep((T, N + KPRED - 1)),                             # ppad
        rep((HIDDEN, KPRED * CIN)),                          # wvcat
        rep((N, S0PAD)),                                     # apad
        rep((CMID, NTAP * HIDDEN)),                          # w1cat
        rep((CMID, NTAP * CMID)),                            # w2cat
        rep((HIDDEN, 8)),                                    # misc (biases/iou)
        rep((3, S1PAD)),                                     # masks
    ]

    out = pl.pallas_call(
        vlg_kernel,
        out_shape=jax.ShapeDtypeStruct((Bz, 1, S2PAD), jnp.float32),
        grid_spec=pltpu.PrefetchScalarGridSpec(
            num_scalar_prefetch=0,
            grid=(Bz,),
            in_specs=in_specs,
            out_specs=pl.BlockSpec((None, 1, S2PAD), lambda b: (b, 0, 0)),
            scratch_shapes=[
                pltpu.VMEM((KPRED * CIN, N), jnp.bfloat16),        # enc slab
                pltpu.VMEM((HIDDEN, S0PAD), jnp.bfloat16),         # x2d
                pltpu.VMEM((NTAP * HIDDEN, S1PAD), jnp.bfloat16),  # conv1 slab
                pltpu.VMEM((CMID, S1PAD), jnp.bfloat16),           # y1
                pltpu.VMEM((NTAP * CMID, S2PAD), jnp.bfloat16),    # conv2 slab
            ]),
        compiler_params=pltpu.CompilerParams(
            dimension_semantics=("parallel",),
            vmem_limit_bytes=16 * 1024 * 1024),
    )(feats_t, consts["ppad"], params["wvcat"], consts["apad"],
      params["w1cat"], params["w2cat"], params["misc"], consts["masks"])

    # valid (start, end) scores: strip lane padding and the row-stride columns
    return out.reshape(Bz, S2PAD)[:, :HO2 * WP].reshape(Bz, HO2, WP)[:, :, :N]


# -------------------------- host-side constant tables --------------------------
def compute_anchors(n, pooling_counts):
    mask2d = np.zeros((n, n), dtype=bool)
    mask2d[np.arange(n), np.arange(n)] = True
    maskij = [(i, i) for i in range(n)]
    stride, offset = 1, 0
    for c in pooling_counts:
        for _ in range(c):
            offset += stride
            i = list(range(0, n - offset, stride))
            j = list(range(offset, n, stride))
            mask2d[i, j] = True
            maskij += list(zip(i, j))
        stride *= 2
    return mask2d, maskij


def mask2weight(mask, k, padding):
    m = mask.astype(np.float32)
    mp = np.pad(m, padding)
    outn = mp.shape[0] - k + 1
    w = np.zeros((outn, outn), np.float32)
    for a in range(outn):
        for c in range(outn):
            w[a, c] = mp[a:a + k, c:c + k].sum()
    w[w > 0] = 1.0 / w[w > 0]
    return w


def build_constants():
    mask2d, maskij = compute_anchors(N, POOLING_COUNTS)

    # AvgPool1d(k=stride, s=stride) + conv1d zero padding folded into one
    # matrix; the 3 conv1d taps become 3 shifted lane windows of feats @ ppad.
    stride = T // N
    P = np.zeros((T, N), np.float32)
    for n in range(N):
        P[n * stride:(n + 1) * stride, n] = 1.0 / stride
    ppad = np.zeros((T, N + KPRED - 1), np.float32)
    ppad[:, 1:N + 1] = P

    # anchor span-average pooling + reshape2d scatter + first conv padding,
    # as one (N, S0PAD) matrix applied on the right of the (HIDDEN, N) clips.
    apad = np.zeros((N, S0PAD), np.float32)
    for (i0, j0) in maskij:
        p = (i0 + FIRST_PAD) * WP + (j0 + FIRST_PAD)
        apad[i0:j0 + 1, p] = 1.0 / (j0 - i0 + 1)

    w0 = mask2weight(mask2d, KPRED, FIRST_PAD)    # (HO, WO)  = (18, 18)
    w1 = mask2weight(w0 > 0, KPRED, 0)            # (HO2, WO2) = (16, 16)
    # relu-then-mask equals mask-then-relu only because these are >= 0:
    assert (w0 >= 0).all() and (w1 >= 0).all()

    masks = np.zeros((3, S1PAD), np.float32)      # rows: w0m | w1m | mask2d
    for i in range(HO):
        masks[0, i * WP:i * WP + WO] = w0[i]
    for i in range(HO2):
        masks[1, i * WP:i * WP + WO2] = w1[i]
        masks[2, i * WP:i * WP + WO2] = mask2d[i].astype(np.float32)

    return dict(ppad=jnp.asarray(ppad, jnp.bfloat16),
                apad=jnp.asarray(apad, jnp.bfloat16),
                masks=jnp.asarray(masks, jnp.float32))


# --------------------------------- parameters ---------------------------------
def init_params(key):
    ks = jax.random.split(key, 8)
    s = 0.1
    wv = jax.random.normal(ks[0], (KPRED, HIDDEN, CIN)) * s     # conv1d taps
    bv = jax.random.normal(ks[1], (HIDDEN,)) * s
    w1 = jax.random.normal(ks[2], (NTAP, CMID, HIDDEN)) * s     # 3x3 conv1 taps
    b1 = jax.random.normal(ks[3], (CMID,)) * s
    w2 = jax.random.normal(ks[4], (NTAP, CMID, CMID)) * s       # 3x3 conv2 taps
    b2 = jax.random.normal(ks[5], (CMID,)) * s
    wiou = jax.random.normal(ks[6], (CMID,)) * s                # 1x1 iou conv
    biou = jax.random.normal(ks[7], ()) * s

    # K-stack the per-tap weights (tap t = (a, b) with t = a*KPRED + b, which
    # matches the slab ordering / lane offset a*WP + b inside the kernel).
    wvcat = jnp.transpose(wv, (1, 0, 2)).reshape(HIDDEN, KPRED * CIN)
    w1cat = jnp.transpose(w1, (1, 0, 2)).reshape(CMID, NTAP * HIDDEN)
    w2cat = jnp.transpose(w2, (1, 0, 2)).reshape(CMID, NTAP * CMID)

    # Pack the tiny vectors into one lane-dense operand.
    misc = jnp.zeros((HIDDEN, 8), jnp.float32)
    misc = misc.at[:, 0].set(bv).at[:, 1].set(b1).at[:, 2].set(b2)
    misc = misc.at[:, 3].set(wiou).at[0, 4].set(biou)

    return dict(wvcat=wvcat.astype(jnp.bfloat16),
                w1cat=w1cat.astype(jnp.bfloat16),
                w2cat=w2cat.astype(jnp.bfloat16),
                misc=misc.astype(jnp.float32))


# ------------------------------------ main -------------------------------------
if __name__ == "__main__":
    key = jax.random.PRNGKey(0)
    k1, k2, k3 = jax.random.split(key, 3)
    feats = jax.random.normal(k1, (B, T, CIN), jnp.float32)
    queries = jax.random.normal(k2, (B, QUERY_LEN, QUERY_DIM), jnp.float32)
    wordlens = jnp.array([QUERY_LEN, QUERY_LEN - 2], jnp.int32)

    params = init_params(k3)
    consts = build_constants()

    out = vlg_forward(params, feats, queries, wordlens, consts)
    out = jax.block_until_ready(out)
    assert out.shape == (B, N, N)
    assert bool(jnp.all(jnp.isfinite(out)))
    print("KERNEL_OK")
</pallas_src>

<mosaic_0001>
module attributes {stable_mosaic.version = 11 : i64} {
  func.func @vlg_kernel(%arg0: i32, %arg1: memref<1x64x32xbf16, #tpu.memory_space<vmem>>, %arg2: memref<32x18xbf16, #tpu.memory_space<vmem>>, %arg3: memref<32x192xbf16, #tpu.memory_space<vmem>>, %arg4: memref<16x640xbf16, #tpu.memory_space<vmem>>, %arg5: memref<32x288xbf16, #tpu.memory_space<vmem>>, %arg6: memref<32x288xbf16, #tpu.memory_space<vmem>>, %arg7: memref<32x8xf32, #tpu.memory_space<vmem>>, %arg8: memref<3x512xf32, #tpu.memory_space<vmem>>, %arg9: memref<1x1x384xf32, #tpu.memory_space<vmem>>, %arg10: memref<192x16xbf16, #tpu.memory_space<vmem>>, %arg11: memref<32x640xbf16, #tpu.memory_space<vmem>>, %arg12: memref<288x512xbf16, #tpu.memory_space<vmem>>, %arg13: memref<32x512xbf16, #tpu.memory_space<vmem>>, %arg14: memref<288x384xbf16, #tpu.memory_space<vmem>>) attributes {dimension_semantics = [#tpu.dimension_semantics<parallel>], iteration_bounds = array<i64: 2>, scalar_prefetch = 0 : i64, scratch_operands = 5 : i64, tpu.core_type = #tpu.core_type<tc>, window_params = [{transform_indices = @transform_0, window_bounds = array<i64: 1, 64, 32>}, {pipeline_mode = #tpu.pipeline_mode<synchronous>, transform_indices = @transform_1, window_bounds = array<i64: 32, 18>}, {pipeline_mode = #tpu.pipeline_mode<synchronous>, transform_indices = @transform_2, window_bounds = array<i64: 32, 192>}, {pipeline_mode = #tpu.pipeline_mode<synchronous>, transform_indices = @transform_3, window_bounds = array<i64: 16, 640>}, {pipeline_mode = #tpu.pipeline_mode<synchronous>, transform_indices = @transform_4, window_bounds = array<i64: 32, 288>}, {pipeline_mode = #tpu.pipeline_mode<synchronous>, transform_indices = @transform_5, window_bounds = array<i64: 32, 288>}, {pipeline_mode = #tpu.pipeline_mode<synchronous>, transform_indices = @transform_6, window_bounds = array<i64: 32, 8>}, {pipeline_mode = #tpu.pipeline_mode<synchronous>, transform_indices = @transform_7, window_bounds = array<i64: 3, 512>}, {transform_indices = @transform_8, window_bounds = array<i64: 1, 1, 384>}]} {
    %c0 = arith.constant 0 : index
    %c0_0 = arith.constant 0 : index
    %0 = vector.load %arg7[%c0, %c0_0] : memref<32x8xf32, #tpu.memory_space<vmem>>, vector<32x1xf32>
    %c0_1 = arith.constant 0 : index
    %c1 = arith.constant 1 : index
    %1 = vector.load %arg7[%c0_1, %c1] : memref<32x8xf32, #tpu.memory_space<vmem>>, vector<32x1xf32>
    %c0_2 = arith.constant 0 : index
    %c2 = arith.constant 2 : index
    %2 = vector.load %arg7[%c0_2, %c2] : memref<32x8xf32, #tpu.memory_space<vmem>>, vector<32x1xf32>
    %c0_3 = arith.constant 0 : index
    %c3 = arith.constant 3 : index
    %3 = vector.load %arg7[%c0_3, %c3] : memref<32x8xf32, #tpu.memory_space<vmem>>, vector<32x1xf32>
    %c0_4 = arith.constant 0 : index
    %c4 = arith.constant 4 : index
    %4 = vector.load %arg7[%c0_4, %c4] : memref<32x8xf32, #tpu.memory_space<vmem>>, vector<1x1xf32>
    %c0_5 = arith.constant 0 : index
    %c0_6 = arith.constant 0 : index
    %5 = vector.load %arg8[%c0_5, %c0_6] : memref<3x512xf32, #tpu.memory_space<vmem>>, vector<1x512xf32>
    %c1_7 = arith.constant 1 : index
    %c0_8 = arith.constant 0 : index
    %6 = vector.load %arg8[%c1_7, %c0_8] : memref<3x512xf32, #tpu.memory_space<vmem>>, vector<1x384xf32>
    %c2_9 = arith.constant 2 : index
    %c0_10 = arith.constant 0 : index
    %7 = vector.load %arg8[%c2_9, %c0_10] : memref<3x512xf32, #tpu.memory_space<vmem>>, vector<1x384xf32>
    %c0_11 = arith.constant 0 : index
    %c0_12 = arith.constant 0 : index
    %c0_13 = arith.constant 0 : index
    %8 = vector.load %arg1[%c0_11, %c0_12, %c0_13] : memref<1x64x32xbf16, #tpu.memory_space<vmem>>, vector<1x64x32xbf16>
    %9 = vector.shape_cast %8 : vector<1x64x32xbf16> to vector<64x32xbf16>
    %c0_14 = arith.constant 0 : index
    %c0_15 = arith.constant 0 : index
    %10 = vector.load %arg2[%c0_14, %c0_15] : memref<32x18xbf16, #tpu.memory_space<vmem>>, vector<32x18xbf16>
    %cst = arith.constant dense<0.000000e+00> : vector<64x18xf32>
    %11 = tpu.matmul %9, %10, %cst {dimension_numbers = #tpu.dot_dimension_numbers<[1], [0], [0], [1], [0, 0, 1, 1], [], []>} : vector<64x32xbf16>, vector<32x18xbf16>, vector<64x18xf32> -> vector<64x18xf32>
    %12 = vector.extract_strided_slice %11 {offsets = [0, 0], sizes = [64, 16], strides = [1, 1]} : vector<64x18xf32> to vector<64x16xf32>
    %13 = arith.truncf %12 : vector<64x16xf32> to vector<64x16xbf16>
    %c0_16 = arith.constant 0 : index
    %c0_17 = arith.constant 0 : index
    %14 = vector.load %arg10[%c0_16, %c0_17] : memref<192x16xbf16, #tpu.memory_space<vmem>>, vector<64x16xbf16>
    tpu.vector_store %arg10[%c0_16, %c0_17], %13 {strides = array<i32>} : memref<192x16xbf16, #tpu.memory_space<vmem>>, vector<64x16xbf16>,
    %15 = vector.extract_strided_slice %11 {offsets = [0, 1], sizes = [64, 16], strides = [1, 1]} : vector<64x18xf32> to vector<64x16xf32>
    %16 = arith.truncf %15 : vector<64x16xf32> to vector<64x16xbf16>
    %c64 = arith.constant 64 : index
    %c0_18 = arith.constant 0 : index
    %17 = vector.load %arg10[%c64, %c0_18] : memref<192x16xbf16, #tpu.memory_space<vmem>>, vector<64x16xbf16>
    tpu.vector_store %arg10[%c64, %c0_18], %16 {strides = array<i32>} : memref<192x16xbf16, #tpu.memory_space<vmem>>, vector<64x16xbf16>,
    %18 = vector.extract_strided_slice %11 {offsets = [0, 2], sizes = [64, 16], strides = [1, 1]} : vector<64x18xf32> to vector<64x16xf32>
    %19 = arith.truncf %18 : vector<64x16xf32> to vector<64x16xbf16>
    %c128 = arith.constant 128 : index
    %c0_19 = arith.constant 0 : index
    %20 = vector.load %arg10[%c128, %c0_19] : memref<192x16xbf16, #tpu.memory_space<vmem>>, vector<64x16xbf16>
    tpu.vector_store %arg10[%c128, %c0_19], %19 {strides = array<i32>} : memref<192x16xbf16, #tpu.memory_space<vmem>>, vector<64x16xbf16>,
    %c0_20 = arith.constant 0 : index
    %c0_21 = arith.constant 0 : index
    %21 = vector.load %arg3[%c0_20, %c0_21] : memref<32x192xbf16, #tpu.memory_space<vmem>>, vector<32x192xbf16>
    %c0_22 = arith.constant 0 : index
    %c0_23 = arith.constant 0 : index
    %22 = vector.load %arg10[%c0_22, %c0_23] : memref<192x16xbf16, #tpu.memory_space<vmem>>, vector<192x16xbf16>
    %cst_24 = arith.constant dense<0.000000e+00> : vector<32x16xf32>
    %23 = tpu.matmul %21, %22, %cst_24 {dimension_numbers = #tpu.dot_dimension_numbers<[1], [0], [0], [1], [0, 0, 1, 1], [], []>} : vector<32x192xbf16>, vector<192x16xbf16>, vector<32x16xf32> -> vector<32x16xf32>
    %24 = vector.broadcast %0 : vector<32x1xf32> to vector<32x16xf32>
    %25 = arith.addf %23, %24 : vector<32x16xf32>
    %cst_25 = arith.constant 0.000000e+00 : f32
    %26 = vector.broadcast %cst_25 : f32 to vector<32x16xf32>
    %27 = arith.maximumf %25, %26 : vector<32x16xf32>
    %28 = arith.truncf %27 : vector<32x16xf32> to vector<32x16xbf16>
    %c0_26 = arith.constant 0 : index
    %c0_27 = arith.constant 0 : index
    %29 = vector.load %arg4[%c0_26, %c0_27] : memref<16x640xbf16, #tpu.memory_space<vmem>>, vector<16x640xbf16>
    %cst_28 = arith.constant dense<0.000000e+00> : vector<32x640xf32>
    %30 = tpu.matmul %28, %29, %cst_28 {dimension_numbers = #tpu.dot_dimension_numbers<[1], [0], [0], [1], [0, 0, 1, 1], [], []>} : vector<32x16xbf16>, vector<16x640xbf16>, vector<32x640xf32> -> vector<32x640xf32>
    %31 = arith.truncf %30 : vector<32x640xf32> to vector<32x640xbf16>
    %c0_29 = arith.constant 0 : index
    %c0_30 = arith.constant 0 : index
    %32 = vector.load %arg11[%c0_29, %c0_30] : memref<32x640xbf16, #tpu.memory_space<vmem>>, vector<32x640xbf16>
    tpu.vector_store %arg11[%c0_29, %c0_30], %31 {strides = array<i32>} : memref<32x640xbf16, #tpu.memory_space<vmem>>, vector<32x640xbf16>,
    %c0_31 = arith.constant 0 : index
    %c0_32 = arith.constant 0 : index
    %33 = vector.load %arg11[%c0_31, %c0_32] : memref<32x640xbf16, #tpu.memory_space<vmem>>, vector<32x512xbf16>
    %c0_33 = arith.constant 0 : index
    %c0_34 = arith.constant 0 : index
    %34 = vector.load %arg12[%c0_33, %c0_34] : memref<288x512xbf16, #tpu.memory_space<vmem>>, vector<32x512xbf16>
    tpu.vector_store %arg12[%c0_33, %c0_34], %33 {strides = array<i32>} : memref<288x512xbf16, #tpu.memory_space<vmem>>, vector<32x512xbf16>,
    %c0_35 = arith.constant 0 : index
    %c1_36 = arith.constant 1 : index
    %35 = vector.load %arg11[%c0_35, %c1_36] : memref<32x640xbf16, #tpu.memory_space<vmem>>, vector<32x512xbf16>
    %c32 = arith.constant 32 : index
    %c0_37 = arith.constant 0 : index
    %36 = vector.load %arg12[%c32, %c0_37] : memref<288x512xbf16, #tpu.memory_space<vmem>>, vector<32x512xbf16>
    tpu.vector_store %arg12[%c32, %c0_37], %35 {strides = array<i32>} : memref<288x512xbf16, #tpu.memory_space<vmem>>, vector<32x512xbf16>,
    %c0_38 = arith.constant 0 : index
    %c2_39 = arith.constant 2 : index
    %37 = vector.load %arg11[%c0_38, %c2_39] : memref<32x640xbf16, #tpu.memory_space<vmem>>, vector<32x512xbf16>
    %c64_40 = arith.constant 64 : index
    %c0_41 = arith.constant 0 : index
    %38 = vector.load %arg12[%c64_40, %c0_41] : memref<288x512xbf16, #tpu.memory_space<vmem>>, vector<32x512xbf16>
    tpu.vector_store %arg12[%c64_40, %c0_41], %37 {strides = array<i32>} : memref<288x512xbf16, #tpu.memory_space<vmem>>, vector<32x512xbf16>,
    %c0_42 = arith.constant 0 : index
    %c20 = arith.constant 20 : index
    %39 = vector.load %arg11[%c0_42, %c20] : memref<32x640xbf16, #tpu.memory_space<vmem>>, vector<32x512xbf16>
    %c96 = arith.constant 96 : index
    %c0_43 = arith.constant 0 : index
    %40 = vector.load %arg12[%c96, %c0_43] : memref<288x512xbf16, #tpu.memory_space<vmem>>, vector<32x512xbf16>
    tpu.vector_store %arg12[%c96, %c0_43], %39 {strides = array<i32>} : memref<288x512xbf16, #tpu.memory_space<vmem>>, vector<32x512xbf16>,
    %c0_44 = arith.constant 0 : index
    %c21 = arith.constant 21 : index
    %41 = vector.load %arg11[%c0_44, %c21] : memref<32x640xbf16, #tpu.memory_space<vmem>>, vector<32x512xbf16>
    %c128_45 = arith.constant 128 : index
    %c0_46 = arith.constant 0 : index
    %42 = vector.load %arg12[%c128_45, %c0_46] : memref<288x512xbf16, #tpu.memory_space<vmem>>, vector<32x512xbf16>
    tpu.vector_store %arg12[%c128_45, %c0_46], %41 {strides = array<i32>} : memref<288x512xbf16, #tpu.memory_space<vmem>>, vector<32x512xbf16>,
    %c0_47 = arith.constant 0 : index
    %c22 = arith.constant 22 : index
    %43 = vector.load %arg11[%c0_47, %c22] : memref<32x640xbf16, #tpu.memory_space<vmem>>, vector<32x512xbf16>
    %c160 = arith.constant 160 : index
    %c0_48 = arith.constant 0 : index
    %44 = vector.load %arg12[%c160, %c0_48] : memref<288x512xbf16, #tpu.memory_space<vmem>>, vector<32x512xbf16>
    tpu.vector_store %arg12[%c160, %c0_48], %43 {strides = array<i32>} : memref<288x512xbf16, #tpu.memory_space<vmem>>, vector<32x512xbf16>,
    %c0_49 = arith.constant 0 : index
    %c40 = arith.constant 40 : index
    %45 = vector.load %arg11[%c0_49, %c40] : memref<32x640xbf16, #tpu.memory_space<vmem>>, vector<32x512xbf16>
    %c192 = arith.constant 192 : index
    %c0_50 = arith.constant 0 : index
    %46 = vector.load %arg12[%c192, %c0_50] : memref<288x512xbf16, #tpu.memory_space<vmem>>, vector<32x512xbf16>
    tpu.vector_store %arg12[%c192, %c0_50], %45 {strides = array<i32>} : memref<288x512xbf16, #tpu.memory_space<vmem>>, vector<32x512xbf16>,
    %c0_51 = arith.constant 0 : index
    %c41 = arith.constant 41 : index
    %47 = vector.load %arg11[%c0_51, %c41] : memref<32x640xbf16, #tpu.memory_space<vmem>>, vector<32x512xbf16>
    %c224 = arith.constant 224 : index
    %c0_52 = arith.constant 0 : index
    %48 = vector.load %arg12[%c224, %c0_52] : memref<288x512xbf16, #tpu.memory_space<vmem>>, vector<32x512xbf16>
    tpu.vector_store %arg12[%c224, %c0_52], %47 {strides = array<i32>} : memref<288x512xbf16, #tpu.memory_space<vmem>>, vector<32x512xbf16>,
    %c0_53 = arith.constant 0 : index
    %c42 = arith.constant 42 : index
    %49 = vector.load %arg11[%c0_53, %c42] : memref<32x640xbf16, #tpu.memory_space<vmem>>, vector<32x512xbf16>
    %c256 = arith.constant 256 : index
    %c0_54 = arith.constant 0 : index
    %50 = vector.load %arg12[%c256, %c0_54] : memref<288x512xbf16, #tpu.memory_space<vmem>>, vector<32x512xbf16>
    tpu.vector_store %arg12[%c256, %c0_54], %49 {strides = array<i32>} : memref<288x512xbf16, #tpu.memory_space<vmem>>, vector<32x512xbf16>,
    %c0_55 = arith.constant 0 : index
    %c0_56 = arith.constant 0 : index
    %51 = vector.load %arg5[%c0_55, %c0_56] : memref<32x288xbf16, #tpu.memory_space<vmem>>, vector<32x288xbf16>
    %c0_57 = arith.constant 0 : index
    %c0_58 = arith.constant 0 : index
    %52 = vector.load %arg12[%c0_57, %c0_58] : memref<288x512xbf16, #tpu.memory_space<vmem>>, vector<288x512xbf16>
    %cst_59 = arith.constant dense<0.000000e+00> : vector<32x512xf32>
    %53 = tpu.matmul %51, %52, %cst_59 {dimension_numbers = #tpu.dot_dimension_numbers<[1], [0], [0], [1], [0, 0, 1, 1], [], []>} : vector<32x288xbf16>, vector<288x512xbf16>, vector<32x512xf32> -> vector<32x512xf32>
    %54 = vector.broadcast %1 : vector<32x1xf32> to vector<32x512xf32>
    %55 = arith.addf %53, %54 : vector<32x512xf32>
    %cst_60 = arith.constant 0.000000e+00 : f32
    %56 = vector.broadcast %cst_60 : f32 to vector<32x512xf32>
    %57 = arith.maximumf %55, %56 : vector<32x512xf32>
    %58 = vector.broadcast %5 : vector<1x512xf32> to vector<32x512xf32>
    %59 = arith.mulf %57, %58 : vector<32x512xf32>
    %60 = arith.truncf %59 : vector<32x512xf32> to vector<32x512xbf16>
    %c0_61 = arith.constant 0 : index
    %c0_62 = arith.constant 0 : index
    %61 = vector.load %arg13[%c0_61, %c0_62] : memref<32x512xbf16, #tpu.memory_space<vmem>>, vector<32x512xbf16>
    tpu.vector_store %arg13[%c0_61, %c0_62], %60 {strides = array<i32>} : memref<32x512xbf16, #tpu.memory_space<vmem>>, vector<32x512xbf16>,
    %c0_63 = arith.constant 0 : index
    %c0_64 = arith.constant 0 : index
    %62 = vector.load %arg13[%c0_63, %c0_64] : memref<32x512xbf16, #tpu.memory_space<vmem>>, vector<32x384xbf16>
    %c0_65 = arith.constant 0 : index
    %c0_66 = arith.constant 0 : index
    %63 = vector.load %arg14[%c0_65, %c0_66] : memref<288x384xbf16, #tpu.memory_space<vmem>>, vector<32x384xbf16>
    tpu.vector_store %arg14[%c0_65, %c0_66], %62 {strides = array<i32>} : memref<288x384xbf16, #tpu.memory_space<vmem>>, vector<32x384xbf16>,
    %c0_67 = arith.constant 0 : index
    %c1_68 = arith.constant 1 : index
    %64 = vector.load %arg13[%c0_67, %c1_68] : memref<32x512xbf16, #tpu.memory_space<vmem>>, vector<32x384xbf16>
    %c32_69 = arith.constant 32 : index
    %c0_70 = arith.constant 0 : index
    %65 = vector.load %arg14[%c32_69, %c0_70] : memref<288x384xbf16, #tpu.memory_space<vmem>>, vector<32x384xbf16>
    tpu.vector_store %arg14[%c32_69, %c0_70], %64 {strides = array<i32>} : memref<288x384xbf16, #tpu.memory_space<vmem>>, vector<32x384xbf16>,
    %c0_71 = arith.constant 0 : index
    %c2_72 = arith.constant 2 : index
    %66 = vector.load %arg13[%c0_71, %c2_72] : memref<32x512xbf16, #tpu.memory_space<vmem>>, vector<32x384xbf16>
    %c64_73 = arith.constant 64 : index
    %c0_74 = arith.constant 0 : index
    %67 = vector.load %arg14[%c64_73, %c0_74] : memref<288x384xbf16, #tpu.memory_space<vmem>>, vector<32x384xbf16>
    tpu.vector_store %arg14[%c64_73, %c0_74], %66 {strides = array<i32>} : memref<288x384xbf16, #tpu.memory_space<vmem>>, vector<32x384xbf16>,
    %c0_75 = arith.constant 0 : index
    %c20_76 = arith.constant 20 : index
    %68 = vector.load %arg13[%c0_75, %c20_76] : memref<32x512xbf16, #tpu.memory_space<vmem>>, vector<32x384xbf16>
    %c96_77 = arith.constant 96 : index
    %c0_78 = arith.constant 0 : index
    %69 = vector.load %arg14[%c96_77, %c0_78] : memref<288x384xbf16, #tpu.memory_space<vmem>>, vector<32x384xbf16>
    tpu.vector_store %arg14[%c96_77, %c0_78], %68 {strides = array<i32>} : memref<288x384xbf16, #tpu.memory_space<vmem>>, vector<32x384xbf16>,
    %c0_79 = arith.constant 0 : index
    %c21_80 = arith.constant 21 : index
    %70 = vector.load %arg13[%c0_79, %c21_80] : memref<32x512xbf16, #tpu.memory_space<vmem>>, vector<32x384xbf16>
    %c128_81 = arith.constant 128 : index
    %c0_82 = arith.constant 0 : index
    %71 = vector.load %arg14[%c128_81, %c0_82] : memref<288x384xbf16, #tpu.memory_space<vmem>>, vector<32x384xbf16>
    tpu.vector_store %arg14[%c128_81, %c0_82], %70 {strides = array<i32>} : memref<288x384xbf16, #tpu.memory_space<vmem>>, vector<32x384xbf16>,
    %c0_83 = arith.constant 0 : index
    %c22_84 = arith.constant 22 : index
    %72 = vector.load %arg13[%c0_83, %c22_84] : memref<32x512xbf16, #tpu.memory_space<vmem>>, vector<32x384xbf16>
    %c160_85 = arith.constant 160 : index
    %c0_86 = arith.constant 0 : index
    %73 = vector.load %arg14[%c160_85, %c0_86] : memref<288x384xbf16, #tpu.memory_space<vmem>>, vector<32x384xbf16>
    tpu.vector_store %arg14[%c160_85, %c0_86], %72 {strides = array<i32>} : memref<288x384xbf16, #tpu.memory_space<vmem>>, vector<32x384xbf16>,
    %c0_87 = arith.constant 0 : index
    %c40_88 = arith.constant 40 : index
    %74 = vector.load %arg13[%c0_87, %c40_88] : memref<32x512xbf16, #tpu.memory_space<vmem>>, vector<32x384xbf16>
    %c192_89 = arith.constant 192 : index
    %c0_90 = arith.constant 0 : index
    %75 = vector.load %arg14[%c192_89, %c0_90] : memref<288x384xbf16, #tpu.memory_space<vmem>>, vector<32x384xbf16>
    tpu.vector_store %arg14[%c192_89, %c0_90], %74 {strides = array<i32>} : memref<288x384xbf16, #tpu.memory_space<vmem>>, vector<32x384xbf16>,
    %c0_91 = arith.constant 0 : index
    %c41_92 = arith.constant 41 : index
    %76 = vector.load %arg13[%c0_91, %c41_92] : memref<32x512xbf16, #tpu.memory_space<vmem>>, vector<32x384xbf16>
    %c224_93 = arith.constant 224 : index
    %c0_94 = arith.constant 0 : index
    %77 = vector.load %arg14[%c224_93, %c0_94] : memref<288x384xbf16, #tpu.memory_space<vmem>>, vector<32x384xbf16>
    tpu.vector_store %arg14[%c224_93, %c0_94], %76 {strides = array<i32>} : memref<288x384xbf16, #tpu.memory_space<vmem>>, vector<32x384xbf16>,
    %c0_95 = arith.constant 0 : index
    %c42_96 = arith.constant 42 : index
    %78 = vector.load %arg13[%c0_95, %c42_96] : memref<32x512xbf16, #tpu.memory_space<vmem>>, vector<32x384xbf16>
    %c256_97 = arith.constant 256 : index
    %c0_98 = arith.constant 0 : index
    %79 = vector.load %arg14[%c256_97, %c0_98] : memref<288x384xbf16, #tpu.memory_space<vmem>>, vector<32x384xbf16>
    tpu.vector_store %arg14[%c256_97, %c0_98], %78 {strides = array<i32>} : memref<288x384xbf16, #tpu.memory_space<vmem>>, vector<32x384xbf16>,
    %c0_99 = arith.constant 0 : index
    %c0_100 = arith.constant 0 : index
    %80 = vector.load %arg6[%c0_99, %c0_100] : memref<32x288xbf16, #tpu.memory_space<vmem>>, vector<32x288xbf16>
    %c0_101 = arith.constant 0 : index
    %c0_102 = arith.constant 0 : index
    %81 = vector.load %arg14[%c0_101, %c0_102] : memref<288x384xbf16, #tpu.memory_space<vmem>>, vector<288x384xbf16>
    %cst_103 = arith.constant dense<0.000000e+00> : vector<32x384xf32>
    %82 = tpu.matmul %80, %81, %cst_103 {dimension_numbers = #tpu.dot_dimension_numbers<[1], [0], [0], [1], [0, 0, 1, 1], [], []>} : vector<32x288xbf16>, vector<288x384xbf16>, vector<32x384xf32> -> vector<32x384xf32>
    %83 = vector.broadcast %2 : vector<32x1xf32> to vector<32x384xf32>
    %84 = arith.addf %82, %83 : vector<32x384xf32>
    %cst_104 = arith.constant 0.000000e+00 : f32
    %85 = vector.broadcast %cst_104 : f32 to vector<32x384xf32>
    %86 = arith.maximumf %84, %85 : vector<32x384xf32>
    %87 = vector.broadcast %6 : vector<1x384xf32> to vector<32x384xf32>
    %88 = arith.mulf %86, %87 : vector<32x384xf32>
    %89 = vector.broadcast %3 : vector<32x1xf32> to vector<32x384xf32>
    %90 = arith.mulf %88, %89 : vector<32x384xf32>
    %cst_105 = arith.constant dense<0.000000e+00> : vector<384xf32>
    %91 = vector.multi_reduction <add>, %90, %cst_105 [0] : vector<32x384xf32> to vector<384xf32>
    %92 = vector.shape_cast %91 : vector<384xf32> to vector<1x384xf32>
    %93 = vector.broadcast %4 : vector<1x1xf32> to vector<1x384xf32>
    %94 = arith.addf %92, %93 : vector<1x384xf32>
    %95 = arith.negf %94 : vector<1x384xf32>
    %96 = math.exp %95 : vector<1x384xf32>
    %cst_106 = arith.constant 1.000000e+00 : f32
    %97 = vector.broadcast %cst_106 : f32 to vector<1x384xf32>
    %98 = arith.addf %97, %96 : vector<1x384xf32>
    %99 = arith.divf %97, %98 : vector<1x384xf32>
    %100 = arith.mulf %99, %7 : vector<1x384xf32>
    %c0_107 = arith.constant 0 : index
    %c0_108 = arith.constant 0 : index
    %c0_109 = arith.constant 0 : index
    %101 = vector.load %arg9[%c0_107, %c0_108, %c0_109] : memref<1x1x384xf32, #tpu.memory_space<vmem>>, vector<1x1x384xf32>
    %102 = vector.shape_cast %101 : vector<1x1x384xf32> to vector<1x384xf32>
    %103 = vector.shape_cast %100 : vector<1x384xf32> to vector<1x1x384xf32>
    tpu.vector_store %arg9[%c0_107, %c0_108, %c0_109], %103 {strides = array<i32>} : memref<1x1x384xf32, #tpu.memory_space<vmem>>, vector<1x1x384xf32>,
    return
  }
  func.func @transform_0(%arg0: i32) -> (i32, i32, i32) {
    %c0_i32 = arith.constant 0 : i32
    %c0_i32_0 = arith.constant 0 : i32
    %c0_i32_1 = arith.constant 0 : i32
    return %arg0, %c0_i32, %c0_i32_0 : i32, i32, i32
  }
  func.func @transform_1(%arg0: i32) -> (i32, i32) {
    %c0_i32 = arith.constant 0 : i32
    %c0_i32_0 = arith.constant 0 : i32
    %c0_i32_1 = arith.constant 0 : i32
    return %c0_i32, %c0_i32_0 : i32, i32
  }
  func.func @transform_2(%arg0: i32) -> (i32, i32) {
    %c0_i32 = arith.constant 0 : i32
    %c0_i32_0 = arith.constant 0 : i32
    %c0_i32_1 = arith.constant 0 : i32
    return %c0_i32, %c0_i32_0 : i32, i32
  }
  func.func @transform_3(%arg0: i32) -> (i32, i32) {
    %c0_i32 = arith.constant 0 : i32
    %c0_i32_0 = arith.constant 0 : i32
    %c0_i32_1 = arith.constant 0 : i32
    return %c0_i32, %c0_i32_0 : i32, i32
  }
  func.func @transform_4(%arg0: i32) -> (i32, i32) {
    %c0_i32 = arith.constant 0 : i32
    %c0_i32_0 = arith.constant 0 : i32
    %c0_i32_1 = arith.constant 0 : i32
    return %c0_i32, %c0_i32_0 : i32, i32
  }
  func.func @transform_5(%arg0: i32) -> (i32, i32) {
    %c0_i32 = arith.constant 0 : i32
    %c0_i32_0 = arith.constant 0 : i32
    %c0_i32_1 = arith.constant 0 : i32
    return %c0_i32, %c0_i32_0 : i32, i32
  }
  func.func @transform_6(%arg0: i32) -> (i32, i32) {
    %c0_i32 = arith.constant 0 : i32
    %c0_i32_0 = arith.constant 0 : i32
    %c0_i32_1 = arith.constant 0 : i32
    return %c0_i32, %c0_i32_0 : i32, i32
  }
  func.func @transform_7(%arg0: i32) -> (i32, i32) {
    %c0_i32 = arith.constant 0 : i32
    %c0_i32_0 = arith.constant 0 : i32
    %c0_i32_1 = arith.constant 0 : i32
    return %c0_i32, %c0_i32_0 : i32, i32
  }
  func.func @transform_8(%arg0: i32) -> (i32, i32, i32) {
    %c0_i32 = arith.constant 0 : i32
    %c0_i32_0 = arith.constant 0 : i32
    %c0_i32_1 = arith.constant 0 : i32
    return %arg0, %c0_i32, %c0_i32_0 : i32, i32, i32
  }
}

</mosaic_0001>

<llo_original>
// kernel: tpu_custom_call.1
$region0: #{tpu_custom_call.1}
  #allocation0 [shape = 'u32[]', space=smem, size = 0x4, offset = 0x4, fixed_abs, tag = 'smem constant byte address 0x4 - core index']
  #allocation1 [shape = 'u32[144,128]{1,0:T(1,128)}', space=vmem, size = 0x12000, scoped, tag = 'internal scratch']
  #allocation2 [shape = 'bf16[192,16]{1,0:T(8,128)(2,1)}', space=vmem, size = 0xc000, scoped, tag = 'scratch operand']
  #allocation3 [shape = 'bf16[32,640]{1,0:T(8,128)(2,1)}', space=vmem, size = 0xa000, scoped, tag = 'scratch operand']
  #allocation4 [shape = 'bf16[288,512]{1,0:T(8,128)(2,1)}', space=vmem, size = 0x48000, scoped, tag = 'scratch operand']
  #allocation5 [shape = 'bf16[32,512]{1,0:T(8,128)(2,1)}', space=vmem, size = 0x8000, scoped, tag = 'scratch operand']
  #allocation6 [shape = 'bf16[288,384]{1,0:T(8,128)(2,1)}', space=vmem, size = 0x36000, scoped, tag = 'scratch operand']
  %s0 = inlined_call_operand.vmem [shape: bf16[2,64,32], index: 0, kind: input, shape index: {}]
  %s1 = inlined_call_operand.vmem [shape: bf16[32,18], index: 1, kind: input, shape index: {}]
  %s2 = inlined_call_operand.hbm [shape: bf16[32,192], index: 2, kind: input, shape index: {}]
  %s3 = inlined_call_operand.vmem [shape: bf16[16,640], index: 3, kind: input, shape index: {}]
  %s4 = inlined_call_operand.vmem [shape: bf16[32,288], index: 4, kind: input, shape index: {}]
  %s5 = inlined_call_operand.vmem [shape: bf16[32,288], index: 5, kind: input, shape index: {}]
  %s6 = inlined_call_operand.vmem [shape: f32[32,8], index: 6, kind: input, shape index: {}]
  %s7 = inlined_call_operand.vmem [shape: f32[3,512], index: 7, kind: input, shape index: {}]
  %s8 = inlined_call_operand.hbm [shape: f32[2,1,384], index: 8, kind: output, shape index: {}]
  %s9 = sld [smem:[#allocation0]]
  $region69: #{tpu_custom_call.1} parent=0
    _
  %s11 = ssub.s32 1, %s9
  %s12 = scalar_select 0, %s11, %s9
  $region1: #{tpu_custom_call.1} parent=0
    #allocation7 [shape = 'u8[16384]{0}', space=vmem, size = 0x4000, scoped, tag = 'input window, operand 2, single buffered']
    #allocation8 [shape = 's32[2]{0}', space=sflag, size = 0x8, scoped, tag = 'scoped memory for tpu_custom_call.1']
    #allocation9 [shape = 's32[2]{0}', space=sflag, size = 0x8, scoped, tag = 'scoped memory for tpu_custom_call.1']
    #allocation10 [shape = 'u8[3072]{0}', space=vmem, size = 0xc00, scoped, tag = 'output window, operand 0']
    %13 = vsyncpa [#allocation8], 0
    %14 = vsyncpa [#allocation9], 0
    %s15 = scalar_lea.sflag [#allocation9], 1
    %16 = vsyncpa %s15, 0
    loop: start=0, step=1, limit=4
    $region2: #{tpu_custom_call.1} parent=1 // loop_pre_header
      _
    $region3: #{tpu_custom_call.1} parent=1 // loop_header
      %s18 = sphi 0, %s22
      %p19 = scmp.ge.s32.totalorder %s18, 4
      %s28 = sphi 0, %s30
      %s31 = sphi 0, %s28
      %s32 = sphi 0, %s31
      %s48 = sphi 0, %s32
      %s52 = sphi 0, %s52
      %s54 = sphi 0, %s52
      %s55 = sphi 0, %s54
      %s69 = sphi 0, %s55
      %s73 = sphi 0, %s73
      %s75 = sphi 0, %s73
      %s76 = sphi 0, %s75
      %s90 = sphi 0, %s76
      %s94 = sphi 0, %s94
      %s96 = sphi 0, %s94
      %s97 = sphi 0, %s96
      %s111 = sphi 0, %s97
      %s115 = sphi 0, %s115
      %s117 = sphi 0, %s115
      %s118 = sphi 0, %s117
      %s132 = sphi 0, %s118
      %s136 = sphi 0, %s136
      %s138 = sphi 0, %s136
      %s139 = sphi 0, %s138
      %s153 = sphi 0, %s139
      %s157 = sphi 0, %s157
      %s159 = sphi 0, %s157
      %s160 = sphi 0, %s159
      %s174 = sphi 0, %s160
      %s178 = sphi 0, %s178
      %s180 = sphi 0, %s178
      %s181 = sphi 0, %s180
      %s195 = sphi 0, %s181
      %s201 = sphi 0, %s203
      %s204 = sphi 0, %s201
      %s205 = sphi 0, %s204
      %s221 = sphi 0, %s205
    $region4: #{tpu_custom_call.1} parent=1 // loop_header_branch
      %21 = sbr.rel (%p19) target = $region8
    $region5: #{tpu_custom_call.1} parent=1 // loop_body
      %s23 = ssub.s32 %s18, 1
      %s24 = ssub.s32 %s18, 2
      %s25 = sadd.s32 %s18, 1
      %s26 = ssub.s32 %s18, %s25
      %p27 = scmp.eq.s32.totalorder %s26, 0
      %s29 = sadd.s32 %s28, 1
      %s30 = scalar_select %p27, %s28, %s29
      %p33 = pneg %p27
      %p34 = scmp.eq.s32.totalorder %s18, 1
      %p35 = por %p33, %p34
      %p36 = scmp.ne.s32.totalorder %s28, %s31
      %p37 = scmp.eq.s32.totalorder %s18, 0
      %p38 = por %p36, %p37
      %p39 = scmp.ne.s32.totalorder %s28, %s31
      %p40 = scmp.eq.s32.totalorder %s23, 1
      %p41 = por %p39, %p40
      %p42 = scmp.ne.s32.totalorder %s31, %s32
      %p43 = scmp.eq.s32.totalorder %s23, 0
      %p44 = por %p42, %p43
      %p45 = scmp.ne.s32.totalorder %s31, %s32
      %p46 = scmp.eq.s32.totalorder %s24, 1
      %p47 = por %p45, %p46
      %p49 = scmp.ne.s32.totalorder %s32, %s48
      %p50 = scmp.eq.s32.totalorder %s24, 0
      %p51 = por %p49, %p50
      %s53 = sadd.s32 %s52, 1
      %p56 = scmp.eq.s32.totalorder %s18, 1
      %p57 = scmp.ne.s32.totalorder %s52, %s54
      %p58 = scmp.eq.s32.totalorder %s18, 0
      %p59 = por %p57, %p58
      %p60 = scmp.ne.s32.totalorder %s52, %s54
      %p61 = scmp.eq.s32.totalorder %s23, 1
      %p62 = por %p60, %p61
      %p63 = scmp.ne.s32.totalorder %s54, %s55
      %p64 = scmp.eq.s32.totalorder %s23, 0
      %p65 = por %p63, %p64
      %p66 = scmp.ne.s32.totalorder %s54, %s55
      %p67 = scmp.eq.s32.totalorder %s24, 1
      %p68 = por %p66, %p67
      %p70 = scmp.ne.s32.totalorder %s55, %s69
      %p71 = scmp.eq.s32.totalorder %s24, 0
      %p72 = por %p70, %p71
      %s74 = sadd.s32 %s73, 1
      %p77 = scmp.eq.s32.totalorder %s18, 1
      %p78 = scmp.ne.s32.totalorder %s73, %s75
      %p79 = scmp.eq.s32.totalorder %s18, 0
      %p80 = por %p78, %p79
      %p81 = scmp.ne.s32.totalorder %s73, %s75
      %p82 = scmp.eq.s32.totalorder %s23, 1
      %p83 = por %p81, %p82
      %p84 = scmp.ne.s32.totalorder %s75, %s76
      %p85 = scmp.eq.s32.totalorder %s23, 0
      %p86 = por %p84, %p85
      %p87 = scmp.ne.s32.totalorder %s75, %s76
      %p88 = scmp.eq.s32.totalorder %s24, 1
      %p89 = por %p87, %p88
      %p91 = scmp.ne.s32.totalorder %s76, %s90
      %p92 = scmp.eq.s32.totalorder %s24, 0
      %p93 = por %p91, %p92
      %s95 = sadd.s32 %s94, 1
      %p98 = scmp.eq.s32.totalorder %s18, 1
      %p99 = scmp.ne.s32.totalorder %s94, %s96
      %p100 = scmp.eq.s32.totalorder %s18, 0
      %p101 = por %p99, %p100
      %p102 = scmp.ne.s32.totalorder %s94, %s96
      %p103 = scmp.eq.s32.totalorder %s23, 1
      %p104 = por %p102, %p103
      %p105 = scmp.ne.s32.totalorder %s96, %s97
      %p106 = scmp.eq.s32.totalorder %s23, 0
      %p107 = por %p105, %p106
      %p108 = scmp.ne.s32.totalorder %s96, %s97
      %p109 = scmp.eq.s32.totalorder %s24, 1
      %p110 = por %p108, %p109
      %p112 = scmp.ne.s32.totalorder %s97, %s111
      %p113 = scmp.eq.s32.totalorder %s24, 0
      %p114 = por %p112, %p113
      %s116 = sadd.s32 %s115, 1
      %p119 = scmp.eq.s32.totalorder %s18, 1
      %p120 = scmp.ne.s32.totalorder %s115, %s117
      %p121 = scmp.eq.s32.totalorder %s18, 0
      %p122 = por %p120, %p121
      %p123 = scmp.ne.s32.totalorder %s115, %s117
      %p124 = scmp.eq.s32.totalorder %s23, 1
      %p125 = por %p123, %p124
      %p126 = scmp.ne.s32.totalorder %s117, %s118
      %p127 = scmp.eq.s32.totalorder %s23, 0
      %p128 = por %p126, %p127
      %p129 = scmp.ne.s32.totalorder %s117, %s118
      %p130 = scmp.eq.s32.totalorder %s24, 1
      %p131 = por %p129, %p130
      %p133 = scmp.ne.s32.totalorder %s118, %s132
      %p134 = scmp.eq.s32.totalorder %s24, 0
      %p135 = por %p133, %p134
      %s137 = sadd.s32 %s136, 1
      %p140 = scmp.eq.s32.totalorder %s18, 1
      %p141 = scmp.ne.s32.totalorder %s136, %s138
      %p142 = scmp.eq.s32.totalorder %s18, 0
      %p143 = por %p141, %p142
      %p144 = scmp.ne.s32.totalorder %s136, %s138
      %p145 = scmp.eq.s32.totalorder %s23, 1
      %p146 = por %p144, %p145
      %p147 = scmp.ne.s32.totalorder %s138, %s139
      %p148 = scmp.eq.s32.totalorder %s23, 0
      %p149 = por %p147, %p148
      %p150 = scmp.ne.s32.totalorder %s138, %s139
      %p151 = scmp.eq.s32.totalorder %s24, 1
      %p152 = por %p150, %p151
      %p154 = scmp.ne.s32.totalorder %s139, %s153
      %p155 = scmp.eq.s32.totalorder %s24, 0
      %p156 = por %p154, %p155
      %s158 = sadd.s32 %s157, 1
      %p161 = scmp.eq.s32.totalorder %s18, 1
      %p162 = scmp.ne.s32.totalorder %s157, %s159
      %p163 = scmp.eq.s32.totalorder %s18, 0
      %p164 = por %p162, %p163
      %p165 = scmp.ne.s32.totalorder %s157, %s159
      %p166 = scmp.eq.s32.totalorder %s23, 1
      %p167 = por %p165, %p166
      %p168 = scmp.ne.s32.totalorder %s159, %s160
      %p169 = scmp.eq.s32.totalorder %s23, 0
      %p170 = por %p168, %p169
      %p171 = scmp.ne.s32.totalorder %s159, %s160
      %p172 = scmp.eq.s32.totalorder %s24, 1
      %p173 = por %p171, %p172
      %p175 = scmp.ne.s32.totalorder %s160, %s174
      %p176 = scmp.eq.s32.totalorder %s24, 0
      %p177 = por %p175, %p176
      %s179 = sadd.s32 %s178, 1
      %p182 = scmp.eq.s32.totalorder %s18, 1
      %p183 = scmp.ne.s32.totalorder %s178, %s180
      %p184 = scmp.eq.s32.totalorder %s18, 0
      %p185 = por %p183, %p184
      %p186 = scmp.ne.s32.totalorder %s178, %s180
      %p187 = scmp.eq.s32.totalorder %s23, 1
      %p188 = por %p186, %p187
      %p189 = scmp.ne.s32.totalorder %s180, %s181
      %p190 = scmp.eq.s32.totalorder %s23, 0
      %p191 = por %p189, %p190
      %p192 = scmp.ne.s32.totalorder %s180, %s181
      %p193 = scmp.eq.s32.totalorder %s24, 1
      %p194 = por %p192, %p193
      %p196 = scmp.ne.s32.totalorder %s181, %s195
      %p197 = scmp.eq.s32.totalorder %s24, 0
      %p198 = por %p196, %p197
      %s199 = ssub.s32 %s18, %s25
      %p200 = scmp.eq.s32.totalorder %s199, 0
      %s202 = sadd.s32 %s201, 1
      %s203 = scalar_select %p200, %s201, %s202
      %p206 = pneg %p200
      %p207 = scmp.eq.s32.totalorder %s18, 1
      %p208 = por %p206, %p207
      %p209 = scmp.ne.s32.totalorder %s201, %s204
      %p210 = scmp.eq.s32.totalorder %s18, 0
      %p211 = por %p209, %p210
      %p212 = scmp.ne.s32.totalorder %s201, %s204
      %p213 = scmp.eq.s32.totalorder %s23, 1
      %p214 = por %p212, %p213
      %p215 = scmp.ne.s32.totalorder %s204, %s205
      %p216 = scmp.eq.s32.totalorder %s23, 0
      %p217 = por %p215, %p216
      %p218 = scmp.ne.s32.totalorder %s204, %s205
      %p219 = scmp.eq.s32.totalorder %s24, 1
      %p220 = por %p218, %p219
      %p222 = scmp.ne.s32.totalorder %s205, %s221
      %p223 = scmp.eq.s32.totalorder %s24, 0
      %p224 = por %p222, %p223
      %p225 = scmp.le.s32.totalorder 1, %s18
      %p226 = scmp.lt.s32.totalorder %s18, 3
      %p227 = pnand %p225, %p226
      %p228 = pneg %p227
      // Predicated region
      $region9: #{tpu_custom_call.1} parent=5 // pred_check
        _
      $region10: #{tpu_custom_call.1} parent=5 // pred_check_branch
        %230 = sbr.rel (%p227) target = $region12
      $region11: #{tpu_custom_call.1} parent=5 // pred_region
        %s231 = ssub.s32 %s18, 1
        // Predicated region
        $region13: #{tpu_custom_call.1} parent=11 // pred_check
          %p232 = pneg %p65
        $region14: #{tpu_custom_call.1} parent=11 // pred_check_branch
          %234 = sbr.rel (%p232) target = $region16
        $region15: #{tpu_custom_call.1} parent=11 // pred_region
          _
        $region16: #{tpu_custom_call.1} parent=11 // pred_fallthru
          _
        // Predicated region
        $region17: #{tpu_custom_call.1} parent=11 // pred_check
          %p235 = pneg %p86
        $region18: #{tpu_custom_call.1} parent=11 // pred_check_branch
          %237 = sbr.rel (%p235) target = $region20
        $region19: #{tpu_custom_call.1} parent=11 // pred_region
          %s239 = ssub.s32 512, 512
          %240 = vsyncadd [#allocation8], %s239
          %s241 = sshll.u32 [#allocation7], 4
          %s242 = int_to_ptr.vmem [resolvable:$true] %s241
          %247 = dma.hbm_to_vmem [thread:$0]  %s2, 512, %s242, [#allocation8], 128, 128, 8
        $region20: #{tpu_custom_call.1} parent=11 // pred_fallthru
          _
        // Predicated region
        $region21: #{tpu_custom_call.1} parent=11 // pred_check
          %p248 = pneg %p107
        $region22: #{tpu_custom_call.1} parent=11 // pred_check_branch
          %250 = sbr.rel (%p248) target = $region24
        $region23: #{tpu_custom_call.1} parent=11 // pred_region
          _
        $region24: #{tpu_custom_call.1} parent=11 // pred_fallthru
          _
        // Predicated region
        $region25: #{tpu_custom_call.1} parent=11 // pred_check
          %p251 = pneg %p128
        $region26: #{tpu_custom_call.1} parent=11 // pred_check_branch
          %253 = sbr.rel (%p251) target = $region28
        $region27: #{tpu_custom_call.1} parent=11 // pred_region
          _
        $region28: #{tpu_custom_call.1} parent=11 // pred_fallthru
          _
        // Predicated region
        $region29: #{tpu_custom_call.1} parent=11 // pred_check
          %p254 = pneg %p149
        $region30: #{tpu_custom_call.1} parent=11 // pred_check_branch
          %256 = sbr.rel (%p254) target = $region32
        $region31: #{tpu_custom_call.1} parent=11 // pred_region
          _
        $region32: #{tpu_custom_call.1} parent=11 // pred_fallthru
          _
        // Predicated region
        $region33: #{tpu_custom_call.1} parent=11 // pred_check
          %p257 = pneg %p170
        $region34: #{tpu_custom_call.1} parent=11 // pred_check_branch
          %259 = sbr.rel (%p257) target = $region36
        $region35: #{tpu_custom_call.1} parent=11 // pred_region
          _
        $region36: #{tpu_custom_call.1} parent=11 // pred_fallthru
          _
        // Predicated region
        $region37: #{tpu_custom_call.1} parent=11 // pred_check
          %p260 = pneg %p191
        $region38: #{tpu_custom_call.1} parent=11 // pred_check_branch
          %262 = sbr.rel (%p260) target = $region40
        $region39: #{tpu_custom_call.1} parent=11 // pred_region
          _
        $region40: #{tpu_custom_call.1} parent=11 // pred_fallthru
          _
      $region12: #{tpu_custom_call.1} parent=5 // pred_fallthru
        _
      %p263 = scmp.lt.s32.totalorder %s18, 2
      // Predicated region
      $region41: #{tpu_custom_call.1} parent=5 // pred_check
        %p264 = pneg %p263
      $region42: #{tpu_custom_call.1} parent=5 // pred_check_branch
        %266 = sbr.rel (%p264) target = $region44
      $region43: #{tpu_custom_call.1} parent=5 // pred_region
        // Predicated region
        $region45: #{tpu_custom_call.1} parent=43 // pred_check
          %p267 = pneg %p38
        $region46: #{tpu_custom_call.1} parent=43 // pred_check_branch
          %269 = sbr.rel (%p267) target = $region48
        $region47: #{tpu_custom_call.1} parent=43 // pred_region
          %p270 = scmp.lt.s32.totalorder %s18, 1
          %s271 = scalar_select %p270, %s18, 1
          %s272 = smul.addr %s271, 8
          %s273 = smul.addr %s272, 4
          %s274 = scalar_lea.vmem %s0, %s273
        $region48: #{tpu_custom_call.1} parent=43 // pred_fallthru
          _
      $region44: #{tpu_custom_call.1} parent=5 // pred_fallthru
        _
      %p275 = scmp.le.s32.totalorder 1, %s18
      %p276 = scmp.lt.s32.totalorder %s18, 3
      %p277 = pnand %p275, %p276
      %p278 = pneg %p277
      // Predicated region
      $region49: #{tpu_custom_call.1} parent=5 // pred_check
        _
      $region50: #{tpu_custom_call.1} parent=5 // pred_check_branch
        %280 = sbr.rel (%p277) target = $region52
      $region51: #{tpu_custom_call.1} parent=5 // pred_region
        %s281 = ssub.s32 %s18, 1
        // Predicated region
        $region53: #{tpu_custom_call.1} parent=51 // pred_check
          %p282 = pneg %p86
        $region54: #{tpu_custom_call.1} parent=51 // pred_check_branch
          %284 = sbr.rel (%p282) target = $region56
        $region55: #{tpu_custom_call.1} parent=51 // pred_region
          %285 = dma.done [#allocation8], 512
        $region56: #{tpu_custom_call.1} parent=51 // pred_fallthru
          _
        %p286 = scmp.lt.s32.totalorder %s23, 1
        %s287 = scalar_select %p286, %s23, 1
        %s288 = smul.addr %s287, 8
        %s289 = smul.addr %s288, 4
        %s290 = scalar_lea.vmem %s0, %s289
        %p291 = pneg %p44
        %p292 = pneg %p41
        %p293 = pneg %p65
        %p294 = pneg %p62
        %p295 = pneg %p86
        %p296 = pneg %p83
        %p297 = pneg %p107
        %p298 = pneg %p104
        %p299 = pneg %p128
        %p300 = pneg %p125
        %p301 = pneg %p149
        %p302 = pneg %p146
        %p303 = pneg %p170
        %p304 = pneg %p167
        %p305 = pneg %p191
        %p306 = pneg %p188
        %p307 = pneg %p217
        %p308 = pneg %p214
        %s309 = sand.u32 %s204, 1
        %s310 = scalar_lea.sflag [#allocation9], %s309
        %s311 = sand.u32 %s204, 1
        %s312 = smul.addr %s311, 3
        %s313 = scalar_lea.vmem [#allocation10], %s312
        %p314 = scmp.lt.s32.totalorder %s23, 1
        %s315 = scalar_select %p314, %s23, 1
        %s316 = smul.addr %s315, 8
        %s317 = smul.addr %s316, 4
        %s318 = scalar_lea.vmem %s0, %s317
        %v320 = vld [vmem:[%s6] sm:$0xff]
        %v321 = vld [vmem:[%s6 + $0x8] sm:$0xff]
        %v322 = vld [vmem:[%s6 + $0x10] sm:$0xff]
        %v323 = vld [vmem:[%s6 + $0x18] sm:$0xff]
        %v324 = vld [vmem:[%s6] sm:$0x1]
        %v325 = vld [vmem:[%s7] ss:$4 sm:$0xf]
        %s326 = scalar_lea.vmem %s7, 1
        %v327 = vld [vmem:[%s326] ss:$4 sm:$0x7]
        %s328 = scalar_lea.vmem %s7, 2
        %v329 = vld [vmem:[%s328] ss:$4 sm:$0x7]
        %v330 = vld [vmem:[%s318] sm:$0xf]
        %v331 = vld [vmem:[%s318 + $0x4] sm:$0xf]
        %v332 = vld [vmem:[%s318 + $0x8] sm:$0xf]
        %v333 = vld [vmem:[%s318 + $0xc] sm:$0xf]
        %v334 = vld [vmem:[%s318 + $0x10] sm:$0xf]
        %v335 = vld [vmem:[%s318 + $0x14] sm:$0xf]
        %v336 = vld [vmem:[%s318 + $0x18] sm:$0xf]
        %v337 = vld [vmem:[%s318 + $0x1c] sm:$0xf]
        %v338 = vld [vmem:[%s1] sm:$0xf]
        %v339 = vld [vmem:[%s1 + $0x4] sm:$0xf]
        %v340 = vld [vmem:[%s1 + $0x8] sm:$0xf]
        %v341 = vld [vmem:[%s1 + $0xc] sm:$0xf]
        %v350 = vunpack.c.l.b16 %v330
        %v351 = vunpack.c.l.b16 %v331
        %v352 = vunpack.c.l.b16 %v332
        %v353 = vunpack.c.l.b16 %v333
        %v354 = vunpack.c.l.b16 %v334
        %v355 = vunpack.c.l.b16 %v335
        %v356 = vunpack.c.l.b16 %v336
        %v357 = vunpack.c.l.b16 %v337
        %v358 = vpack.c.b16 %v351, %v350
        %v359 = vpack.c.b16 %v353, %v352
        %v360 = vpack.c.b16 %v355, %v354
        %v361 = vpack.c.b16 %v357, %v356
        %v366 = vunpack.c.l.b16 %v338
        %v367 = vunpack.c.l.b16 %v339
        %v368 = vunpack.c.l.b16 %v340
        %v369 = vunpack.c.l.b16 %v341
        %v370 = vpack.c.b16 %v367, %v366
        %v371 = vpack.c.b16 %v369, %v368
        %vm374 = vcmask 261120
        %v376 = vsel %vm374, %v358, 0
        %v379 = vsel %vm374, %v359, 0
        %v382 = vsel %vm374, %v360, 0
        %v385 = vsel %vm374, %v361, 0
        %387 = vmatprep.subr.bf16.mxu0 0
        %388 = vmatpush1.bf16.msra.mxu0 0
        %389 = vmatprep.subr.bf16.mxu0 0
        %390 = vmatpush1.bf16.msra.mxu0 0
        %391 = vmatprep.subr.bf16.mxu0 0
        %392 = vmatpush1.bf16.msra.mxu0 0
        %393 = vmatprep.subr.bf16.mxu0 0
        %394 = vmatpush1.bf16.msra.mxu0 0
        %395 = vmatprep.subr.bf16.mxu0 0
        %396 = vmatpush1.bf16.msra.mxu0 0
        %397 = vmatprep.subr.bf16.mxu0 0
        %398 = vmatpush1.bf16.msra.mxu0 0
        %399 = vmatprep.subr.bf16.mxu0 0
        %400 = vmatpush1.bf16.msra.mxu0 %v371
        %401 = vmatprep.subr.bf16.mxu0 0
        %402 = vmatpush1.bf16.msra.mxu0 %v370
        %403 = vmatprep.subr.bf16.mxu0 0
        %404 = vmatpush2.bf16.msra.mxu0 0
        %405 = vmatprep.subr.bf16.mxu0 0
        %406 = vmatpush2.bf16.msra.mxu0 0
        %407 = vmatprep.subr.bf16.mxu0 0
        %408 = vmatpush2.bf16.msra.mxu0 0
        %409 = vmatprep.subr.bf16.mxu0 0
        %410 = vmatpush2.bf16.msra.mxu0 0
        %411 = vmatprep.subr.bf16.mxu0 0
        %412 = vmatpush2.bf16.msra.mxu0 0
        %413 = vmatprep.subr.bf16.mxu0 0
        %414 = vmatpush2.bf16.msra.mxu0 0
        %415 = vmatprep.subr.bf16.mxu0 0
        %416 = vmatpush2.bf16.msra.mxu0 0
        %417 = vmatprep.subr.bf16.mxu0 0
        %418 = vmatpush2.bf16.msra.mxu0 0
        %419 = vmatprep.mubr.bf16.mxu0 0
        %420 = vmatmul.mubr.bf16.gmra.mxu0 %v376
        %v421 = vpop.f32.mrf.mxu0
        %v422 = vadd.f32 0.0, %v421
        %v423 = vpop.f32.mrf.mxu0
        %v424 = vpop.f32.mrf.mxu0
        %v425 = vadd.f32 0.0, %v424
        %v426 = vpop.f32.mrf.mxu0
        %427 = vmatprep.mubr.bf16.mxu0 0
        %428 = vmatmul.mubr.bf16.gmra.mxu0 %v379
        %v429 = vpop.f32.mrf.mxu0
        %v430 = vadd.f32 0.0, %v429
        %v431 = vpop.f32.mrf.mxu0
        %v432 = vpop.f32.mrf.mxu0
        %v433 = vadd.f32 0.0, %v432
        %v434 = vpop.f32.mrf.mxu0
        %435 = vmatprep.mubr.bf16.mxu0 0
        %436 = vmatmul.mubr.bf16.gmra.mxu0 %v382
        %v437 = vpop.f32.mrf.mxu0
        %v438 = vadd.f32 0.0, %v437
        %v439 = vpop.f32.mrf.mxu0
        %v440 = vpop.f32.mrf.mxu0
        %v441 = vadd.f32 0.0, %v440
        %v442 = vpop.f32.mrf.mxu0
        %443 = vmatprep.mubr.bf16.mxu0 0
        %444 = vmatmul.mubr.bf16.gmra.mxu0 %v385
        %v445 = vpop.f32.mrf.mxu0
        %v446 = vadd.f32 0.0, %v445
        %v447 = vpop.f32.mrf.mxu0
        %v448 = vpop.f32.mrf.mxu0
        %v449 = vadd.f32 0.0, %v448
        %v450 = vpop.f32.mrf.mxu0
        %451 = vdwg.mxu0
        %v452 = vpack.c.bf16 %v425, %v422
        %v453 = vpack.c.bf16 %v433, %v430
        %v454 = vpack.c.bf16 %v441, %v438
        %v455 = vpack.c.bf16 %v449, %v446
        %v460 = vunpack.c.l.b16 %v452
        %v461 = vunpack.c.h.b16 %v452
        %v462 = vunpack.c.l.b16 %v453
        %v463 = vunpack.c.h.b16 %v453
        %v464 = vunpack.c.l.b16 %v454
        %v465 = vunpack.c.h.b16 %v454
        %v466 = vunpack.c.l.b16 %v455
        %v467 = vunpack.c.h.b16 %v455
        %v468 = vpack.c.b16 %v460, %v460
        %v469 = vpack.c.b16 %v461, %v461
        %v470 = vpack.c.b16 %v462, %v462
        %v471 = vpack.c.b16 %v463, %v463
        %v472 = vpack.c.b16 %v464, %v464
        %v473 = vpack.c.b16 %v465, %v465
        %v474 = vpack.c.b16 %v466, %v466
        %v475 = vpack.c.b16 %v467, %v467
        %vm484 = vcmask 125952
        %485 = vst.msk [vmem:[#allocation2] sm:$0xf] %vm484, %v468
        %486 = vst.msk [vmem:[#allocation2 + $0x4] sm:$0xf] %vm484, %v469
        %487 = vst.msk [vmem:[#allocation2 + $0x8] sm:$0xf] %vm484, %v470
        %488 = vst.msk [vmem:[#allocation2 + $0xc] sm:$0xf] %vm484, %v471
        %489 = vst.msk [vmem:[#allocation2 + $0x10] sm:$0xf] %vm484, %v472
        %490 = vst.msk [vmem:[#allocation2 + $0x14] sm:$0xf] %vm484, %v473
        %491 = vst.msk [vmem:[#allocation2 + $0x18] sm:$0xf] %vm484, %v474
        %492 = vst.msk [vmem:[#allocation2 + $0x1c] sm:$0xf] %vm484, %v475
        %493 = vrot.lane.b32.xlu0 %v468, 127
        %v494 = vpop.permute.xlu0 %493
        %495 = vrot.lane.b32.xlu0 %v469, 127
        %v496 = vpop.permute.xlu0 %495
        %497 = vrot.lane.b32.xlu0 %v470, 127
        %v498 = vpop.permute.xlu0 %497
        %499 = vrot.lane.b32.xlu0 %v471, 127
        %v500 = vpop.permute.xlu0 %499
        %501 = vrot.lane.b32.xlu0 %v472, 127
        %v502 = vpop.permute.xlu0 %501
        %503 = vrot.lane.b32.xlu0 %v473, 127
        %v504 = vpop.permute.xlu0 %503
        %505 = vrot.lane.b32.xlu0 %v474, 127
        %v506 = vpop.permute.xlu0 %505
        %507 = vrot.lane.b32.xlu0 %v475, 127
        %v508 = vpop.permute.xlu0 %507
        %517 = vst.msk [vmem:[#allocation2 + $0x20] sm:$0xf] %vm484, %v494
        %518 = vst.msk [vmem:[#allocation2 + $0x24] sm:$0xf] %vm484, %v496
        %519 = vst.msk [vmem:[#allocation2 + $0x28] sm:$0xf] %vm484, %v498
        %520 = vst.msk [vmem:[#allocation2 + $0x2c] sm:$0xf] %vm484, %v500
        %521 = vst.msk [vmem:[#allocation2 + $0x30] sm:$0xf] %vm484, %v502
        %522 = vst.msk [vmem:[#allocation2 + $0x34] sm:$0xf] %vm484, %v504
        %523 = vst.msk [vmem:[#allocation2 + $0x38] sm:$0xf] %vm484, %v506
        %524 = vst.msk [vmem:[#allocation2 + $0x3c] sm:$0xf] %vm484, %v508
        %525 = vrot.lane.b32.xlu0 %v468, 126
        %v526 = vpop.permute.xlu0 %525
        %527 = vrot.lane.b32.xlu0 %v469, 126
        %v528 = vpop.permute.xlu0 %527
        %529 = vrot.lane.b32.xlu0 %v470, 126
        %v530 = vpop.permute.xlu0 %529
        %531 = vrot.lane.b32.xlu0 %v471, 126
        %v532 = vpop.permute.xlu0 %531
        %533 = vrot.lane.b32.xlu0 %v472, 126
        %v534 = vpop.permute.xlu0 %533
        %535 = vrot.lane.b32.xlu0 %v473, 126
        %v536 = vpop.permute.xlu0 %535
        %537 = vrot.lane.b32.xlu0 %v474, 126
        %v538 = vpop.permute.xlu0 %537
        %539 = vrot.lane.b32.xlu0 %v475, 126
        %v540 = vpop.permute.xlu0 %539
        %549 = vst.msk [vmem:[#allocation2 + $0x40] sm:$0xf] %vm484, %v526
        %550 = vst.msk [vmem:[#allocation2 + $0x44] sm:$0xf] %vm484, %v528
        %551 = vst.msk [vmem:[#allocation2 + $0x48] sm:$0xf] %vm484, %v530
        %552 = vst.msk [vmem:[#allocation2 + $0x4c] sm:$0xf] %vm484, %v532
        %553 = vst.msk [vmem:[#allocation2 + $0x50] sm:$0xf] %vm484, %v534
        %554 = vst.msk [vmem:[#allocation2 + $0x54] sm:$0xf] %vm484, %v536
        %555 = vst.msk [vmem:[#allocation2 + $0x58] sm:$0xf] %vm484, %v538
        %556 = vst.msk [vmem:[#allocation2 + $0x5c] sm:$0xf] %vm484, %v540
        %v557 = vld [vmem:[#allocation7] sm:$0xff]
        %v558 = vld [vmem:[#allocation7 + $0x8] sm:$0xff]
        %v559 = vld [vmem:[#allocation7 + $0x10] sm:$0xff]
        %v560 = vld [vmem:[#allocation7 + $0x18] sm:$0xff]
        %v561 = vld [vmem:[#allocation2] sm:$0xf]
        %v562 = vld [vmem:[#allocation2 + $0x4] sm:$0xf]
        %v563 = vld [vmem:[#allocation2 + $0x8] sm:$0xf]
        %v564 = vld [vmem:[#allocation2 + $0xc] sm:$0xf]
        %v565 = vld [vmem:[#allocation2 + $0x10] sm:$0xf]
        %v566 = vld [vmem:[#allocation2 + $0x14] sm:$0xf]
        %v567 = vld [vmem:[#allocation2 + $0x18] sm:$0xf]
        %v568 = vld [vmem:[#allocation2 + $0x1c] sm:$0xf]
        %v569 = vld [vmem:[#allocation2 + $0x20] sm:$0xf]
        %v570 = vld [vmem:[#allocation2 + $0x24] sm:$0xf]
        %v571 = vld [vmem:[#allocation2 + $0x28] sm:$0xf]
        %v572 = vld [vmem:[#allocation2 + $0x2c] sm:$0xf]
        %v573 = vld [vmem:[#allocation2 + $0x30] sm:$0xf]
        %v574 = vld [vmem:[#allocation2 + $0x34] sm:$0xf]
        %v575 = vld [vmem:[#allocation2 + $0x38] sm:$0xf]
        %v576 = vld [vmem:[#allocation2 + $0x3c] sm:$0xf]
        %v577 = vld [vmem:[#allocation2 + $0x40] sm:$0xf]
        %v578 = vld [vmem:[#allocation2 + $0x44] sm:$0xf]
        %v579 = vld [vmem:[#allocation2 + $0x48] sm:$0xf]
        %v580 = vld [vmem:[#allocation2 + $0x4c] sm:$0xf]
        %v581 = vld [vmem:[#allocation2 + $0x50] sm:$0xf]
        %v582 = vld [vmem:[#allocation2 + $0x54] sm:$0xf]
        %v583 = vld [vmem:[#allocation2 + $0x58] sm:$0xf]
        %v584 = vld [vmem:[#allocation2 + $0x5c] sm:$0xf]
        %586 = vset.pattern.permute.xlu0 0
        %587 = vperm.xlu0 %586, %v320
        %v588 = vpop.permute.xlu0 %587
        %591 = vset.pattern.permute.xlu0 0
        %592 = vperm.xlu0 %591, %v321
        %v593 = vpop.permute.xlu0 %592
        %596 = vset.pattern.permute.xlu0 0
        %597 = vperm.xlu0 %596, %v322
        %v598 = vpop.permute.xlu0 %597
        %601 = vset.pattern.permute.xlu0 0
        %602 = vperm.xlu0 %601, %v323
        %v603 = vpop.permute.xlu0 %602
        %v609 = vunpack.c.l.b16 %v557
        %v610 = vunpack.c.h.b16 %v557
        %v611 = vunpack.c.l.b16 %v558
        %v612 = vunpack.c.h.b16 %v558
        %v613 = vunpack.c.l.b16 %v559
        %v614 = vunpack.c.h.b16 %v559
        %v615 = vunpack.c.l.b16 %v560
        %v616 = vunpack.c.h.b16 %v560
        %v617 = vpack.c.b16 %v611, %v609
        %v618 = vpack.c.b16 %v612, %v610
        %v619 = vpack.c.b16 %v615, %v613
        %v620 = vpack.c.b16 %v616, %v614
        %v647 = vunpack.c.l.b16 %v561
        %v648 = vunpack.c.l.b16 %v562
        %v649 = vunpack.c.l.b16 %v563
        %v650 = vunpack.c.l.b16 %v564
        %v651 = vunpack.c.l.b16 %v565
        %v652 = vunpack.c.l.b16 %v566
        %v653 = vunpack.c.l.b16 %v567
        %v654 = vunpack.c.l.b16 %v568
        %v655 = vunpack.c.l.b16 %v569
        %v656 = vunpack.c.l.b16 %v570
        %v657 = vunpack.c.l.b16 %v571
        %v658 = vunpack.c.l.b16 %v572
        %v659 = vunpack.c.l.b16 %v573
        %v660 = vunpack.c.l.b16 %v574
        %v661 = vunpack.c.l.b16 %v575
        %v662 = vunpack.c.l.b16 %v576
        %v663 = vunpack.c.l.b16 %v577
        %v664 = vunpack.c.l.b16 %v578
        %v665 = vunpack.c.l.b16 %v579
        %v666 = vunpack.c.l.b16 %v580
        %v667 = vunpack.c.l.b16 %v581
        %v668 = vunpack.c.l.b16 %v582
        %v669 = vunpack.c.l.b16 %v583
        %v670 = vunpack.c.l.b16 %v584
        %v671 = vpack.c.b16 %v648, %v647
        %v672 = vpack.c.b16 %v650, %v649
        %v673 = vpack.c.b16 %v652, %v651
        %v674 = vpack.c.b16 %v654, %v653
        %v675 = vpack.c.b16 %v656, %v655
        %v676 = vpack.c.b16 %v658, %v657
        %v677 = vpack.c.b16 %v660, %v659
        %v678 = vpack.c.b16 %v662, %v661
        %v679 = vpack.c.b16 %v664, %v663
        %v680 = vpack.c.b16 %v666, %v665
        %v681 = vpack.c.b16 %v668, %v667
        %v682 = vpack.c.b16 %v670, %v669
        %vm695 = vcmask 523264
        %v697 = vsel %vm695, %v618, 0
        %v700 = vsel %vm695, %v620, 0
        %702 = vmatprep.subr.bf16.mxu0 0
        %703 = vmatpush1.bf16.msra.mxu0 %v678
        %704 = vmatprep.subr.bf16.mxu0 0
        %705 = vmatpush1.bf16.msra.mxu0 %v677
        %706 = vmatprep.subr.bf16.mxu0 0
        %707 = vmatpush1.bf16.msra.mxu0 %v676
        %708 = vmatprep.subr.bf16.mxu0 0
        %709 = vmatpush1.bf16.msra.mxu0 %v675
        %710 = vmatprep.subr.bf16.mxu0 0
        %711 = vmatpush1.bf16.msra.mxu0 %v674
        %712 = vmatprep.subr.bf16.mxu0 0
        %713 = vmatpush1.bf16.msra.mxu0 %v673
        %714 = vmatprep.subr.bf16.mxu0 0
        %715 = vmatpush1.bf16.msra.mxu0 %v672
        %716 = vmatprep.subr.bf16.mxu0 0
        %717 = vmatpush1.bf16.msra.mxu0 %v671
        %718 = vmatprep.subr.bf16.mxu0 0
        %719 = vmatpush2.bf16.msra.mxu0 0
        %720 = vmatprep.subr.bf16.mxu0 0
        %721 = vmatpush2.bf16.msra.mxu0 0
        %722 = vmatprep.subr.bf16.mxu0 0
        %723 = vmatpush2.bf16.msra.mxu0 0
        %724 = vmatprep.subr.bf16.mxu0 0
        %725 = vmatpush2.bf16.msra.mxu0 0
        %726 = vmatprep.subr.bf16.mxu0 0
        %727 = vmatpush2.bf16.msra.mxu0 %v682
        %728 = vmatprep.subr.bf16.mxu0 0
        %729 = vmatpush2.bf16.msra.mxu0 %v681
        %730 = vmatprep.subr.bf16.mxu0 0
        %731 = vmatpush2.bf16.msra.mxu0 %v680
        %732 = vmatprep.subr.bf16.mxu0 0
        %733 = vmatpush2.bf16.msra.mxu0 %v679
        %734 = vmatprep.mubr.bf16.mxu0 %v697
        %735 = vmatmul.mubr.bf16.gmra.mxu0 %v617
        %v736 = vpop.f32.mrf.mxu0
        %v737 = vadd.f32 %v588, %v736
        %v738 = vpop.f32.mrf.mxu0
        %v739 = vpop.f32.mrf.mxu0
        %v740 = vadd.f32 %v593, %v739
        %v741 = vpop.f32.mrf.mxu0
        %742 = vmatprep.mubr.bf16.mxu0 %v700
        %743 = vmatmul.mubr.bf16.gmra.mxu0 %v619
        %v744 = vpop.f32.mrf.mxu0
        %v745 = vadd.f32 %v598, %v744
        %v746 = vpop.f32.mrf.mxu0
        %v747 = vpop.f32.mrf.mxu0
        %v748 = vadd.f32 %v603, %v747
        %v749 = vpop.f32.mrf.mxu0
        %750 = vdwg.mxu0
        %v751 = vmax.f32 %v737, 0.0
        %v752 = vmax.f32 %v740, 0.0
        %v753 = vmax.f32 %v745, 0.0
        %v754 = vmax.f32 %v748, 0.0
        %v755 = vpack.c.bf16 %v752, %v751
        %v756 = vpack.c.bf16 %v754, %v753
        %v757 = vld [vmem:[%s3] sm:$0xff]
        %v758 = vld [vmem:[%s3 + $0x8] sm:$0xff]
        %v759 = vld [vmem:[%s3 + $0x10] sm:$0xf]
        %v760 = vld [vmem:[%s3 + $0x14] sm:$0xff]
        %v761 = vld [vmem:[%s3 + $0x1c] sm:$0xff]
        %v762 = vld [vmem:[%s3 + $0x24] sm:$0xf]
        %v769 = vunpack.c.l.b16 %v757
        %v770 = vunpack.c.h.b16 %v757
        %v771 = vunpack.c.l.b16 %v758
        %v772 = vunpack.c.h.b16 %v758
        %v773 = vunpack.c.l.b16 %v759
        %v774 = vunpack.c.l.b16 %v760
        %v775 = vunpack.c.h.b16 %v760
        %v776 = vunpack.c.l.b16 %v761
        %v777 = vunpack.c.h.b16 %v761
        %v778 = vunpack.c.l.b16 %v762
        %v779 = vpack.c.b16 %v774, %v769
        %v780 = vpack.c.b16 %v775, %v770
        %v781 = vpack.c.b16 %v776, %v771
        %v782 = vpack.c.b16 %v777, %v772
        %v783 = vpack.c.b16 %v778, %v773
        %vm789 = vcmask 130048
        %v791 = vsel %vm789, %v755, 0
        %v794 = vsel %vm789, %v756, 0
        %796 = vmatprep.subr.bf16.mxu0 0
        %797 = vmatpush1.bf16.msra.mxu0 0
        %798 = vmatprep.subr.bf16.mxu0 0
        %799 = vmatpush1.bf16.msra.mxu0 0
        %800 = vmatprep.subr.bf16.mxu0 0
        %801 = vmatpush1.bf16.msra.mxu0 0
        %802 = vmatprep.subr.bf16.mxu0 0
        %803 = vmatpush1.bf16.msra.mxu0 0
        %804 = vmatprep.subr.bf16.mxu0 0
        %805 = vmatpush1.bf16.msra.mxu0 0
        %806 = vmatprep.subr.bf16.mxu0 0
        %807 = vmatpush1.bf16.msra.mxu0 0
        %808 = vmatprep.subr.bf16.mxu0 0
        %809 = vmatpush1.bf16.msra.mxu0 0
        %810 = vmatprep.subr.bf16.mxu0 %v780
        %811 = vmatpush1.bf16.msra.mxu0 %v779
        %812 = vmatprep.subr.bf16.mxu0 0
        %813 = vmatpush2.bf16.msra.mxu0 0
        %814 = vmatprep.subr.bf16.mxu0 0
        %815 = vmatpush2.bf16.msra.mxu0 0
        %816 = vmatprep.subr.bf16.mxu0 0
        %817 = vmatpush2.bf16.msra.mxu0 0
        %818 = vmatprep.subr.bf16.mxu0 0
        %819 = vmatpush2.bf16.msra.mxu0 0
        %820 = vmatprep.subr.bf16.mxu0 0
        %821 = vmatpush2.bf16.msra.mxu0 0
        %822 = vmatprep.subr.bf16.mxu0 0
        %823 = vmatpush2.bf16.msra.mxu0 0
        %824 = vmatprep.subr.bf16.mxu0 0
        %825 = vmatpush2.bf16.msra.mxu0 0
        %826 = vmatprep.subr.bf16.mxu0 0
        %827 = vmatpush2.bf16.msra.mxu0 0
        %828 = vmatprep.mubr.bf16.mxu0 0
        %829 = vmatmul.mubr.bf16.gmra.mxu0 %v791
        %v830 = vpop.f32.mrf.mxu0
        %v831 = vadd.f32 0.0, %v830
        %v832 = vpop.f32.mrf.mxu0
        %v833 = vadd.f32 0.0, %v832
        %v834 = vpop.f32.mrf.mxu0
        %v835 = vadd.f32 0.0, %v834
        %v836 = vpop.f32.mrf.mxu0
        %v837 = vadd.f32 0.0, %v836
        %838 = vmatprep.mubr.bf16.mxu0 0
        %839 = vmatmul.mubr.bf16.gmra.mxu0 %v794
        %v840 = vpop.f32.mrf.mxu0
        %v841 = vadd.f32 0.0, %v840
        %v842 = vpop.f32.mrf.mxu0
        %v843 = vadd.f32 0.0, %v842
        %v844 = vpop.f32.mrf.mxu0
        %v845 = vadd.f32 0.0, %v844
        %v846 = vpop.f32.mrf.mxu0
        %v847 = vadd.f32 0.0, %v846
        %848 = vdwg.mxu0
        %849 = vmatprep.subr.bf16.mxu0 0
        %850 = vmatpush1.bf16.msra.mxu0 0
        %851 = vmatprep.subr.bf16.mxu0 0
        %852 = vmatpush1.bf16.msra.mxu0 0
        %853 = vmatprep.subr.bf16.mxu0 0
        %854 = vmatpush1.bf16.msra.mxu0 0
        %855 = vmatprep.subr.bf16.mxu0 0
        %856 = vmatpush1.bf16.msra.mxu0 0
        %857 = vmatprep.subr.bf16.mxu0 0
        %858 = vmatpush1.bf16.msra.mxu0 0
        %859 = vmatprep.subr.bf16.mxu0 0
        %860 = vmatpush1.bf16.msra.mxu0 0
        %861 = vmatprep.subr.bf16.mxu0 0
        %862 = vmatpush1.bf16.msra.mxu0 0
        %863 = vmatprep.subr.bf16.mxu0 %v782
        %864 = vmatpush1.bf16.msra.mxu0 %v781
        %865 = vmatprep.subr.bf16.mxu0 0
        %866 = vmatpush2.bf16.msra.mxu0 0
        %867 = vmatprep.subr.bf16.mxu0 0
        %868 = vmatpush2.bf16.msra.mxu0 0
        %869 = vmatprep.subr.bf16.mxu0 0
        %870 = vmatpush2.bf16.msra.mxu0 0
        %871 = vmatprep.subr.bf16.mxu0 0
        %872 = vmatpush2.bf16.msra.mxu0 0
        %873 = vmatprep.subr.bf16.mxu0 0
        %874 = vmatpush2.bf16.msra.mxu0 0
        %875 = vmatprep.subr.bf16.mxu0 0
        %876 = vmatpush2.bf16.msra.mxu0 0
        %877 = vmatprep.subr.bf16.mxu0 0
        %878 = vmatpush2.bf16.msra.mxu0 0
        %879 = vmatprep.subr.bf16.mxu0 0
        %880 = vmatpush2.bf16.msra.mxu0 0
        %881 = vmatprep.mubr.bf16.mxu0 0
        %882 = vmatmul.mubr.bf16.gmra.mxu0 %v791
        %v883 = vpop.f32.mrf.mxu0
        %v884 = vadd.f32 0.0, %v883
        %v885 = vpop.f32.mrf.mxu0
        %v886 = vadd.f32 0.0, %v885
        %v887 = vpop.f32.mrf.mxu0
        %v888 = vadd.f32 0.0, %v887
        %v889 = vpop.f32.mrf.mxu0
        %v890 = vadd.f32 0.0, %v889
        %891 = vmatprep.mubr.bf16.mxu0 0
        %892 = vmatmul.mubr.bf16.gmra.mxu0 %v794
        %v893 = vpop.f32.mrf.mxu0
        %v894 = vadd.f32 0.0, %v893
        %v895 = vpop.f32.mrf.mxu0
        %v896 = vadd.f32 0.0, %v895
        %v897 = vpop.f32.mrf.mxu0
        %v898 = vadd.f32 0.0, %v897
        %v899 = vpop.f32.mrf.mxu0
        %v900 = vadd.f32 0.0, %v899
        %901 = vdwg.mxu0
        %902 = vmatprep.subr.bf16.mxu0 0
        %903 = vmatpush1.bf16.msra.mxu0 0
        %904 = vmatprep.subr.bf16.mxu0 0
        %905 = vmatpush1.bf16.msra.mxu0 0
        %906 = vmatprep.subr.bf16.mxu0 0
        %907 = vmatpush1.bf16.msra.mxu0 0
        %908 = vmatprep.subr.bf16.mxu0 0
        %909 = vmatpush1.bf16.msra.mxu0 0
        %910 = vmatprep.subr.bf16.mxu0 0
        %911 = vmatpush1.bf16.msra.mxu0 0
        %912 = vmatprep.subr.bf16.mxu0 0
        %913 = vmatpush1.bf16.msra.mxu0 0
        %914 = vmatprep.subr.bf16.mxu0 0
        %915 = vmatpush1.bf16.msra.mxu0 0
        %916 = vmatprep.subr.bf16.mxu0 0
        %917 = vmatpush1.bf16.msra.mxu0 %v783
        %918 = vmatprep.subr.bf16.mxu0 0
        %919 = vmatpush2.bf16.msra.mxu0 0
        %920 = vmatprep.subr.bf16.mxu0 0
        %921 = vmatpush2.bf16.msra.mxu0 0
        %922 = vmatprep.subr.bf16.mxu0 0
        %923 = vmatpush2.bf16.msra.mxu0 0
        %924 = vmatprep.subr.bf16.mxu0 0
        %925 = vmatpush2.bf16.msra.mxu0 0
        %926 = vmatprep.subr.bf16.mxu0 0
        %927 = vmatpush2.bf16.msra.mxu0 0
        %928 = vmatprep.subr.bf16.mxu0 0
        %929 = vmatpush2.bf16.msra.mxu0 0
        %930 = vmatprep.subr.bf16.mxu0 0
        %931 = vmatpush2.bf16.msra.mxu0 0
        %932 = vmatprep.subr.bf16.mxu0 0
        %933 = vmatpush2.bf16.msra.mxu0 0
        %934 = vmatprep.mubr.bf16.mxu0 0
        %935 = vmatmul.mubr.bf16.gmra.mxu0 %v791
        %v936 = vpop.f32.mrf.mxu0
        %v937 = vadd.f32 0.0, %v936
        %v938 = vpop.f32.mrf.mxu0
        %v939 = vpop.f32.mrf.mxu0
        %v940 = vadd.f32 0.0, %v939
        %v941 = vpop.f32.mrf.mxu0
        %942 = vmatprep.mubr.bf16.mxu0 0
        %943 = vmatmul.mubr.bf16.gmra.mxu0 %v794
        %v944 = vpop.f32.mrf.mxu0
        %v945 = vadd.f32 0.0, %v944
        %v946 = vpop.f32.mrf.mxu0
        %v947 = vpop.f32.mrf.mxu0
        %v948 = vadd.f32 0.0, %v947
        %v949 = vpop.f32.mrf.mxu0
        %950 = vdwg.mxu0
        %v951 = vpack.c.bf16 %v835, %v831
        %v952 = vpack.c.bf16 %v837, %v833
        %v953 = vpack.c.bf16 %v888, %v884
        %v954 = vpack.c.bf16 %v890, %v886
        %v955 = vpack.c.bf16 %v940, %v937
        %v956 = vpack.c.bf16 %v845, %v841
        %v957 = vpack.c.bf16 %v847, %v843
        %v958 = vpack.c.bf16 %v898, %v894
        %v959 = vpack.c.bf16 %v900, %v896
        %v960 = vpack.c.bf16 %v948, %v945
        %v971 = vunpack.c.l.b16 %v951
        %v972 = vunpack.c.l.b16 %v952
        %v973 = vunpack.c.l.b16 %v953
        %v974 = vunpack.c.l.b16 %v954
        %v975 = vunpack.c.l.b16 %v955
        %v976 = vunpack.c.h.b16 %v951
        %v977 = vunpack.c.h.b16 %v952
        %v978 = vunpack.c.h.b16 %v953
        %v979 = vunpack.c.h.b16 %v954
        %v980 = vunpack.c.h.b16 %v955
        %v981 = vunpack.c.l.b16 %v956
        %v982 = vunpack.c.l.b16 %v957
        %v983 = vunpack.c.l.b16 %v958
        %v984 = vunpack.c.l.b16 %v959
        %v985 = vunpack.c.l.b16 %v960
        %v986 = vunpack.c.h.b16 %v956
        %v987 = vunpack.c.h.b16 %v957
        %v988 = vunpack.c.h.b16 %v958
        %v989 = vunpack.c.h.b16 %v959
        %v990 = vunpack.c.h.b16 %v960
        %v991 = vpack.c.b16 %v972, %v971
        %v992 = vpack.c.b16 %v974, %v973
        %v993 = vpack.c.b16 %v975, %v975
        %v994 = vpack.c.b16 %v977, %v976
        %v995 = vpack.c.b16 %v979, %v978
        %v996 = vpack.c.b16 %v980, %v980
        %v997 = vpack.c.b16 %v982, %v981
        %v998 = vpack.c.b16 %v984, %v983
        %v999 = vpack.c.b16 %v985, %v985
        %v1000 = vpack.c.b16 %v987, %v986
        %v1001 = vpack.c.b16 %v989, %v988
        %v1002 = vpack.c.b16 %v990, %v990
        %1015 = vst [vmem:[#allocation3] sm:$0xff] %v991
        %1016 = vst [vmem:[#allocation3 + $0x8] sm:$0xff] %v992
        %1017 = vst [vmem:[#allocation3 + $0x10] sm:$0xf] %v993
        %1018 = vst [vmem:[#allocation3 + $0x14] sm:$0xff] %v994
        %1019 = vst [vmem:[#allocation3 + $0x1c] sm:$0xff] %v995
        %1020 = vst [vmem:[#allocation3 + $0x24] sm:$0xf] %v996
        %1021 = vst [vmem:[#allocation3 + $0x28] sm:$0xff] %v997
        %1022 = vst [vmem:[#allocation3 + $0x30] sm:$0xff] %v998
        %1023 = vst [vmem:[#allocation3 + $0x38] sm:$0xf] %v999
        %1024 = vst [vmem:[#allocation3 + $0x3c] sm:$0xff] %v1000
        %1025 = vst [vmem:[#allocation3 + $0x44] sm:$0xff] %v1001
        %1026 = vst [vmem:[#allocation3 + $0x4c] sm:$0xf] %v1002
        %v1027 = vld [vmem:[#allocation3] sm:$0xff]
        %v1028 = vld [vmem:[#allocation3 + $0x8] sm:$0xff]
        %v1029 = vld [vmem:[#allocation3 + $0x14] sm:$0xff]
        %v1030 = vld [vmem:[#allocation3 + $0x1c] sm:$0xff]
        %v1031 = vld [vmem:[#allocation3 + $0x28] sm:$0xff]
        %v1032 = vld [vmem:[#allocation3 + $0x30] sm:$0xff]
        %v1033 = vld [vmem:[#allocation3 + $0x3c] sm:$0xff]
        %v1034 = vld [vmem:[#allocation3 + $0x44] sm:$0xff]
        %1035 = vst [vmem:[#allocation4] sm:$0xff] %v1027
        %1036 = vst [vmem:[#allocation4 + $0x8] sm:$0xff] %v1028
        %1037 = vst [vmem:[#allocation4 + $0x10] sm:$0xff] %v1029
        %1038 = vst [vmem:[#allocation4 + $0x18] sm:$0xff] %v1030
        %1039 = vst [vmem:[#allocation4 + $0x20] sm:$0xff] %v1031
        %1040 = vst [vmem:[#allocation4 + $0x28] sm:$0xff] %v1032
        %1041 = vst [vmem:[#allocation4 + $0x30] sm:$0xff] %v1033
        %1042 = vst [vmem:[#allocation4 + $0x38] sm:$0xff] %v1034
        %v1043 = vld [vmem:[#allocation3] sm:$0xff]
        %v1044 = vld [vmem:[#allocation3 + $0x8] sm:$0xff]
        %v1045 = vld [vmem:[#allocation3 + $0x10] sm:$0xf]
        %v1046 = vld [vmem:[#allocation3 + $0x14] sm:$0xff]
        %v1047 = vld [vmem:[#allocation3 + $0x1c] sm:$0xff]
        %v1048 = vld [vmem:[#allocation3 + $0x24] sm:$0xf]
        %v1049 = vld [vmem:[#allocation3 + $0x28] sm:$0xff]
        %v1050 = vld [vmem:[#allocation3 + $0x30] sm:$0xff]
        %v1051 = vld [vmem:[#allocation3 + $0x38] sm:$0xf]
        %v1052 = vld [vmem:[#allocation3 + $0x3c] sm:$0xff]
        %v1053 = vld [vmem:[#allocation3 + $0x44] sm:$0xff]
        %v1054 = vld [vmem:[#allocation3 + $0x4c] sm:$0xf]
        %1067 = vrot.lane.b32.xlu0 %v1043, 127
        %v1068 = vpop.permute.xlu0 %1067
        %1069 = vrot.lane.b32.xlu0 %v1044, 127
        %v1070 = vpop.permute.xlu0 %1069
        %1071 = vrot.lane.b32.xlu0 %v1045, 127
        %v1072 = vpop.permute.xlu0 %1071
        %1073 = vrot.lane.b32.xlu0 %v1046, 127
        %v1074 = vpop.permute.xlu0 %1073
        %1075 = vrot.lane.b32.xlu0 %v1047, 127
        %v1076 = vpop.permute.xlu0 %1075
        %1077 = vrot.lane.b32.xlu0 %v1048, 127
        %v1078 = vpop.permute.xlu0 %1077
        %1079 = vrot.lane.b32.xlu0 %v1049, 127
        %v1080 = vpop.permute.xlu0 %1079
        %1081 = vrot.lane.b32.xlu0 %v1050, 127
        %v1082 = vpop.permute.xlu0 %1081
        %1083 = vrot.lane.b32.xlu0 %v1051, 127
        %v1084 = vpop.permute.xlu0 %1083
        %1085 = vrot.lane.b32.xlu0 %v1052, 127
        %v1086 = vpop.permute.xlu0 %1085
        %1087 = vrot.lane.b32.xlu0 %v1053, 127
        %v1088 = vpop.permute.xlu0 %1087
        %1089 = vrot.lane.b32.xlu0 %v1054, 127
        %v1090 = vpop.permute.xlu0 %1089
        %v1091 = vrot.slane %v1068, 4
        %v1092 = vrot.slane %v1070, 4
        %v1093 = vrot.slane %v1072, 4
        %v1094 = vrot.slane %v1074, 4
        %v1095 = vrot.slane %v1076, 4
        %v1096 = vrot.slane %v1078, 4
        %v1097 = vrot.slane %v1080, 4
        %v1098 = vrot.slane %v1082, 4
        %v1099 = vrot.slane %v1084, 4
        %v1100 = vrot.slane %v1086, 4
        %v1101 = vrot.slane %v1088, 4
        %v1102 = vrot.slane %v1090, 4
        %vm1103 = vcmask 1043456
        %v1104 = vsel %vm1103, %v1091, %v1092
        %vm1105 = vcmask 1039360
        %v1106 = vsel %vm1105, %v1068, %v1104
        %v1107 = vsel %vm1103, %v1092, %v1093
        %v1108 = vsel %vm1105, %v1070, %v1107
        %v1109 = vsel %vm1103, %v1094, %v1095
        %v1110 = vsel %vm1105, %v1074, %v1109
        %v1111 = vsel %vm1103, %v1095, %v1096
        %v1112 = vsel %vm1105, %v1076, %v1111
        %v1113 = vsel %vm1103, %v1097, %v1098
        %v1114 = vsel %vm1105, %v1080, %v1113
        %v1115 = vsel %vm1103, %v1098, %v1099
        %v1116 = vsel %vm1105, %v1082, %v1115
        %v1117 = vsel %vm1103, %v1100, %v1101
        %v1118 = vsel %vm1105, %v1086, %v1117
        %v1119 = vsel %vm1103, %v1101, %v1102
        %v1120 = vsel %vm1105, %v1088, %v1119
        %1129 = vst [vmem:[#allocation4 + $0x40] sm:$0xff] %v1106
        %1130 = vst [vmem:[#allocation4 + $0x48] sm:$0xff] %v1108
        %1131 = vst [vmem:[#allocation4 + $0x50] sm:$0xff] %v1110
        %1132 = vst [vmem:[#allocation4 + $0x58] sm:$0xff] %v1112
        %1133 = vst [vmem:[#allocation4 + $0x60] sm:$0xff] %v1114
        %1134 = vst [vmem:[#allocation4 + $0x68] sm:$0xff] %v1116
        %1135 = vst [vmem:[#allocation4 + $0x70] sm:$0xff] %v1118
        %1136 = vst [vmem:[#allocation4 + $0x78] sm:$0xff] %v1120
        %v1137 = vld [vmem:[#allocation3] sm:$0xff]
        %v1138 = vld [vmem:[#allocation3 + $0x8] sm:$0xff]
        %v1139 = vld [vmem:[#allocation3 + $0x10] sm:$0xf]
        %v1140 = vld [vmem:[#allocation3 + $0x14] sm:$0xff]
        %v1141 = vld [vmem:[#allocation3 + $0x1c] sm:$0xff]
        %v1142 = vld [vmem:[#allocation3 + $0x24] sm:$0xf]
        %v1143 = vld [vmem:[#allocation3 + $0x28] sm:$0xff]
        %v1144 = vld [vmem:[#allocation3 + $0x30] sm:$0xff]
        %v1145 = vld [vmem:[#allocation3 + $0x38] sm:$0xf]
        %v1146 = vld [vmem:[#allocation3 + $0x3c] sm:$0xff]
        %v1147 = vld [vmem:[#allocation3 + $0x44] sm:$0xff]
        %v1148 = vld [vmem:[#allocation3 + $0x4c] sm:$0xf]
        %1161 = vrot.lane.b32.xlu0 %v1137, 126
        %v1162 = vpop.permute.xlu0 %1161
        %1163 = vrot.lane.b32.xlu0 %v1138, 126
        %v1164 = vpop.permute.xlu0 %1163
        %1165 = vrot.lane.b32.xlu0 %v1139, 126
        %v1166 = vpop.permute.xlu0 %1165
        %1167 = vrot.lane.b32.xlu0 %v1140, 126
        %v1168 = vpop.permute.xlu0 %1167
        %1169 = vrot.lane.b32.xlu0 %v1141, 126
        %v1170 = vpop.permute.xlu0 %1169
        %1171 = vrot.lane.b32.xlu0 %v1142, 126
        %v1172 = vpop.permute.xlu0 %1171
        %1173 = vrot.lane.b32.xlu0 %v1143, 126
        %v1174 = vpop.permute.xlu0 %1173
        %1175 = vrot.lane.b32.xlu0 %v1144, 126
        %v1176 = vpop.permute.xlu0 %1175
        %1177 = vrot.lane.b32.xlu0 %v1145, 126
        %v1178 = vpop.permute.xlu0 %1177
        %1179 = vrot.lane.b32.xlu0 %v1146, 126
        %v1180 = vpop.permute.xlu0 %1179
        %1181 = vrot.lane.b32.xlu0 %v1147, 126
        %v1182 = vpop.permute.xlu0 %1181
        %1183 = vrot.lane.b32.xlu0 %v1148, 126
        %v1184 = vpop.permute.xlu0 %1183
        %v1185 = vrot.slane %v1162, 4
        %v1186 = vrot.slane %v1164, 4
        %v1187 = vrot.slane %v1166, 4
        %v1188 = vrot.slane %v1168, 4
        %v1189 = vrot.slane %v1170, 4
        %v1190 = vrot.slane %v1172, 4
        %v1191 = vrot.slane %v1174, 4
        %v1192 = vrot.slane %v1176, 4
        %v1193 = vrot.slane %v1178, 4
        %v1194 = vrot.slane %v1180, 4
        %v1195 = vrot.slane %v1182, 4
        %v1196 = vrot.slane %v1184, 4
        %v1197 = vsel %vm1103, %v1185, %v1186
        %vm1198 = vcmask 1031168
        %v1199 = vsel %vm1198, %v1162, %v1197
        %v1200 = vsel %vm1103, %v1186, %v1187
        %v1201 = vsel %vm1198, %v1164, %v1200
        %v1202 = vsel %vm1103, %v1188, %v1189
        %v1203 = vsel %vm1198, %v1168, %v1202
        %v1204 = vsel %vm1103, %v1189, %v1190
        %v1205 = vsel %vm1198, %v1170, %v1204
        %v1206 = vsel %vm1103, %v1191, %v1192
        %v1207 = vsel %vm1198, %v1174, %v1206
        %v1208 = vsel %vm1103, %v1192, %v1193
        %v1209 = vsel %vm1198, %v1176, %v1208
        %v1210 = vsel %vm1103, %v1194, %v1195
        %v1211 = vsel %vm1198, %v1180, %v1210
        %v1212 = vsel %vm1103, %v1195, %v1196
        %v1213 = vsel %vm1198, %v1182, %v1212
        %1222 = vst [vmem:[#allocation4 + $0x80] sm:$0xff] %v1199
        %1223 = vst [vmem:[#allocation4 + $0x88] sm:$0xff] %v1201
        %1224 = vst [vmem:[#allocation4 + $0x90] sm:$0xff] %v1203
        %1225 = vst [vmem:[#allocation4 + $0x98] sm:$0xff] %v1205
        %1226 = vst [vmem:[#allocation4 + $0xa0] sm:$0xff] %v1207
        %1227 = vst [vmem:[#allocation4 + $0xa8] sm:$0xff] %v1209
        %1228 = vst [vmem:[#allocation4 + $0xb0] sm:$0xff] %v1211
        %1229 = vst [vmem:[#allocation4 + $0xb8] sm:$0xff] %v1213
        %v1230 = vld [vmem:[#allocation3] sm:$0xff]
        %v1231 = vld [vmem:[#allocation3 + $0x8] sm:$0xff]
        %v1232 = vld [vmem:[#allocation3 + $0x10] sm:$0xf]
        %v1233 = vld [vmem:[#allocation3 + $0x14] sm:$0xff]
        %v1234 = vld [vmem:[#allocation3 + $0x1c] sm:$0xff]
        %v1235 = vld [vmem:[#allocation3 + $0x24] sm:$0xf]
        %v1236 = vld [vmem:[#allocation3 + $0x28] sm:$0xff]
        %v1237 = vld [vmem:[#allocation3 + $0x30] sm:$0xff]
        %v1238 = vld [vmem:[#allocation3 + $0x38] sm:$0xf]
        %v1239 = vld [vmem:[#allocation3 + $0x3c] sm:$0xff]
        %v1240 = vld [vmem:[#allocation3 + $0x44] sm:$0xff]
        %v1241 = vld [vmem:[#allocation3 + $0x4c] sm:$0xf]
        %1254 = vrot.lane.b32.xlu0 %v1230, 108
        %v1255 = vpop.permute.xlu0 %1254
        %1256 = vrot.lane.b32.xlu0 %v1231, 108
        %v1257 = vpop.permute.xlu0 %1256
        %1258 = vrot.lane.b32.xlu0 %v1232, 108
        %v1259 = vpop.permute.xlu0 %1258
        %1260 = vrot.lane.b32.xlu0 %v1233, 108
        %v1261 = vpop.permute.xlu0 %1260
        %1262 = vrot.lane.b32.xlu0 %v1234, 108
        %v1263 = vpop.permute.xlu0 %1262
        %1264 = vrot.lane.b32.xlu0 %v1235, 108
        %v1265 = vpop.permute.xlu0 %1264
        %1266 = vrot.lane.b32.xlu0 %v1236, 108
        %v1267 = vpop.permute.xlu0 %1266
        %1268 = vrot.lane.b32.xlu0 %v1237, 108
        %v1269 = vpop.permute.xlu0 %1268
        %1270 = vrot.lane.b32.xlu0 %v1238, 108
        %v1271 = vpop.permute.xlu0 %1270
        %1272 = vrot.lane.b32.xlu0 %v1239, 108
        %v1273 = vpop.permute.xlu0 %1272
        %1274 = vrot.lane.b32.xlu0 %v1240, 108
        %v1275 = vpop.permute.xlu0 %1274
        %1276 = vrot.lane.b32.xlu0 %v1241, 108
        %v1277 = vpop.permute.xlu0 %1276
        %v1278 = vrot.slane %v1255, 4
        %v1279 = vrot.slane %v1257, 4
        %v1280 = vrot.slane %v1259, 4
        %v1281 = vrot.slane %v1261, 4
        %v1282 = vrot.slane %v1263, 4
        %v1283 = vrot.slane %v1265, 4
        %v1284 = vrot.slane %v1267, 4
        %v1285 = vrot.slane %v1269, 4
        %v1286 = vrot.slane %v1271, 4
        %v1287 = vrot.slane %v1273, 4
        %v1288 = vrot.slane %v1275, 4
        %v1289 = vrot.slane %v1277, 4
        %v1290 = vsel %vm1103, %v1278, %v1279
        %vm1291 = vcmask 883712
        %v1292 = vsel %vm1291, %v1255, %v1290
        %v1293 = vsel %vm1103, %v1279, %v1280
        %v1294 = vsel %vm1291, %v1257, %v1293
        %v1295 = vsel %vm1103, %v1281, %v1282
        %v1296 = vsel %vm1291, %v1261, %v1295
        %v1297 = vsel %vm1103, %v1282, %v1283
        %v1298 = vsel %vm1291, %v1263, %v1297
        %v1299 = vsel %vm1103, %v1284, %v1285
        %v1300 = vsel %vm1291, %v1267, %v1299
        %v1301 = vsel %vm1103, %v1285, %v1286
        %v1302 = vsel %vm1291, %v1269, %v1301
        %v1303 = vsel %vm1103, %v1287, %v1288
        %v1304 = vsel %vm1291, %v1273, %v1303
        %v1305 = vsel %vm1103, %v1288, %v1289
        %v1306 = vsel %vm1291, %v1275, %v1305
        %1315 = vst [vmem:[#allocation4 + $0xc0] sm:$0xff] %v1292
        %1316 = vst [vmem:[#allocation4 + $0xc8] sm:$0xff] %v1294
        %1317 = vst [vmem:[#allocation4 + $0xd0] sm:$0xff] %v1296
        %1318 = vst [vmem:[#allocation4 + $0xd8] sm:$0xff] %v1298
        %1319 = vst [vmem:[#allocation4 + $0xe0] sm:$0xff] %v1300
        %1320 = vst [vmem:[#allocation4 + $0xe8] sm:$0xff] %v1302
        %1321 = vst [vmem:[#allocation4 + $0xf0] sm:$0xff] %v1304
        %1322 = vst [vmem:[#allocation4 + $0xf8] sm:$0xff] %v1306
        %v1323 = vld [vmem:[#allocation3] sm:$0xff]
        %v1324 = vld [vmem:[#allocation3 + $0x8] sm:$0xff]
        %v1325 = vld [vmem:[#allocation3 + $0x10] sm:$0xf]
        %v1326 = vld [vmem:[#allocation3 + $0x14] sm:$0xff]
        %v1327 = vld [vmem:[#allocation3 + $0x1c] sm:$0xff]
        %v1328 = vld [vmem:[#allocation3 + $0x24] sm:$0xf]
        %v1329 = vld [vmem:[#allocation3 + $0x28] sm:$0xff]
        %v1330 = vld [vmem:[#allocation3 + $0x30] sm:$0xff]
        %v1331 = vld [vmem:[#allocation3 + $0x38] sm:$0xf]
        %v1332 = vld [vmem:[#allocation3 + $0x3c] sm:$0xff]
        %v1333 = vld [vmem:[#allocation3 + $0x44] sm:$0xff]
        %v1334 = vld [vmem:[#allocation3 + $0x4c] sm:$0xf]
        %1347 = vrot.lane.b32.xlu0 %v1323, 107
        %v1348 = vpop.permute.xlu0 %1347
        %1349 = vrot.lane.b32.xlu0 %v1324, 107
        %v1350 = vpop.permute.xlu0 %1349
        %1351 = vrot.lane.b32.xlu0 %v1325, 107
        %v1352 = vpop.permute.xlu0 %1351
        %1353 = vrot.lane.b32.xlu0 %v1326, 107
        %v1354 = vpop.permute.xlu0 %1353
        %1355 = vrot.lane.b32.xlu0 %v1327, 107
        %v1356 = vpop.permute.xlu0 %1355
        %1357 = vrot.lane.b32.xlu0 %v1328, 107
        %v1358 = vpop.permute.xlu0 %1357
        %1359 = vrot.lane.b32.xlu0 %v1329, 107
        %v1360 = vpop.permute.xlu0 %1359
        %1361 = vrot.lane.b32.xlu0 %v1330, 107
        %v1362 = vpop.permute.xlu0 %1361
        %1363 = vrot.lane.b32.xlu0 %v1331, 107
        %v1364 = vpop.permute.xlu0 %1363
        %1365 = vrot.lane.b32.xlu0 %v1332, 107
        %v1366 = vpop.permute.xlu0 %1365
        %1367 = vrot.lane.b32.xlu0 %v1333, 107
        %v1368 = vpop.permute.xlu0 %1367
        %1369 = vrot.lane.b32.xlu0 %v1334, 107
        %v1370 = vpop.permute.xlu0 %1369
        %v1371 = vrot.slane %v1348, 4
        %v1372 = vrot.slane %v1350, 4
        %v1373 = vrot.slane %v1352, 4
        %v1374 = vrot.slane %v1354, 4
        %v1375 = vrot.slane %v1356, 4
        %v1376 = vrot.slane %v1358, 4
        %v1377 = vrot.slane %v1360, 4
        %v1378 = vrot.slane %v1362, 4
        %v1379 = vrot.slane %v1364, 4
        %v1380 = vrot.slane %v1366, 4
        %v1381 = vrot.slane %v1368, 4
        %v1382 = vrot.slane %v1370, 4
        %v1383 = vsel %vm1103, %v1371, %v1372
        %vm1384 = vcmask 875520
        %v1385 = vsel %vm1384, %v1348, %v1383
        %v1386 = vsel %vm1103, %v1372, %v1373
        %v1387 = vsel %vm1384, %v1350, %v1386
        %v1388 = vsel %vm1103, %v1374, %v1375
        %v1389 = vsel %vm1384, %v1354, %v1388
        %v1390 = vsel %vm1103, %v1375, %v1376
        %v1391 = vsel %vm1384, %v1356, %v1390
        %v1392 = vsel %vm1103, %v1377, %v1378
        %v1393 = vsel %vm1384, %v1360, %v1392
        %v1394 = vsel %vm1103, %v1378, %v1379
        %v1395 = vsel %vm1384, %v1362, %v1394
        %v1396 = vsel %vm1103, %v1380, %v1381
        %v1397 = vsel %vm1384, %v1366, %v1396
        %v1398 = vsel %vm1103, %v1381, %v1382
        %v1399 = vsel %vm1384, %v1368, %v1398
        %1408 = vst [vmem:[#allocation4 + $0x100] sm:$0xff] %v1385
        %1409 = vst [vmem:[#allocation4 + $0x108] sm:$0xff] %v1387
        %1410 = vst [vmem:[#allocation4 + $0x110] sm:$0xff] %v1389
        %1411 = vst [vmem:[#allocation4 + $0x118] sm:$0xff] %v1391
        %1412 = vst [vmem:[#allocation4 + $0x120] sm:$0xff] %v1393
        %1413 = vst [vmem:[#allocation4 + $0x128] sm:$0xff] %v1395
        %1414 = vst [vmem:[#allocation4 + $0x130] sm:$0xff] %v1397
        %1415 = vst [vmem:[#allocation4 + $0x138] sm:$0xff] %v1399
        %v1416 = vld [vmem:[#allocation3] sm:$0xff]
        %v1417 = vld [vmem:[#allocation3 + $0x8] sm:$0xff]
        %v1418 = vld [vmem:[#allocation3 + $0x10] sm:$0xf]
        %v1419 = vld [vmem:[#allocation3 + $0x14] sm:$0xff]
        %v1420 = vld [vmem:[#allocation3 + $0x1c] sm:$0xff]
        %v1421 = vld [vmem:[#allocation3 + $0x24] sm:$0xf]
        %v1422 = vld [vmem:[#allocation3 + $0x28] sm:$0xff]
        %v1423 = vld [vmem:[#allocation3 + $0x30] sm:$0xff]
        %v1424 = vld [vmem:[#allocation3 + $0x38] sm:$0xf]
        %v1425 = vld [vmem:[#allocation3 + $0x3c] sm:$0xff]
        %v1426 = vld [vmem:[#allocation3 + $0x44] sm:$0xff]
        %v1427 = vld [vmem:[#allocation3 + $0x4c] sm:$0xf]
        %1440 = vrot.lane.b32.xlu0 %v1416, 106
        %v1441 = vpop.permute.xlu0 %1440
        %1442 = vrot.lane.b32.xlu0 %v1417, 106
        %v1443 = vpop.permute.xlu0 %1442
        %1444 = vrot.lane.b32.xlu0 %v1418, 106
        %v1445 = vpop.permute.xlu0 %1444
        %1446 = vrot.lane.b32.xlu0 %v1419, 106
        %v1447 = vpop.permute.xlu0 %1446
        %1448 = vrot.lane.b32.xlu0 %v1420, 106
        %v1449 = vpop.permute.xlu0 %1448
        %1450 = vrot.lane.b32.xlu0 %v1421, 106
        %v1451 = vpop.permute.xlu0 %1450
        %1452 = vrot.lane.b32.xlu0 %v1422, 106
        %v1453 = vpop.permute.xlu0 %1452
        %1454 = vrot.lane.b32.xlu0 %v1423, 106
        %v1455 = vpop.permute.xlu0 %1454
        %1456 = vrot.lane.b32.xlu0 %v1424, 106
        %v1457 = vpop.permute.xlu0 %1456
        %1458 = vrot.lane.b32.xlu0 %v1425, 106
        %v1459 = vpop.permute.xlu0 %1458
        %1460 = vrot.lane.b32.xlu0 %v1426, 106
        %v1461 = vpop.permute.xlu0 %1460
        %1462 = vrot.lane.b32.xlu0 %v1427, 106
        %v1463 = vpop.permute.xlu0 %1462
        %v1464 = vrot.slane %v1441, 4
        %v1465 = vrot.slane %v1443, 4
        %v1466 = vrot.slane %v1445, 4
        %v1467 = vrot.slane %v1447, 4
        %v1468 = vrot.slane %v1449, 4
        %v1469 = vrot.slane %v1451, 4
        %v1470 = vrot.slane %v1453, 4
        %v1471 = vrot.slane %v1455, 4
        %v1472 = vrot.slane %v1457, 4
        %v1473 = vrot.slane %v1459, 4
        %v1474 = vrot.slane %v1461, 4
        %v1475 = vrot.slane %v1463, 4
        %v1476 = vsel %vm1103, %v1464, %v1465
        %vm1477 = vcmask 867328
        %v1478 = vsel %vm1477, %v1441, %v1476
        %v1479 = vsel %vm1103, %v1465, %v1466
        %v1480 = vsel %vm1477, %v1443, %v1479
        %v1481 = vsel %vm1103, %v1467, %v1468
        %v1482 = vsel %vm1477, %v1447, %v1481
        %v1483 = vsel %vm1103, %v1468, %v1469
        %v1484 = vsel %vm1477, %v1449, %v1483
        %v1485 = vsel %vm1103, %v1470, %v1471
        %v1486 = vsel %vm1477, %v1453, %v1485
        %v1487 = vsel %vm1103, %v1471, %v1472
        %v1488 = vsel %vm1477, %v1455, %v1487
        %v1489 = vsel %vm1103, %v1473, %v1474
        %v1490 = vsel %vm1477, %v1459, %v1489
        %v1491 = vsel %vm1103, %v1474, %v1475
        %v1492 = vsel %vm1477, %v1461, %v1491
        %1501 = vst [vmem:[#allocation4 + $0x140] sm:$0xff] %v1478
        %1502 = vst [vmem:[#allocation4 + $0x148] sm:$0xff] %v1480
        %1503 = vst [vmem:[#allocation4 + $0x150] sm:$0xff] %v1482
        %1504 = vst [vmem:[#allocation4 + $0x158] sm:$0xff] %v1484
        %1505 = vst [vmem:[#allocation4 + $0x160] sm:$0xff] %v1486
        %1506 = vst [vmem:[#allocation4 + $0x168] sm:$0xff] %v1488
        %1507 = vst [vmem:[#allocation4 + $0x170] sm:$0xff] %v1490
        %1508 = vst [vmem:[#allocation4 + $0x178] sm:$0xff] %v1492
        %v1509 = vld [vmem:[#allocation3] sm:$0xff]
        %v1510 = vld [vmem:[#allocation3 + $0x8] sm:$0xff]
        %v1511 = vld [vmem:[#allocation3 + $0x10] sm:$0xf]
        %v1512 = vld [vmem:[#allocation3 + $0x14] sm:$0xff]
        %v1513 = vld [vmem:[#allocation3 + $0x1c] sm:$0xff]
        %v1514 = vld [vmem:[#allocation3 + $0x24] sm:$0xf]
        %v1515 = vld [vmem:[#allocation3 + $0x28] sm:$0xff]
        %v1516 = vld [vmem:[#allocation3 + $0x30] sm:$0xff]
        %v1517 = vld [vmem:[#allocation3 + $0x38] sm:$0xf]
        %v1518 = vld [vmem:[#allocation3 + $0x3c] sm:$0xff]
        %v1519 = vld [vmem:[#allocation3 + $0x44] sm:$0xff]
        %v1520 = vld [vmem:[#allocation3 + $0x4c] sm:$0xf]
        %1533 = vrot.lane.b32.xlu0 %v1509, 88
        %v1534 = vpop.permute.xlu0 %1533
        %1535 = vrot.lane.b32.xlu0 %v1510, 88
        %v1536 = vpop.permute.xlu0 %1535
        %1537 = vrot.lane.b32.xlu0 %v1511, 88
        %v1538 = vpop.permute.xlu0 %1537
        %1539 = vrot.lane.b32.xlu0 %v1512, 88
        %v1540 = vpop.permute.xlu0 %1539
        %1541 = vrot.lane.b32.xlu0 %v1513, 88
        %v1542 = vpop.permute.xlu0 %1541
        %1543 = vrot.lane.b32.xlu0 %v1514, 88
        %v1544 = vpop.permute.xlu0 %1543
        %1545 = vrot.lane.b32.xlu0 %v1515, 88
        %v1546 = vpop.permute.xlu0 %1545
        %1547 = vrot.lane.b32.xlu0 %v1516, 88
        %v1548 = vpop.permute.xlu0 %1547
        %1549 = vrot.lane.b32.xlu0 %v1517, 88
        %v1550 = vpop.permute.xlu0 %1549
        %1551 = vrot.lane.b32.xlu0 %v1518, 88
        %v1552 = vpop.permute.xlu0 %1551
        %1553 = vrot.lane.b32.xlu0 %v1519, 88
        %v1554 = vpop.permute.xlu0 %1553
        %1555 = vrot.lane.b32.xlu0 %v1520, 88
        %v1556 = vpop.permute.xlu0 %1555
        %v1557 = vrot.slane %v1534, 4
        %v1558 = vrot.slane %v1536, 4
        %v1559 = vrot.slane %v1538, 4
        %v1560 = vrot.slane %v1540, 4
        %v1561 = vrot.slane %v1542, 4
        %v1562 = vrot.slane %v1544, 4
        %v1563 = vrot.slane %v1546, 4
        %v1564 = vrot.slane %v1548, 4
        %v1565 = vrot.slane %v1550, 4
        %v1566 = vrot.slane %v1552, 4
        %v1567 = vrot.slane %v1554, 4
        %v1568 = vrot.slane %v1556, 4
        %v1569 = vsel %vm1103, %v1557, %v1558
        %vm1570 = vcmask 719872
        %v1571 = vsel %vm1570, %v1534, %v1569
        %v1572 = vsel %vm1103, %v1558, %v1559
        %v1573 = vsel %vm1570, %v1536, %v1572
        %v1574 = vsel %vm1103, %v1560, %v1561
        %v1575 = vsel %vm1570, %v1540, %v1574
        %v1576 = vsel %vm1103, %v1561, %v1562
        %v1577 = vsel %vm1570, %v1542, %v1576
        %v1578 = vsel %vm1103, %v1563, %v1564
        %v1579 = vsel %vm1570, %v1546, %v1578
        %v1580 = vsel %vm1103, %v1564, %v1565
        %v1581 = vsel %vm1570, %v1548, %v1580
        %v1582 = vsel %vm1103, %v1566, %v1567
        %v1583 = vsel %vm1570, %v1552, %v1582
        %v1584 = vsel %vm1103, %v1567, %v1568
        %v1585 = vsel %vm1570, %v1554, %v1584
        %1594 = vst [vmem:[#allocation4 + $0x180] sm:$0xff] %v1571
        %1595 = vst [vmem:[#allocation4 + $0x188] sm:$0xff] %v1573
        %1596 = vst [vmem:[#allocation4 + $0x190] sm:$0xff] %v1575
        %1597 = vst [vmem:[#allocation4 + $0x198] sm:$0xff] %v1577
        %1598 = vst [vmem:[#allocation4 + $0x1a0] sm:$0xff] %v1579
        %1599 = vst [vmem:[#allocation4 + $0x1a8] sm:$0xff] %v1581
        %1600 = vst [vmem:[#allocation4 + $0x1b0] sm:$0xff] %v1583
        %1601 = vst [vmem:[#allocation4 + $0x1b8] sm:$0xff] %v1585
        %v1602 = vld [vmem:[#allocation3] sm:$0xff]
        %v1603 = vld [vmem:[#allocation3 + $0x8] sm:$0xff]
        %v1604 = vld [vmem:[#allocation3 + $0x10] sm:$0xf]
        %v1605 = vld [vmem:[#allocation3 + $0x14] sm:$0xff]
        %v1606 = vld [vmem:[#allocation3 + $0x1c] sm:$0xff]
        %v1607 = vld [vmem:[#allocation3 + $0x24] sm:$0xf]
        %v1608 = vld [vmem:[#allocation3 + $0x28] sm:$0xff]
        %v1609 = vld [vmem:[#allocation3 + $0x30] sm:$0xff]
        %v1610 = vld [vmem:[#allocation3 + $0x38] sm:$0xf]
        %v1611 = vld [vmem:[#allocation3 + $0x3c] sm:$0xff]
        %v1612 = vld [vmem:[#allocation3 + $0x44] sm:$0xff]
        %v1613 = vld [vmem:[#allocation3 + $0x4c] sm:$0xf]
        %1626 = vrot.lane.b32.xlu0 %v1602, 87
        %v1627 = vpop.permute.xlu0 %1626
        %1628 = vrot.lane.b32.xlu0 %v1603, 87
        %v1629 = vpop.permute.xlu0 %1628
        %1630 = vrot.lane.b32.xlu0 %v1604, 87
        %v1631 = vpop.permute.xlu0 %1630
        %1632 = vrot.lane.b32.xlu0 %v1605, 87
        %v1633 = vpop.permute.xlu0 %1632
        %1634 = vrot.lane.b32.xlu0 %v1606, 87
        %v1635 = vpop.permute.xlu0 %1634
        %1636 = vrot.lane.b32.xlu0 %v1607, 87
        %v1637 = vpop.permute.xlu0 %1636
        %1638 = vrot.lane.b32.xlu0 %v1608, 87
        %v1639 = vpop.permute.xlu0 %1638
        %1640 = vrot.lane.b32.xlu0 %v1609, 87
        %v1641 = vpop.permute.xlu0 %1640
        %1642 = vrot.lane.b32.xlu0 %v1610, 87
        %v1643 = vpop.permute.xlu0 %1642
        %1644 = vrot.lane.b32.xlu0 %v1611, 87
        %v1645 = vpop.permute.xlu0 %1644
        %1646 = vrot.lane.b32.xlu0 %v1612, 87
        %v1647 = vpop.permute.xlu0 %1646
        %1648 = vrot.lane.b32.xlu0 %v1613, 87
        %v1649 = vpop.permute.xlu0 %1648
        %v1650 = vrot.slane %v1627, 4
        %v1651 = vrot.slane %v1629, 4
        %v1652 = vrot.slane %v1631, 4
        %v1653 = vrot.slane %v1633, 4
        %v1654 = vrot.slane %v1635, 4
        %v1655 = vrot.slane %v1637, 4
        %v1656 = vrot.slane %v1639, 4
        %v1657 = vrot.slane %v1641, 4
        %v1658 = vrot.slane %v1643, 4
        %v1659 = vrot.slane %v1645, 4
        %v1660 = vrot.slane %v1647, 4
        %v1661 = vrot.slane %v1649, 4
        %v1662 = vsel %vm1103, %v1650, %v1651
        %vm1663 = vcmask 711680
        %v1664 = vsel %vm1663, %v1627, %v1662
        %v1665 = vsel %vm1103, %v1651, %v1652
        %v1666 = vsel %vm1663, %v1629, %v1665
        %v1667 = vsel %vm1103, %v1653, %v1654
        %v1668 = vsel %vm1663, %v1633, %v1667
        %v1669 = vsel %vm1103, %v1654, %v1655
        %v1670 = vsel %vm1663, %v1635, %v1669
        %v1671 = vsel %vm1103, %v1656, %v1657
        %v1672 = vsel %vm1663, %v1639, %v1671
        %v1673 = vsel %vm1103, %v1657, %v1658
        %v1674 = vsel %vm1663, %v1641, %v1673
        %v1675 = vsel %vm1103, %v1659, %v1660
        %v1676 = vsel %vm1663, %v1645, %v1675
        %v1677 = vsel %vm1103, %v1660, %v1661
        %v1678 = vsel %vm1663, %v1647, %v1677
        %1687 = vst [vmem:[#allocation4 + $0x1c0] sm:$0xff] %v1664
        %1688 = vst [vmem:[#allocation4 + $0x1c8] sm:$0xff] %v1666
        %1689 = vst [vmem:[#allocation4 + $0x1d0] sm:$0xff] %v1668
        %1690 = vst [vmem:[#allocation4 + $0x1d8] sm:$0xff] %v1670
        %1691 = vst [vmem:[#allocation4 + $0x1e0] sm:$0xff] %v1672
        %1692 = vst [vmem:[#allocation4 + $0x1e8] sm:$0xff] %v1674
        %1693 = vst [vmem:[#allocation4 + $0x1f0] sm:$0xff] %v1676
        %1694 = vst [vmem:[#allocation4 + $0x1f8] sm:$0xff] %v1678
        %v1695 = vld [vmem:[#allocation3] sm:$0xff]
        %v1696 = vld [vmem:[#allocation3 + $0x8] sm:$0xff]
        %v1697 = vld [vmem:[#allocation3 + $0x10] sm:$0xf]
        %v1698 = vld [vmem:[#allocation3 + $0x14] sm:$0xff]
        %v1699 = vld [vmem:[#allocation3 + $0x1c] sm:$0xff]
        %v1700 = vld [vmem:[#allocation3 + $0x24] sm:$0xf]
        %v1701 = vld [vmem:[#allocation3 + $0x28] sm:$0xff]
        %v1702 = vld [vmem:[#allocation3 + $0x30] sm:$0xff]
        %v1703 = vld [vmem:[#allocation3 + $0x38] sm:$0xf]
        %v1704 = vld [vmem:[#allocation3 + $0x3c] sm:$0xff]
        %v1705 = vld [vmem:[#allocation3 + $0x44] sm:$0xff]
        %v1706 = vld [vmem:[#allocation3 + $0x4c] sm:$0xf]
        %1719 = vrot.lane.b32.xlu0 %v1695, 86
        %v1720 = vpop.permute.xlu0 %1719
        %1721 = vrot.lane.b32.xlu0 %v1696, 86
        %v1722 = vpop.permute.xlu0 %1721
        %1723 = vrot.lane.b32.xlu0 %v1697, 86
        %v1724 = vpop.permute.xlu0 %1723
        %1725 = vrot.lane.b32.xlu0 %v1698, 86
        %v1726 = vpop.permute.xlu0 %1725
        %1727 = vrot.lane.b32.xlu0 %v1699, 86
        %v1728 = vpop.permute.xlu0 %1727
        %1729 = vrot.lane.b32.xlu0 %v1700, 86
        %v1730 = vpop.permute.xlu0 %1729
        %1731 = vrot.lane.b32.xlu0 %v1701, 86
        %v1732 = vpop.permute.xlu0 %1731
        %1733 = vrot.lane.b32.xlu0 %v1702, 86
        %v1734 = vpop.permute.xlu0 %1733
        %1735 = vrot.lane.b32.xlu0 %v1703, 86
        %v1736 = vpop.permute.xlu0 %1735
        %1737 = vrot.lane.b32.xlu0 %v1704, 86
        %v1738 = vpop.permute.xlu0 %1737
        %1739 = vrot.lane.b32.xlu0 %v1705, 86
        %v1740 = vpop.permute.xlu0 %1739
        %1741 = vrot.lane.b32.xlu0 %v1706, 86
        %v1742 = vpop.permute.xlu0 %1741
        %v1743 = vrot.slane %v1720, 4
        %v1744 = vrot.slane %v1722, 4
        %v1745 = vrot.slane %v1724, 4
        %v1746 = vrot.slane %v1726, 4
        %v1747 = vrot.slane %v1728, 4
        %v1748 = vrot.slane %v1730, 4
        %v1749 = vrot.slane %v1732, 4
        %v1750 = vrot.slane %v1734, 4
        %v1751 = vrot.slane %v1736, 4
        %v1752 = vrot.slane %v1738, 4
        %v1753 = vrot.slane %v1740, 4
        %v1754 = vrot.slane %v1742, 4
        %v1755 = vsel %vm1103, %v1743, %v1744
        %vm1756 = vcmask 703488
        %v1757 = vsel %vm1756, %v1720, %v1755
        %v1758 = vsel %vm1103, %v1744, %v1745
        %v1759 = vsel %vm1756, %v1722, %v1758
        %v1760 = vsel %vm1103, %v1746, %v1747
        %v1761 = vsel %vm1756, %v1726, %v1760
        %v1762 = vsel %vm1103, %v1747, %v1748
        %v1763 = vsel %vm1756, %v1728, %v1762
        %v1764 = vsel %vm1103, %v1749, %v1750
        %v1765 = vsel %vm1756, %v1732, %v1764
        %v1766 = vsel %vm1103, %v1750, %v1751
        %v1767 = vsel %vm1756, %v1734, %v1766
        %v1768 = vsel %vm1103, %v1752, %v1753
        %v1769 = vsel %vm1756, %v1738, %v1768
        %v1770 = vsel %vm1103, %v1753, %v1754
        %v1771 = vsel %vm1756, %v1740, %v1770
        %1780 = vst [vmem:[#allocation4 + $0x200] sm:$0xff] %v1757
        %1781 = vst [vmem:[#allocation4 + $0x208] sm:$0xff] %v1759
        %1782 = vst [vmem:[#allocation4 + $0x210] sm:$0xff] %v1761
        %1783 = vst [vmem:[#allocation4 + $0x218] sm:$0xff] %v1763
        %1784 = vst [vmem:[#allocation4 + $0x220] sm:$0xff] %v1765
        %1785 = vst [vmem:[#allocation4 + $0x228] sm:$0xff] %v1767
        %1786 = vst [vmem:[#allocation4 + $0x230] sm:$0xff] %v1769
        %1787 = vst [vmem:[#allocation4 + $0x238] sm:$0xff] %v1771
        %v1788 = vld [vmem:[%s4] sm:$0xff]
        %v1789 = vld [vmem:[%s4 + $0x8] sm:$0xf]
        %v1790 = vld [vmem:[%s4 + $0xc] sm:$0xff]
        %v1791 = vld [vmem:[%s4 + $0x14] sm:$0xf]
        %v1792 = vld [vmem:[%s4 + $0x18] sm:$0xff]
        %v1793 = vld [vmem:[%s4 + $0x20] sm:$0xf]
        %v1794 = vld [vmem:[%s4 + $0x24] sm:$0xff]
        %v1795 = vld [vmem:[%s4 + $0x2c] sm:$0xf]
        %v1796 = vld [vmem:[#allocation4] sm:$0xff]
        %v1797 = vld [vmem:[#allocation4 + $0x8] sm:$0xff]
        %v1798 = vld [vmem:[#allocation4 + $0x10] sm:$0xff]
        %v1799 = vld [vmem:[#allocation4 + $0x18] sm:$0xff]
        %v1800 = vld [vmem:[#allocation4 + $0x20] sm:$0xff]
        %v1801 = vld [vmem:[#allocation4 + $0x28] sm:$0xff]
        %v1802 = vld [vmem:[#allocation4 + $0x30] sm:$0xff]
        %v1803 = vld [vmem:[#allocation4 + $0x38] sm:$0xff]
        %v1804 = vld [vmem:[#allocation4 + $0x40] sm:$0xff]
        %v1805 = vld [vmem:[#allocation4 + $0x48] sm:$0xff]
        %v1806 = vld [vmem:[#allocation4 + $0x50] sm:$0xff]
        %v1807 = vld [vmem:[#allocation4 + $0x58] sm:$0xff]
        %v1808 = vld [vmem:[#allocation4 + $0x60] sm:$0xff]
        %v1809 = vld [vmem:[#allocation4 + $0x68] sm:$0xff]
        %v1810 = vld [vmem:[#allocation4 + $0x70] sm:$0xff]
        %v1811 = vld [vmem:[#allocation4 + $0x78] sm:$0xff]
        %v1812 = vld [vmem:[#allocation4 + $0x80] sm:$0xff]
        %v1813 = vld [vmem:[#allocation4 + $0x88] sm:$0xff]
        %v1814 = vld [vmem:[#allocation4 + $0x90] sm:$0xff]
        %v1815 = vld [vmem:[#allocation4 + $0x98] sm:$0xff]
        %v1816 = vld [vmem:[#allocation4 + $0xa0] sm:$0xff]
        %v1817 = vld [vmem:[#allocation4 + $0xa8] sm:$0xff]
        %v1818 = vld [vmem:[#allocation4 + $0xb0] sm:$0xff]
        %v1819 = vld [vmem:[#allocation4 + $0xb8] sm:$0xff]
        %v1820 = vld [vmem:[#allocation4 + $0xc0] sm:$0xff]
        %v1821 = vld [vmem:[#allocation4 + $0xc8] sm:$0xff]
        %v1822 = vld [vmem:[#allocation4 + $0xd0] sm:$0xff]
        %v1823 = vld [vmem:[#allocation4 + $0xd8] sm:$0xff]
        %v1824 = vld [vmem:[#allocation4 + $0xe0] sm:$0xff]
        %v1825 = vld [vmem:[#allocation4 + $0xe8] sm:$0xff]
        %v1826 = vld [vmem:[#allocation4 + $0xf0] sm:$0xff]
        %v1827 = vld [vmem:[#allocation4 + $0xf8] sm:$0xff]
        %v1828 = vld [vmem:[#allocation4 + $0x100] sm:$0xff]
        %v1829 = vld [vmem:[#allocation4 + $0x108] sm:$0xff]
        %v1830 = vld [vmem:[#allocation4 + $0x110] sm:$0xff]
        %v1831 = vld [vmem:[#allocation4 + $0x118] sm:$0xff]
        %v1832 = vld [vmem:[#allocation4 + $0x120] sm:$0xff]
        %v1833 = vld [vmem:[#allocation4 + $0x128] sm:$0xff]
        %v1834 = vld [vmem:[#allocation4 + $0x130] sm:$0xff]
        %v1835 = vld [vmem:[#allocation4 + $0x138] sm:$0xff]
        %v1836 = vld [vmem:[#allocation4 + $0x140] sm:$0xff]
        %v1837 = vld [vmem:[#allocation4 + $0x148] sm:$0xff]
        %v1838 = vld [vmem:[#allocation4 + $0x150] sm:$0xff]
        %v1839 = vld [vmem:[#allocation4 + $0x158] sm:$0xff]
        %v1840 = vld [vmem:[#allocation4 + $0x160] sm:$0xff]
        %v1841 = vld [vmem:[#allocation4 + $0x168] sm:$0xff]
        %v1842 = vld [vmem:[#allocation4 + $0x170] sm:$0xff]
        %v1843 = vld [vmem:[#allocation4 + $0x178] sm:$0xff]
        %v1844 = vld [vmem:[#allocation4 + $0x180] sm:$0xff]
        %v1845 = vld [vmem:[#allocation4 + $0x188] sm:$0xff]
        %v1846 = vld [vmem:[#allocation4 + $0x190] sm:$0xff]
        %v1847 = vld [vmem:[#allocation4 + $0x198] sm:$0xff]
        %v1848 = vld [vmem:[#allocation4 + $0x1a0] sm:$0xff]
        %v1849 = vld [vmem:[#allocation4 + $0x1a8] sm:$0xff]
        %v1850 = vld [vmem:[#allocation4 + $0x1b0] sm:$0xff]
        %v1851 = vld [vmem:[#allocation4 + $0x1b8] sm:$0xff]
        %v1852 = vld [vmem:[#allocation4 + $0x1c0] sm:$0xff]
        %v1853 = vld [vmem:[#allocation4 + $0x1c8] sm:$0xff]
        %v1854 = vld [vmem:[#allocation4 + $0x1d0] sm:$0xff]
        %v1855 = vld [vmem:[#allocation4 + $0x1d8] sm:$0xff]
        %v1856 = vld [vmem:[#allocation4 + $0x1e0] sm:$0xff]
        %v1857 = vld [vmem:[#allocation4 + $0x1e8] sm:$0xff]
        %v1858 = vld [vmem:[#allocation4 + $0x1f0] sm:$0xff]
        %v1859 = vld [vmem:[#allocation4 + $0x1f8] sm:$0xff]
        %v1860 = vld [vmem:[#allocation4 + $0x200] sm:$0xff]
        %v1861 = vld [vmem:[#allocation4 + $0x208] sm:$0xff]
        %v1862 = vld [vmem:[#allocation4 + $0x210] sm:$0xff]
        %v1863 = vld [vmem:[#allocation4 + $0x218] sm:$0xff]
        %v1864 = vld [vmem:[#allocation4 + $0x220] sm:$0xff]
        %v1865 = vld [vmem:[#allocation4 + $0x228] sm:$0xff]
        %v1866 = vld [vmem:[#allocation4 + $0x230] sm:$0xff]
        %v1867 = vld [vmem:[#allocation4 + $0x238] sm:$0xff]
        %1868 = vset.pattern.permute.xlu0 1
        %1869 = vperm.xlu0 %1868, %v320
        %v1870 = vpop.permute.xlu0 %1869
        %1872 = vset.pattern.permute.xlu0 1
        %1873 = vperm.xlu0 %1872, %v321
        %v1874 = vpop.permute.xlu0 %1873
        %1876 = vset.pattern.permute.xlu0 1
        %1877 = vperm.xlu0 %1876, %v322
        %v1878 = vpop.permute.xlu0 %1877
        %1880 = vset.pattern.permute.xlu0 1
        %1881 = vperm.xlu0 %1880, %v323
        %v1882 = vpop.permute.xlu0 %1881
        %v1892 = vunpack.c.l.b16 %v1788
        %v1893 = vunpack.c.h.b16 %v1788
        %v1894 = vunpack.c.l.b16 %v1789
        %v1895 = vunpack.c.l.b16 %v1790
        %v1896 = vunpack.c.h.b16 %v1790
        %v1897 = vunpack.c.l.b16 %v1791
        %v1898 = vunpack.c.l.b16 %v1792
        %v1899 = vunpack.c.h.b16 %v1792
        %v1900 = vunpack.c.l.b16 %v1793
        %v1901 = vunpack.c.l.b16 %v1794
        %v1902 = vunpack.c.h.b16 %v1794
        %v1903 = vunpack.c.l.b16 %v1795
        %v1904 = vpack.c.b16 %v1895, %v1892
        %v1905 = vpack.c.b16 %v1896, %v1893
        %v1906 = vpack.c.b16 %v1897, %v1894
        %v1907 = vpack.c.b16 %v1901, %v1898
        %v1908 = vpack.c.b16 %v1902, %v1899
        %v1909 = vpack.c.b16 %v1903, %v1900
        %v1986 = vunpack.c.l.b16 %v1796
        %v1987 = vunpack.c.h.b16 %v1796
        %v1988 = vunpack.c.l.b16 %v1797
        %v1989 = vunpack.c.h.b16 %v1797
        %v1990 = vunpack.c.l.b16 %v1798
        %v1991 = vunpack.c.h.b16 %v1798
        %v1992 = vunpack.c.l.b16 %v1799
        %v1993 = vunpack.c.h.b16 %v1799
        %v1994 = vunpack.c.l.b16 %v1800
        %v1995 = vunpack.c.h.b16 %v1800
        %v1996 = vunpack.c.l.b16 %v1801
        %v1997 = vunpack.c.h.b16 %v1801
        %v1998 = vunpack.c.l.b16 %v1802
        %v1999 = vunpack.c.h.b16 %v1802
        %v2000 = vunpack.c.l.b16 %v1803
        %v2001 = vunpack.c.h.b16 %v1803
        %v2002 = vunpack.c.l.b16 %v1804
        %v2003 = vunpack.c.h.b16 %v1804
        %v2004 = vunpack.c.l.b16 %v1805
        %v2005 = vunpack.c.h.b16 %v1805
        %v2006 = vunpack.c.l.b16 %v1806
        %v2007 = vunpack.c.h.b16 %v1806
        %v2008 = vunpack.c.l.b16 %v1807
        %v2009 = vunpack.c.h.b16 %v1807
        %v2010 = vunpack.c.l.b16 %v1808
        %v2011 = vunpack.c.h.b16 %v1808
        %v2012 = vunpack.c.l.b16 %v1809
        %v2013 = vunpack.c.h.b16 %v1809
        %v2014 = vunpack.c.l.b16 %v1810
        %v2015 = vunpack.c.h.b16 %v1810
        %v2016 = vunpack.c.l.b16 %v1811
        %v2017 = vunpack.c.h.b16 %v1811
        %v2018 = vunpack.c.l.b16 %v1812
        %v2019 = vunpack.c.h.b16 %v1812
        %v2020 = vunpack.c.l.b16 %v1813
        %v2021 = vunpack.c.h.b16 %v1813
        %v2022 = vunpack.c.l.b16 %v1814
        %v2023 = vunpack.c.h.b16 %v1814
        %v2024 = vunpack.c.l.b16 %v1815
        %v2025 = vunpack.c.h.b16 %v1815
        %v2026 = vunpack.c.l.b16 %v1816
        %v2027 = vunpack.c.h.b16 %v1816
        %v2028 = vunpack.c.l.b16 %v1817
        %v2029 = vunpack.c.h.b16 %v1817
        %v2030 = vunpack.c.l.b16 %v1818
        %v2031 = vunpack.c.h.b16 %v1818
        %v2032 = vunpack.c.l.b16 %v1819
        %v2033 = vunpack.c.h.b16 %v1819
        %v2034 = vunpack.c.l.b16 %v1820
        %v2035 = vunpack.c.h.b16 %v1820
        %v2036 = vunpack.c.l.b16 %v1821
        %v2037 = vunpack.c.h.b16 %v1821
        %v2038 = vunpack.c.l.b16 %v1822
        %v2039 = vunpack.c.h.b16 %v1822
        %v2040 = vunpack.c.l.b16 %v1823
        %v2041 = vunpack.c.h.b16 %v1823
        %v2042 = vunpack.c.l.b16 %v1824
        %v2043 = vunpack.c.h.b16 %v1824
        %v2044 = vunpack.c.l.b16 %v1825
        %v2045 = vunpack.c.h.b16 %v1825
        %v2046 = vunpack.c.l.b16 %v1826
        %v2047 = vunpack.c.h.b16 %v1826
        %v2048 = vunpack.c.l.b16 %v1827
        %v2049 = vunpack.c.h.b16 %v1827
        %v2050 = vunpack.c.l.b16 %v1828
        %v2051 = vunpack.c.h.b16 %v1828
        %v2052 = vunpack.c.l.b16 %v1829
        %v2053 = vunpack.c.h.b16 %v1829
        %v2054 = vunpack.c.l.b16 %v1830
        %v2055 = vunpack.c.h.b16 %v1830
        %v2056 = vunpack.c.l.b16 %v1831
        %v2057 = vunpack.c.h.b16 %v1831
        %v2058 = vunpack.c.l.b16 %v1832
        %v2059 = vunpack.c.h.b16 %v1832
        %v2060 = vunpack.c.l.b16 %v1833
        %v2061 = vunpack.c.h.b16 %v1833
        %v2062 = vunpack.c.l.b16 %v1834
        %v2063 = vunpack.c.h.b16 %v1834
        %v2064 = vunpack.c.l.b16 %v1835
        %v2065 = vunpack.c.h.b16 %v1835
        %v2066 = vunpack.c.l.b16 %v1836
        %v2067 = vunpack.c.h.b16 %v1836
        %v2068 = vunpack.c.l.b16 %v1837
        %v2069 = vunpack.c.h.b16 %v1837
        %v2070 = vunpack.c.l.b16 %v1838
        %v2071 = vunpack.c.h.b16 %v1838
        %v2072 = vunpack.c.l.b16 %v1839
        %v2073 = vunpack.c.h.b16 %v1839
        %v2074 = vunpack.c.l.b16 %v1840
        %v2075 = vunpack.c.h.b16 %v1840
        %v2076 = vunpack.c.l.b16 %v1841
        %v2077 = vunpack.c.h.b16 %v1841
        %v2078 = vunpack.c.l.b16 %v1842
        %v2079 = vunpack.c.h.b16 %v1842
        %v2080 = vunpack.c.l.b16 %v1843
        %v2081 = vunpack.c.h.b16 %v1843
        %v2082 = vunpack.c.l.b16 %v1844
        %v2083 = vunpack.c.h.b16 %v1844
        %v2084 = vunpack.c.l.b16 %v1845
        %v2085 = vunpack.c.h.b16 %v1845
        %v2086 = vunpack.c.l.b16 %v1846
        %v2087 = vunpack.c.h.b16 %v1846
        %v2088 = vunpack.c.l.b16 %v1847
        %v2089 = vunpack.c.h.b16 %v1847
        %v2090 = vunpack.c.l.b16 %v1848
        %v2091 = vunpack.c.h.b16 %v1848
        %v2092 = vunpack.c.l.b16 %v1849
        %v2093 = vunpack.c.h.b16 %v1849
        %v2094 = vunpack.c.l.b16 %v1850
        %v2095 = vunpack.c.h.b16 %v1850
        %v2096 = vunpack.c.l.b16 %v1851
        %v2097 = vunpack.c.h.b16 %v1851
        %v2098 = vunpack.c.l.b16 %v1852
        %v2099 = vunpack.c.h.b16 %v1852
        %v2100 = vunpack.c.l.b16 %v1853
        %v2101 = vunpack.c.h.b16 %v1853
        %v2102 = vunpack.c.l.b16 %v1854
        %v2103 = vunpack.c.h.b16 %v1854
        %v2104 = vunpack.c.l.b16 %v1855
        %v2105 = vunpack.c.h.b16 %v1855
        %v2106 = vunpack.c.l.b16 %v1856
        %v2107 = vunpack.c.h.b16 %v1856
        %v2108 = vunpack.c.l.b16 %v1857
        %v2109 = vunpack.c.h.b16 %v1857
        %v2110 = vunpack.c.l.b16 %v1858
        %v2111 = vunpack.c.h.b16 %v1858
        %v2112 = vunpack.c.l.b16 %v1859
        %v2113 = vunpack.c.h.b16 %v1859
        %v2114 = vunpack.c.l.b16 %v1860
        %v2115 = vunpack.c.h.b16 %v1860
        %v2116 = vunpack.c.l.b16 %v1861
        %v2117 = vunpack.c.h.b16 %v1861
        %v2118 = vunpack.c.l.b16 %v1862
        %v2119 = vunpack.c.h.b16 %v1862
        %v2120 = vunpack.c.l.b16 %v1863
        %v2121 = vunpack.c.h.b16 %v1863
        %v2122 = vunpack.c.l.b16 %v1864
        %v2123 = vunpack.c.h.b16 %v1864
        %v2124 = vunpack.c.l.b16 %v1865
        %v2125 = vunpack.c.h.b16 %v1865
        %v2126 = vunpack.c.l.b16 %v1866
        %v2127 = vunpack.c.h.b16 %v1866
        %v2128 = vunpack.c.l.b16 %v1867
        %v2129 = vunpack.c.h.b16 %v1867
        %v2130 = vpack.c.b16 %v1990, %v1986
        %v2131 = vpack.c.b16 %v1991, %v1987
        %v2132 = vpack.c.b16 %v1992, %v1988
        %v2133 = vpack.c.b16 %v1993, %v1989
        %v2134 = vpack.c.b16 %v1998, %v1994
        %v2135 = vpack.c.b16 %v1999, %v1995
        %v2136 = vpack.c.b16 %v2000, %v1996
        %v2137 = vpack.c.b16 %v2001, %v1997
        %v2138 = vpack.c.b16 %v2006, %v2002
        %v2139 = vpack.c.b16 %v2007, %v2003
        %v2140 = vpack.c.b16 %v2008, %v2004
        %v2141 = vpack.c.b16 %v2009, %v2005
        %v2142 = vpack.c.b16 %v2014, %v2010
        %v2143 = vpack.c.b16 %v2015, %v2011
        %v2144 = vpack.c.b16 %v2016, %v2012
        %v2145 = vpack.c.b16 %v2017, %v2013
        %v2146 = vpack.c.b16 %v2022, %v2018
        %v2147 = vpack.c.b16 %v2023, %v2019
        %v2148 = vpack.c.b16 %v2024, %v2020
        %v2149 = vpack.c.b16 %v2025, %v2021
        %v2150 = vpack.c.b16 %v2030, %v2026
        %v2151 = vpack.c.b16 %v2031, %v2027
        %v2152 = vpack.c.b16 %v2032, %v2028
        %v2153 = vpack.c.b16 %v2033, %v2029
        %v2154 = vpack.c.b16 %v2038, %v2034
        %v2155 = vpack.c.b16 %v2039, %v2035
        %v2156 = vpack.c.b16 %v2040, %v2036
        %v2157 = vpack.c.b16 %v2041, %v2037
        %v2158 = vpack.c.b16 %v2046, %v2042
        %v2159 = vpack.c.b16 %v2047, %v2043
        %v2160 = vpack.c.b16 %v2048, %v2044
        %v2161 = vpack.c.b16 %v2049, %v2045
        %v2162 = vpack.c.b16 %v2054, %v2050
        %v2163 = vpack.c.b16 %v2055, %v2051
        %v2164 = vpack.c.b16 %v2056, %v2052
        %v2165 = vpack.c.b16 %v2057, %v2053
        %v2166 = vpack.c.b16 %v2062, %v2058
        %v2167 = vpack.c.b16 %v2063, %v2059
        %v2168 = vpack.c.b16 %v2064, %v2060
        %v2169 = vpack.c.b16 %v2065, %v2061
        %v2170 = vpack.c.b16 %v2070, %v2066
        %v2171 = vpack.c.b16 %v2071, %v2067
        %v2172 = vpack.c.b16 %v2072, %v2068
        %v2173 = vpack.c.b16 %v2073, %v2069
        %v2174 = vpack.c.b16 %v2078, %v2074
        %v2175 = vpack.c.b16 %v2079, %v2075
        %v2176 = vpack.c.b16 %v2080, %v2076
        %v2177 = vpack.c.b16 %v2081, %v2077
        %v2178 = vpack.c.b16 %v2086, %v2082
        %v2179 = vpack.c.b16 %v2087, %v2083
        %v2180 = vpack.c.b16 %v2088, %v2084
        %v2181 = vpack.c.b16 %v2089, %v2085
        %v2182 = vpack.c.b16 %v2094, %v2090
        %v2183 = vpack.c.b16 %v2095, %v2091
        %v2184 = vpack.c.b16 %v2096, %v2092
        %v2185 = vpack.c.b16 %v2097, %v2093
        %v2186 = vpack.c.b16 %v2102, %v2098
        %v2187 = vpack.c.b16 %v2103, %v2099
        %v2188 = vpack.c.b16 %v2104, %v2100
        %v2189 = vpack.c.b16 %v2105, %v2101
        %v2190 = vpack.c.b16 %v2110, %v2106
        %v2191 = vpack.c.b16 %v2111, %v2107
        %v2192 = vpack.c.b16 %v2112, %v2108
        %v2193 = vpack.c.b16 %v2113, %v2109
        %v2194 = vpack.c.b16 %v2118, %v2114
        %v2195 = vpack.c.b16 %v2119, %v2115
        %v2196 = vpack.c.b16 %v2120, %v2116
        %v2197 = vpack.c.b16 %v2121, %v2117
        %v2198 = vpack.c.b16 %v2126, %v2122
        %v2199 = vpack.c.b16 %v2127, %v2123
        %v2200 = vpack.c.b16 %v2128, %v2124
        %v2201 = vpack.c.b16 %v2129, %v2125
        %v2275 = vsel %vm374, %v1906, 0
        %v2278 = vsel %vm374, %v1909, 0
        %2280 = vmatprep.subr.bf16.mxu0 %v2159
        %2281 = vmatpush1.bf16.msra.mxu0 %v2158
        %2282 = vmatprep.subr.bf16.mxu0 %v2155
        %2283 = vmatpush1.bf16.msra.mxu0 %v2154
        %2284 = vmatprep.subr.bf16.mxu0 %v2151
        %2285 = vmatpush1.bf16.msra.mxu0 %v2150
        %2286 = vmatprep.subr.bf16.mxu0 %v2147
        %2287 = vmatpush1.bf16.msra.mxu0 %v2146
        %2288 = vmatprep.subr.bf16.mxu0 %v2143
        %2289 = vmatpush1.bf16.msra.mxu0 %v2142
        %2290 = vmatprep.subr.bf16.mxu0 %v2139
        %2291 = vmatpush1.bf16.msra.mxu0 %v2138
        %2292 = vmatprep.subr.bf16.mxu0 %v2135
        %2293 = vmatpush1.bf16.msra.mxu0 %v2134
        %2294 = vmatprep.subr.bf16.mxu0 %v2131
        %2295 = vmatpush1.bf16.msra.mxu0 %v2130
        %2296 = vmatprep.subr.bf16.mxu0 %v2191
        %2297 = vmatpush2.bf16.msra.mxu0 %v2190
        %2298 = vmatprep.subr.bf16.mxu0 %v2187
        %2299 = vmatpush2.bf16.msra.mxu0 %v2186
        %2300 = vmatprep.subr.bf16.mxu0 %v2183
        %2301 = vmatpush2.bf16.msra.mxu0 %v2182
        %2302 = vmatprep.subr.bf16.mxu0 %v2179
        %2303 = vmatpush2.bf16.msra.mxu0 %v2178
        %2304 = vmatprep.subr.bf16.mxu0 %v2175
        %2305 = vmatpush2.bf16.msra.mxu0 %v2174
        %2306 = vmatprep.subr.bf16.mxu0 %v2171
        %2307 = vmatpush2.bf16.msra.mxu0 %v2170
        %2308 = vmatprep.subr.bf16.mxu0 %v2167
        %2309 = vmatpush2.bf16.msra.mxu0 %v2166
        %2310 = vmatprep.subr.bf16.mxu0 %v2163
        %2311 = vmatpush2.bf16.msra.mxu0 %v2162
        %2312 = vmatprep.mubr.bf16.mxu0 %v1905
        %2313 = vmatmul.mubr.bf16.gmra.mxu0 %v1904
        %v2314 = vpop.f32.mrf.mxu0
        %v2315 = vadd.f32 %v1870, %v2314
        %v2316 = vpop.f32.mrf.mxu0
        %v2317 = vadd.f32 %v1870, %v2316
        %v2318 = vpop.f32.mrf.mxu0
        %v2319 = vadd.f32 %v1874, %v2318
        %v2320 = vpop.f32.mrf.mxu0
        %v2321 = vadd.f32 %v1874, %v2320
        %2322 = vmatprep.mubr.bf16.mxu0 %v1908
        %2323 = vmatmul.mubr.bf16.gmra.mxu0 %v1907
        %v2324 = vpop.f32.mrf.mxu0
        %v2325 = vadd.f32 %v1878, %v2324
        %v2326 = vpop.f32.mrf.mxu0
        %v2327 = vadd.f32 %v1878, %v2326
        %v2328 = vpop.f32.mrf.mxu0
        %v2329 = vadd.f32 %v1882, %v2328
        %v2330 = vpop.f32.mrf.mxu0
        %v2331 = vadd.f32 %v1882, %v2330
        %2332 = vdwg.mxu0
        %2333 = vmatprep.subr.bf16.mxu0 0
        %2334 = vmatpush1.bf16.msra.mxu0 0
        %2335 = vmatprep.subr.bf16.mxu0 0
        %2336 = vmatpush1.bf16.msra.mxu0 0
        %2337 = vmatprep.subr.bf16.mxu0 0
        %2338 = vmatpush1.bf16.msra.mxu0 0
        %2339 = vmatprep.subr.bf16.mxu0 0
        %2340 = vmatpush1.bf16.msra.mxu0 0
        %2341 = vmatprep.subr.bf16.mxu0 0
        %2342 = vmatpush1.bf16.msra.mxu0 0
        %2343 = vmatprep.subr.bf16.mxu0 0
        %2344 = vmatpush1.bf16.msra.mxu0 0
        %2345 = vmatprep.subr.bf16.mxu0 %v2199
        %2346 = vmatpush1.bf16.msra.mxu0 %v2198
        %2347 = vmatprep.subr.bf16.mxu0 %v2195
        %2348 = vmatpush1.bf16.msra.mxu0 %v2194
        %2349 = vmatprep.subr.bf16.mxu0 0
        %2350 = vmatpush2.bf16.msra.mxu0 0
        %2351 = vmatprep.subr.bf16.mxu0 0
        %2352 = vmatpush2.bf16.msra.mxu0 0
        %2353 = vmatprep.subr.bf16.mxu0 0
        %2354 = vmatpush2.bf16.msra.mxu0 0
        %2355 = vmatprep.subr.bf16.mxu0 0
        %2356 = vmatpush2.bf16.msra.mxu0 0
        %2357 = vmatprep.subr.bf16.mxu0 0
        %2358 = vmatpush2.bf16.msra.mxu0 0
        %2359 = vmatprep.subr.bf16.mxu0 0
        %2360 = vmatpush2.bf16.msra.mxu0 0
        %2361 = vmatprep.subr.bf16.mxu0 0
        %2362 = vmatpush2.bf16.msra.mxu0 0
        %2363 = vmatprep.subr.bf16.mxu0 0
        %2364 = vmatpush2.bf16.msra.mxu0 0
        %2365 = vmatprep.mubr.bf16.mxu0 0
        %2366 = vmatmul.mubr.bf16.gmra.mxu0 %v2275
        %v2367 = vpop.f32.mrf.mxu0
        %v2368 = vadd.f32 %v2315, %v2367
        %v2369 = vpop.f32.mrf.mxu0
        %v2370 = vadd.f32 %v2317, %v2369
        %v2371 = vpop.f32.mrf.mxu0
        %v2372 = vadd.f32 %v2319, %v2371
        %v2373 = vpop.f32.mrf.mxu0
        %v2374 = vadd.f32 %v2321, %v2373
        %2375 = vmatprep.mubr.bf16.mxu0 0
        %2376 = vmatmul.mubr.bf16.gmra.mxu0 %v2278
        %v2377 = vpop.f32.mrf.mxu0
        %v2378 = vadd.f32 %v2325, %v2377
        %v2379 = vpop.f32.mrf.mxu0
        %v2380 = vadd.f32 %v2327, %v2379
        %v2381 = vpop.f32.mrf.mxu0
        %v2382 = vadd.f32 %v2329, %v2381
        %v2383 = vpop.f32.mrf.mxu0
        %v2384 = vadd.f32 %v2331, %v2383
        %2385 = vdwg.mxu0
        %2386 = vmatprep.subr.bf16.mxu0 %v2161
        %2387 = vmatpush1.bf16.msra.mxu0 %v2160
        %2388 = vmatprep.subr.bf16.mxu0 %v2157
        %2389 = vmatpush1.bf16.msra.mxu0 %v2156
        %2390 = vmatprep.subr.bf16.mxu0 %v2153
        %2391 = vmatpush1.bf16.msra.mxu0 %v2152
        %2392 = vmatprep.subr.bf16.mxu0 %v2149
        %2393 = vmatpush1.bf16.msra.mxu0 %v2148
        %2394 = vmatprep.subr.bf16.mxu0 %v2145
        %2395 = vmatpush1.bf16.msra.mxu0 %v2144
        %2396 = vmatprep.subr.bf16.mxu0 %v2141
        %2397 = vmatpush1.bf16.msra.mxu0 %v2140
        %2398 = vmatprep.subr.bf16.mxu0 %v2137
        %2399 = vmatpush1.bf16.msra.mxu0 %v2136
        %2400 = vmatprep.subr.bf16.mxu0 %v2133
        %2401 = vmatpush1.bf16.msra.mxu0 %v2132
        %2402 = vmatprep.subr.bf16.mxu0 %v2193
        %2403 = vmatpush2.bf16.msra.mxu0 %v2192
        %2404 = vmatprep.subr.bf16.mxu0 %v2189
        %2405 = vmatpush2.bf16.msra.mxu0 %v2188
        %2406 = vmatprep.subr.bf16.mxu0 %v2185
        %2407 = vmatpush2.bf16.msra.mxu0 %v2184
        %2408 = vmatprep.subr.bf16.mxu0 %v2181
        %2409 = vmatpush2.bf16.msra.mxu0 %v2180
        %2410 = vmatprep.subr.bf16.mxu0 %v2177
        %2411 = vmatpush2.bf16.msra.mxu0 %v2176
        %2412 = vmatprep.subr.bf16.mxu0 %v2173
        %2413 = vmatpush2.bf16.msra.mxu0 %v2172
        %2414 = vmatprep.subr.bf16.mxu0 %v2169
        %2415 = vmatpush2.bf16.msra.mxu0 %v2168
        %2416 = vmatprep.subr.bf16.mxu0 %v2165
        %2417 = vmatpush2.bf16.msra.mxu0 %v2164
        %2418 = vmatprep.mubr.bf16.mxu0 %v1905
        %2419 = vmatmul.mubr.bf16.gmra.mxu0 %v1904
        %v2420 = vpop.f32.mrf.mxu0
        %v2421 = vadd.f32 %v1870, %v2420
        %v2422 = vpop.f32.mrf.mxu0
        %v2423 = vadd.f32 %v1870, %v2422
        %v2424 = vpop.f32.mrf.mxu0
        %v2425 = vadd.f32 %v1874, %v2424
        %v2426 = vpop.f32.mrf.mxu0
        %v2427 = vadd.f32 %v1874, %v2426
        %2428 = vmatprep.mubr.bf16.mxu0 %v1908
        %2429 = vmatmul.mubr.bf16.gmra.mxu0 %v1907
        %v2430 = vpop.f32.mrf.mxu0
        %v2431 = vadd.f32 %v1878, %v2430
        %v2432 = vpop.f32.mrf.mxu0
        %v2433 = vadd.f32 %v1878, %v2432
        %v2434 = vpop.f32.mrf.mxu0
        %v2435 = vadd.f32 %v1882, %v2434
        %v2436 = vpop.f32.mrf.mxu0
        %v2437 = vadd.f32 %v1882, %v2436
        %2438 = vdwg.mxu0
        %2439 = vmatprep.subr.bf16.mxu0 0
        %2440 = vmatpush1.bf16.msra.mxu0 0
        %2441 = vmatprep.subr.bf16.mxu0 0
        %2442 = vmatpush1.bf16.msra.mxu0 0
        %2443 = vmatprep.subr.bf16.mxu0 0
        %2444 = vmatpush1.bf16.msra.mxu0 0
        %2445 = vmatprep.subr.bf16.mxu0 0
        %2446 = vmatpush1.bf16.msra.mxu0 0
        %2447 = vmatprep.subr.bf16.mxu0 0
        %2448 = vmatpush1.bf16.msra.mxu0 0
        %2449 = vmatprep.subr.bf16.mxu0 0
        %2450 = vmatpush1.bf16.msra.mxu0 0
        %2451 = vmatprep.subr.bf16.mxu0 %v2201
        %2452 = vmatpush1.bf16.msra.mxu0 %v2200
        %2453 = vmatprep.subr.bf16.mxu0 %v2197
        %2454 = vmatpush1.bf16.msra.mxu0 %v2196
        %2455 = vmatprep.subr.bf16.mxu0 0
        %2456 = vmatpush2.bf16.msra.mxu0 0
        %2457 = vmatprep.subr.bf16.mxu0 0
        %2458 = vmatpush2.bf16.msra.mxu0 0
        %2459 = vmatprep.subr.bf16.mxu0 0
        %2460 = vmatpush2.bf16.msra.mxu0 0
        %2461 = vmatprep.subr.bf16.mxu0 0
        %2462 = vmatpush2.bf16.msra.mxu0 0
        %2463 = vmatprep.subr.bf16.mxu0 0
        %2464 = vmatpush2.bf16.msra.mxu0 0
        %2465 = vmatprep.subr.bf16.mxu0 0
        %2466 = vmatpush2.bf16.msra.mxu0 0
        %2467 = vmatprep.subr.bf16.mxu0 0
        %2468 = vmatpush2.bf16.msra.mxu0 0
        %2469 = vmatprep.subr.bf16.mxu0 0
        %2470 = vmatpush2.bf16.msra.mxu0 0
        %2471 = vmatprep.mubr.bf16.mxu0 0
        %2472 = vmatmul.mubr.bf16.gmra.mxu0 %v2275
        %v2473 = vpop.f32.mrf.mxu0
        %v2474 = vadd.f32 %v2421, %v2473
        %v2475 = vpop.f32.mrf.mxu0
        %v2476 = vadd.f32 %v2423, %v2475
        %v2477 = vpop.f32.mrf.mxu0
        %v2478 = vadd.f32 %v2425, %v2477
        %v2479 = vpop.f32.mrf.mxu0
        %v2480 = vadd.f32 %v2427, %v2479
        %2481 = vmatprep.mubr.bf16.mxu0 0
        %2482 = vmatmul.mubr.bf16.gmra.mxu0 %v2278
        %v2483 = vpop.f32.mrf.mxu0
        %v2484 = vadd.f32 %v2431, %v2483
        %v2485 = vpop.f32.mrf.mxu0
        %v2486 = vadd.f32 %v2433, %v2485
        %v2487 = vpop.f32.mrf.mxu0
        %v2488 = vadd.f32 %v2435, %v2487
        %v2489 = vpop.f32.mrf.mxu0
        %v2490 = vadd.f32 %v2437, %v2489
        %2491 = vdwg.mxu0
        %v2492 = vmax.f32 %v2368, 0.0
        %v2493 = vmax.f32 %v2370, 0.0
        %v2494 = vmax.f32 %v2474, 0.0
        %v2495 = vmax.f32 %v2476, 0.0
        %v2496 = vmax.f32 %v2372, 0.0
        %v2497 = vmax.f32 %v2374, 0.0
        %v2498 = vmax.f32 %v2478, 0.0
        %v2499 = vmax.f32 %v2480, 0.0
        %v2500 = vmax.f32 %v2378, 0.0
        %v2501 = vmax.f32 %v2380, 0.0
        %v2502 = vmax.f32 %v2484, 0.0
        %v2503 = vmax.f32 %v2486, 0.0
        %v2504 = vmax.f32 %v2382, 0.0
        %v2505 = vmax.f32 %v2384, 0.0
        %v2506 = vmax.f32 %v2488, 0.0
        %v2507 = vmax.f32 %v2490, 0.0
        %v2509 = vlaneseq
        %v2510 = vshrl.u32 %v2509, 7
        %v2511 = vsub.s32 0, %v2510
        %v2512 = vrot.slane %v325, %v2511
        %v2513 = vlaneseq
        %v2514 = vshrl.u32 %v2513, 7
        %v2515 = vsub.s32 1, %v2514
        %v2516 = vrot.slane %v325, %v2515
        %v2517 = vlaneseq
        %v2518 = vshrl.u32 %v2517, 7
        %v2519 = vsub.s32 2, %v2518
        %v2520 = vrot.slane %v325, %v2519
        %v2521 = vlaneseq
        %v2522 = vshrl.u32 %v2521, 7
        %v2523 = vsub.s32 3, %v2522
        %v2524 = vrot.slane %v325, %v2523
        %v2529 = vmul.f32 %v2492, %v2512
        %v2530 = vmul.f32 %v2493, %v2516
        %v2531 = vmul.f32 %v2494, %v2520
        %v2532 = vmul.f32 %v2495, %v2524
        %v2533 = vmul.f32 %v2496, %v2512
        %v2534 = vmul.f32 %v2497, %v2516
        %v2535 = vmul.f32 %v2498, %v2520
        %v2536 = vmul.f32 %v2499, %v2524
        %v2537 = vmul.f32 %v2500, %v2512
        %v2538 = vmul.f32 %v2501, %v2516
        %v2539 = vmul.f32 %v2502, %v2520
        %v2540 = vmul.f32 %v2503, %v2524
        %v2541 = vmul.f32 %v2504, %v2512
        %v2542 = vmul.f32 %v2505, %v2516
        %v2543 = vmul.f32 %v2506, %v2520
        %v2544 = vmul.f32 %v2507, %v2524
        %v2545 = vpack.c.bf16 %v2533, %v2529
        %v2546 = vpack.c.bf16 %v2534, %v2530
        %v2547 = vpack.c.bf16 %v2535, %v2531
        %v2548 = vpack.c.bf16 %v2536, %v2532
        %v2549 = vpack.c.bf16 %v2541, %v2537
        %v2550 = vpack.c.bf16 %v2542, %v2538
        %v2551 = vpack.c.bf16 %v2543, %v2539
        %v2552 = vpack.c.bf16 %v2544, %v2540
        %v2561 = vunpack.c.l.b16 %v2545
        %v2562 = vunpack.c.l.b16 %v2546
        %v2563 = vunpack.c.l.b16 %v2547
        %v2564 = vunpack.c.l.b16 %v2548
        %v2565 = vunpack.c.h.b16 %v2545
        %v2566 = vunpack.c.h.b16 %v2546
        %v2567 = vunpack.c.h.b16 %v2547
        %v2568 = vunpack.c.h.b16 %v2548
        %v2569 = vunpack.c.l.b16 %v2549
        %v2570 = vunpack.c.l.b16 %v2550
        %v2571 = vunpack.c.l.b16 %v2551
        %v2572 = vunpack.c.l.b16 %v2552
        %v2573 = vunpack.c.h.b16 %v2549
        %v2574 = vunpack.c.h.b16 %v2550
        %v2575 = vunpack.c.h.b16 %v2551
        %v2576 = vunpack.c.h.b16 %v2552
        %v2577 = vpack.c.b16 %v2562, %v2561
        %v2578 = vpack.c.b16 %v2564, %v2563
        %v2579 = vpack.c.b16 %v2566, %v2565
        %v2580 = vpack.c.b16 %v2568, %v2567
        %v2581 = vpack.c.b16 %v2570, %v2569
        %v2582 = vpack.c.b16 %v2572, %v2571
        %v2583 = vpack.c.b16 %v2574, %v2573
        %v2584 = vpack.c.b16 %v2576, %v2575
        %2593 = vst [vmem:[#allocation5] sm:$0xff] %v2577
        %2594 = vst [vmem:[#allocation5 + $0x8] sm:$0xff] %v2578
        %2595 = vst [vmem:[#allocation5 + $0x10] sm:$0xff] %v2579
        %2596 = vst [vmem:[#allocation5 + $0x18] sm:$0xff] %v2580
        %2597 = vst [vmem:[#allocation5 + $0x20] sm:$0xff] %v2581
        %2598 = vst [vmem:[#allocation5 + $0x28] sm:$0xff] %v2582
        %2599 = vst [vmem:[#allocation5 + $0x30] sm:$0xff] %v2583
        %2600 = vst [vmem:[#allocation5 + $0x38] sm:$0xff] %v2584
        %v2601 = vld [vmem:[#allocation5] sm:$0xff]
        %v2602 = vld [vmem:[#allocation5 + $0x8] sm:$0xf]
        %v2603 = vld [vmem:[#allocation5 + $0x10] sm:$0xff]
        %v2604 = vld [vmem:[#allocation5 + $0x18] sm:$0xf]
        %v2605 = vld [vmem:[#allocation5 + $0x20] sm:$0xff]
        %v2606 = vld [vmem:[#allocation5 + $0x28] sm:$0xf]
        %v2607 = vld [vmem:[#allocation5 + $0x30] sm:$0xff]
        %v2608 = vld [vmem:[#allocation5 + $0x38] sm:$0xf]
        %2609 = vst [vmem:[#allocation6] sm:$0xff] %v2601
        %2610 = vst [vmem:[#allocation6 + $0x8] sm:$0xf] %v2602
        %2611 = vst [vmem:[#allocation6 + $0xc] sm:$0xff] %v2603
        %2612 = vst [vmem:[#allocation6 + $0x14] sm:$0xf] %v2604
        %2613 = vst [vmem:[#allocation6 + $0x18] sm:$0xff] %v2605
        %2614 = vst [vmem:[#allocation6 + $0x20] sm:$0xf] %v2606
        %2615 = vst [vmem:[#allocation6 + $0x24] sm:$0xff] %v2607
        %2616 = vst [vmem:[#allocation6 + $0x2c] sm:$0xf] %v2608
        %v2617 = vld [vmem:[#allocation5] sm:$0xff]
        %v2618 = vld [vmem:[#allocation5 + $0x8] sm:$0xff]
        %v2619 = vld [vmem:[#allocation5 + $0x10] sm:$0xff]
        %v2620 = vld [vmem:[#allocation5 + $0x18] sm:$0xff]
        %v2621 = vld [vmem:[#allocation5 + $0x20] sm:$0xff]
        %v2622 = vld [vmem:[#allocation5 + $0x28] sm:$0xff]
        %v2623 = vld [vmem:[#allocation5 + $0x30] sm:$0xff]
        %v2624 = vld [vmem:[#allocation5 + $0x38] sm:$0xff]
        %2633 = vrot.lane.b32.xlu0 %v2617, 127
        %v2634 = vpop.permute.xlu0 %2633
        %2635 = vrot.lane.b32.xlu0 %v2618, 127
        %v2636 = vpop.permute.xlu0 %2635
        %2637 = vrot.lane.b32.xlu0 %v2619, 127
        %v2638 = vpop.permute.xlu0 %2637
        %2639 = vrot.lane.b32.xlu0 %v2620, 127
        %v2640 = vpop.permute.xlu0 %2639
        %2641 = vrot.lane.b32.xlu0 %v2621, 127
        %v2642 = vpop.permute.xlu0 %2641
        %2643 = vrot.lane.b32.xlu0 %v2622, 127
        %v2644 = vpop.permute.xlu0 %2643
        %2645 = vrot.lane.b32.xlu0 %v2623, 127
        %v2646 = vpop.permute.xlu0 %2645
        %2647 = vrot.lane.b32.xlu0 %v2624, 127
        %v2648 = vpop.permute.xlu0 %2647
        %v2649 = vrot.slane %v2634, 4
        %v2650 = vrot.slane %v2636, 4
        %v2651 = vrot.slane %v2638, 4
        %v2652 = vrot.slane %v2640, 4
        %v2653 = vrot.slane %v2642, 4
        %v2654 = vrot.slane %v2644, 4
        %v2655 = vrot.slane %v2646, 4
        %v2656 = vrot.slane %v2648, 4
        %v2657 = vsel %vm1103, %v2649, %v2650
        %v2658 = vsel %vm1105, %v2634, %v2657
        %v2659 = vsel %vm1105, %v2636, %v2650
        %v2660 = vsel %vm1103, %v2651, %v2652
        %v2661 = vsel %vm1105, %v2638, %v2660
        %v2662 = vsel %vm1105, %v2640, %v2652
        %v2663 = vsel %vm1103, %v2653, %v2654
        %v2664 = vsel %vm1105, %v2642, %v2663
        %v2665 = vsel %vm1105, %v2644, %v2654
        %v2666 = vsel %vm1103, %v2655, %v2656
        %v2667 = vsel %vm1105, %v2646, %v2666
        %v2668 = vsel %vm1105, %v2648, %v2656
        %2677 = vst [vmem:[#allocation6 + $0x30] sm:$0xff] %v2658
        %2678 = vst [vmem:[#allocation6 + $0x38] sm:$0xf] %v2659
        %2679 = vst [vmem:[#allocation6 + $0x3c] sm:$0xff] %v2661
        %2680 = vst [vmem:[#allocation6 + $0x44] sm:$0xf] %v2662
        %2681 = vst [vmem:[#allocation6 + $0x48] sm:$0xff] %v2664
        %2682 = vst [vmem:[#allocation6 + $0x50] sm:$0xf] %v2665
        %2683 = vst [vmem:[#allocation6 + $0x54] sm:$0xff] %v2667
        %2684 = vst [vmem:[#allocation6 + $0x5c] sm:$0xf] %v2668
        %v2685 = vld [vmem:[#allocation5] sm:$0xff]
        %v2686 = vld [vmem:[#allocation5 + $0x8] sm:$0xff]
        %v2687 = vld [vmem:[#allocation5 + $0x10] sm:$0xff]
        %v2688 = vld [vmem:[#allocation5 + $0x18] sm:$0xff]
        %v2689 = vld [vmem:[#allocation5 + $0x20] sm:$0xff]
        %v2690 = vld [vmem:[#allocation5 + $0x28] sm:$0xff]
        %v2691 = vld [vmem:[#allocation5 + $0x30] sm:$0xff]
        %v2692 = vld [vmem:[#allocation5 + $0x38] sm:$0xff]
        %2701 = vrot.lane.b32.xlu0 %v2685, 126
        %v2702 = vpop.permute.xlu0 %2701
        %2703 = vrot.lane.b32.xlu0 %v2686, 126
        %v2704 = vpop.permute.xlu0 %2703
        %2705 = vrot.lane.b32.xlu0 %v2687, 126
        %v2706 = vpop.permute.xlu0 %2705
        %2707 = vrot.lane.b32.xlu0 %v2688, 126
        %v2708 = vpop.permute.xlu0 %2707
        %2709 = vrot.lane.b32.xlu0 %v2689, 126
        %v2710 = vpop.permute.xlu0 %2709
        %2711 = vrot.lane.b32.xlu0 %v2690, 126
        %v2712 = vpop.permute.xlu0 %2711
        %2713 = vrot.lane.b32.xlu0 %v2691, 126
        %v2714 = vpop.permute.xlu0 %2713
        %2715 = vrot.lane.b32.xlu0 %v2692, 126
        %v2716 = vpop.permute.xlu0 %2715
        %v2717 = vrot.slane %v2702, 4
        %v2718 = vrot.slane %v2704, 4
        %v2719 = vrot.slane %v2706, 4
        %v2720 = vrot.slane %v2708, 4
        %v2721 = vrot.slane %v2710, 4
        %v2722 = vrot.slane %v2712, 4
        %v2723 = vrot.slane %v2714, 4
        %v2724 = vrot.slane %v2716, 4
        %v2725 = vsel %vm1103, %v2717, %v2718
        %v2726 = vsel %vm1198, %v2702, %v2725
        %v2727 = vsel %vm1198, %v2704, %v2718
        %v2728 = vsel %vm1103, %v2719, %v2720
        %v2729 = vsel %vm1198, %v2706, %v2728
        %v2730 = vsel %vm1198, %v2708, %v2720
        %v2731 = vsel %vm1103, %v2721, %v2722
        %v2732 = vsel %vm1198, %v2710, %v2731
        %v2733 = vsel %vm1198, %v2712, %v2722
        %v2734 = vsel %vm1103, %v2723, %v2724
        %v2735 = vsel %vm1198, %v2714, %v2734
        %v2736 = vsel %vm1198, %v2716, %v2724
        %2745 = vst [vmem:[#allocation6 + $0x60] sm:$0xff] %v2726
        %2746 = vst [vmem:[#allocation6 + $0x68] sm:$0xf] %v2727
        %2747 = vst [vmem:[#allocation6 + $0x6c] sm:$0xff] %v2729
        %2748 = vst [vmem:[#allocation6 + $0x74] sm:$0xf] %v2730
        %2749 = vst [vmem:[#allocation6 + $0x78] sm:$0xff] %v2732
        %2750 = vst [vmem:[#allocation6 + $0x80] sm:$0xf] %v2733
        %2751 = vst [vmem:[#allocation6 + $0x84] sm:$0xff] %v2735
        %2752 = vst [vmem:[#allocation6 + $0x8c] sm:$0xf] %v2736
        %v2753 = vld [vmem:[#allocation5] sm:$0xff]
        %v2754 = vld [vmem:[#allocation5 + $0x8] sm:$0xff]
        %v2755 = vld [vmem:[#allocation5 + $0x10] sm:$0xff]
        %v2756 = vld [vmem:[#allocation5 + $0x18] sm:$0xff]
        %v2757 = vld [vmem:[#allocation5 + $0x20] sm:$0xff]
        %v2758 = vld [vmem:[#allocation5 + $0x28] sm:$0xff]
        %v2759 = vld [vmem:[#allocation5 + $0x30] sm:$0xff]
        %v2760 = vld [vmem:[#allocation5 + $0x38] sm:$0xff]
        %2769 = vrot.lane.b32.xlu0 %v2753, 108
        %v2770 = vpop.permute.xlu0 %2769
        %2771 = vrot.lane.b32.xlu0 %v2754, 108
        %v2772 = vpop.permute.xlu0 %2771
        %2773 = vrot.lane.b32.xlu0 %v2755, 108
        %v2774 = vpop.permute.xlu0 %2773
        %2775 = vrot.lane.b32.xlu0 %v2756, 108
        %v2776 = vpop.permute.xlu0 %2775
        %2777 = vrot.lane.b32.xlu0 %v2757, 108
        %v2778 = vpop.permute.xlu0 %2777
        %2779 = vrot.lane.b32.xlu0 %v2758, 108
        %v2780 = vpop.permute.xlu0 %2779
        %2781 = vrot.lane.b32.xlu0 %v2759, 108
        %v2782 = vpop.permute.xlu0 %2781
        %2783 = vrot.lane.b32.xlu0 %v2760, 108
        %v2784 = vpop.permute.xlu0 %2783
        %v2785 = vrot.slane %v2770, 4
        %v2786 = vrot.slane %v2772, 4
        %v2787 = vrot.slane %v2774, 4
        %v2788 = vrot.slane %v2776, 4
        %v2789 = vrot.slane %v2778, 4
        %v2790 = vrot.slane %v2780, 4
        %v2791 = vrot.slane %v2782, 4
        %v2792 = vrot.slane %v2784, 4
        %v2793 = vsel %vm1103, %v2785, %v2786
        %v2794 = vsel %vm1291, %v2770, %v2793
        %v2795 = vsel %vm1291, %v2772, %v2786
        %v2796 = vsel %vm1103, %v2787, %v2788
        %v2797 = vsel %vm1291, %v2774, %v2796
        %v2798 = vsel %vm1291, %v2776, %v2788
        %v2799 = vsel %vm1103, %v2789, %v2790
        %v2800 = vsel %vm1291, %v2778, %v2799
        %v2801 = vsel %vm1291, %v2780, %v2790
        %v2802 = vsel %vm1103, %v2791, %v2792
        %v2803 = vsel %vm1291, %v2782, %v2802
        %v2804 = vsel %vm1291, %v2784, %v2792
        %2813 = vst [vmem:[#allocation6 + $0x90] sm:$0xff] %v2794
        %2814 = vst [vmem:[#allocation6 + $0x98] sm:$0xf] %v2795
        %2815 = vst [vmem:[#allocation6 + $0x9c] sm:$0xff] %v2797
        %2816 = vst [vmem:[#allocation6 + $0xa4] sm:$0xf] %v2798
        %2817 = vst [vmem:[#allocation6 + $0xa8] sm:$0xff] %v2800
        %2818 = vst [vmem:[#allocation6 + $0xb0] sm:$0xf] %v2801
        %2819 = vst [vmem:[#allocation6 + $0xb4] sm:$0xff] %v2803
        %2820 = vst [vmem:[#allocation6 + $0xbc] sm:$0xf] %v2804
        %v2821 = vld [vmem:[#allocation5] sm:$0xff]
        %v2822 = vld [vmem:[#allocation5 + $0x8] sm:$0xff]
        %v2823 = vld [vmem:[#allocation5 + $0x10] sm:$0xff]
        %v2824 = vld [vmem:[#allocation5 + $0x18] sm:$0xff]
        %v2825 = vld [vmem:[#allocation5 + $0x20] sm:$0xff]
        %v2826 = vld [vmem:[#allocation5 + $0x28] sm:$0xff]
        %v2827 = vld [vmem:[#allocation5 + $0x30] sm:$0xff]
        %v2828 = vld [vmem:[#allocation5 + $0x38] sm:$0xff]
        %2837 = vrot.lane.b32.xlu0 %v2821, 107
        %v2838 = vpop.permute.xlu0 %2837
        %2839 = vrot.lane.b32.xlu0 %v2822, 107
        %v2840 = vpop.permute.xlu0 %2839
        %2841 = vrot.lane.b32.xlu0 %v2823, 107
        %v2842 = vpop.permute.xlu0 %2841
        %2843 = vrot.lane.b32.xlu0 %v2824, 107
        %v2844 = vpop.permute.xlu0 %2843
        %2845 = vrot.lane.b32.xlu0 %v2825, 107
        %v2846 = vpop.permute.xlu0 %2845
        %2847 = vrot.lane.b32.xlu0 %v2826, 107
        %v2848 = vpop.permute.xlu0 %2847
        %2849 = vrot.lane.b32.xlu0 %v2827, 107
        %v2850 = vpop.permute.xlu0 %2849
        %2851 = vrot.lane.b32.xlu0 %v2828, 107
        %v2852 = vpop.permute.xlu0 %2851
        %v2853 = vrot.slane %v2838, 4
        %v2854 = vrot.slane %v2840, 4
        %v2855 = vrot.slane %v2842, 4
        %v2856 = vrot.slane %v2844, 4
        %v2857 = vrot.slane %v2846, 4
        %v2858 = vrot.slane %v2848, 4
        %v2859 = vrot.slane %v2850, 4
        %v2860 = vrot.slane %v2852, 4
        %v2861 = vsel %vm1103, %v2853, %v2854
        %v2862 = vsel %vm1384, %v2838, %v2861
        %v2863 = vsel %vm1384, %v2840, %v2854
        %v2864 = vsel %vm1103, %v2855, %v2856
        %v2865 = vsel %vm1384, %v2842, %v2864
        %v2866 = vsel %vm1384, %v2844, %v2856
        %v2867 = vsel %vm1103, %v2857, %v2858
        %v2868 = vsel %vm1384, %v2846, %v2867
        %v2869 = vsel %vm1384, %v2848, %v2858
        %v2870 = vsel %vm1103, %v2859, %v2860
        %v2871 = vsel %vm1384, %v2850, %v2870
        %v2872 = vsel %vm1384, %v2852, %v2860
        %2881 = vst [vmem:[#allocation6 + $0xc0] sm:$0xff] %v2862
        %2882 = vst [vmem:[#allocation6 + $0xc8] sm:$0xf] %v2863
        %2883 = vst [vmem:[#allocation6 + $0xcc] sm:$0xff] %v2865
        %2884 = vst [vmem:[#allocation6 + $0xd4] sm:$0xf] %v2866
        %2885 = vst [vmem:[#allocation6 + $0xd8] sm:$0xff] %v2868
        %2886 = vst [vmem:[#allocation6 + $0xe0] sm:$0xf] %v2869
        %2887 = vst [vmem:[#allocation6 + $0xe4] sm:$0xff] %v2871
        %2888 = vst [vmem:[#allocation6 + $0xec] sm:$0xf] %v2872
        %v2889 = vld [vmem:[#allocation5] sm:$0xff]
        %v2890 = vld [vmem:[#allocation5 + $0x8] sm:$0xff]
        %v2891 = vld [vmem:[#allocation5 + $0x10] sm:$0xff]
        %v2892 = vld [vmem:[#allocation5 + $0x18] sm:$0xff]
        %v2893 = vld [vmem:[#allocation5 + $0x20] sm:$0xff]
        %v2894 = vld [vmem:[#allocation5 + $0x28] sm:$0xff]
        %v2895 = vld [vmem:[#allocation5 + $0x30] sm:$0xff]
        %v2896 = vld [vmem:[#allocation5 + $0x38] sm:$0xff]
        %2905 = vrot.lane.b32.xlu0 %v2889, 106
        %v2906 = vpop.permute.xlu0 %2905
        %2907 = vrot.lane.b32.xlu0 %v2890, 106
        %v2908 = vpop.permute.xlu0 %2907
        %2909 = vrot.lane.b32.xlu0 %v2891, 106
        %v2910 = vpop.permute.xlu0 %2909
        %2911 = vrot.lane.b32.xlu0 %v2892, 106
        %v2912 = vpop.permute.xlu0 %2911
        %2913 = vrot.lane.b32.xlu0 %v2893, 106
        %v2914 = vpop.permute.xlu0 %2913
        %2915 = vrot.lane.b32.xlu0 %v2894, 106
        %v2916 = vpop.permute.xlu0 %2915
        %2917 = vrot.lane.b32.xlu0 %v2895, 106
        %v2918 = vpop.permute.xlu0 %2917
        %2919 = vrot.lane.b32.xlu0 %v2896, 106
        %v2920 = vpop.permute.xlu0 %2919
        %v2921 = vrot.slane %v2906, 4
        %v2922 = vrot.slane %v2908, 4
        %v2923 = vrot.slane %v2910, 4
        %v2924 = vrot.slane %v2912, 4
        %v2925 = vrot.slane %v2914, 4
        %v2926 = vrot.slane %v2916, 4
        %v2927 = vrot.slane %v2918, 4
        %v2928 = vrot.slane %v2920, 4
        %v2929 = vsel %vm1103, %v2921, %v2922
        %v2930 = vsel %vm1477, %v2906, %v2929
        %v2931 = vsel %vm1477, %v2908, %v2922
        %v2932 = vsel %vm1103, %v2923, %v2924
        %v2933 = vsel %vm1477, %v2910, %v2932
        %v2934 = vsel %vm1477, %v2912, %v2924
        %v2935 = vsel %vm1103, %v2925, %v2926
        %v2936 = vsel %vm1477, %v2914, %v2935
        %v2937 = vsel %vm1477, %v2916, %v2926
        %v2938 = vsel %vm1103, %v2927, %v2928
        %v2939 = vsel %vm1477, %v2918, %v2938
        %v2940 = vsel %vm1477, %v2920, %v2928
        %2949 = vst [vmem:[#allocation6 + $0xf0] sm:$0xff] %v2930
        %2950 = vst [vmem:[#allocation6 + $0xf8] sm:$0xf] %v2931
        %2951 = vst [vmem:[#allocation6 + $0xfc] sm:$0xff] %v2933
        %2952 = vst [vmem:[#allocation6 + $0x104] sm:$0xf] %v2934
        %2953 = vst [vmem:[#allocation6 + $0x108] sm:$0xff] %v2936
        %2954 = vst [vmem:[#allocation6 + $0x110] sm:$0xf] %v2937
        %2955 = vst [vmem:[#allocation6 + $0x114] sm:$0xff] %v2939
        %2956 = vst [vmem:[#allocation6 + $0x11c] sm:$0xf] %v2940
        %v2957 = vld [vmem:[#allocation5] sm:$0xff]
        %v2958 = vld [vmem:[#allocation5 + $0x8] sm:$0xff]
        %v2959 = vld [vmem:[#allocation5 + $0x10] sm:$0xff]
        %v2960 = vld [vmem:[#allocation5 + $0x18] sm:$0xff]
        %v2961 = vld [vmem:[#allocation5 + $0x20] sm:$0xff]
        %v2962 = vld [vmem:[#allocation5 + $0x28] sm:$0xff]
        %v2963 = vld [vmem:[#allocation5 + $0x30] sm:$0xff]
        %v2964 = vld [vmem:[#allocation5 + $0x38] sm:$0xff]
        %2973 = vrot.lane.b32.xlu0 %v2957, 88
        %v2974 = vpop.permute.xlu0 %2973
        %2975 = vrot.lane.b32.xlu0 %v2958, 88
        %v2976 = vpop.permute.xlu0 %2975
        %2977 = vrot.lane.b32.xlu0 %v2959, 88
        %v2978 = vpop.permute.xlu0 %2977
        %2979 = vrot.lane.b32.xlu0 %v2960, 88
        %v2980 = vpop.permute.xlu0 %2979
        %2981 = vrot.lane.b32.xlu0 %v2961, 88
        %v2982 = vpop.permute.xlu0 %2981
        %2983 = vrot.lane.b32.xlu0 %v2962, 88
        %v2984 = vpop.permute.xlu0 %2983
        %2985 = vrot.lane.b32.xlu0 %v2963, 88
        %v2986 = vpop.permute.xlu0 %2985
        %2987 = vrot.lane.b32.xlu0 %v2964, 88
        %v2988 = vpop.permute.xlu0 %2987
        %v2989 = vrot.slane %v2974, 4
        %v2990 = vrot.slane %v2976, 4
        %v2991 = vrot.slane %v2978, 4
        %v2992 = vrot.slane %v2980, 4
        %v2993 = vrot.slane %v2982, 4
        %v2994 = vrot.slane %v2984, 4
        %v2995 = vrot.slane %v2986, 4
        %v2996 = vrot.slane %v2988, 4
        %v2997 = vsel %vm1103, %v2989, %v2990
        %v2998 = vsel %vm1570, %v2974, %v2997
        %v2999 = vsel %vm1570, %v2976, %v2990
        %v3000 = vsel %vm1103, %v2991, %v2992
        %v3001 = vsel %vm1570, %v2978, %v3000
        %v3002 = vsel %vm1570, %v2980, %v2992
        %v3003 = vsel %vm1103, %v2993, %v2994
        %v3004 = vsel %vm1570, %v2982, %v3003
        %v3005 = vsel %vm1570, %v2984, %v2994
        %v3006 = vsel %vm1103, %v2995, %v2996
        %v3007 = vsel %vm1570, %v2986, %v3006
        %v3008 = vsel %vm1570, %v2988, %v2996
        %3017 = vst [vmem:[#allocation6 + $0x120] sm:$0xff] %v2998
        %3018 = vst [vmem:[#allocation6 + $0x128] sm:$0xf] %v2999
        %3019 = vst [vmem:[#allocation6 + $0x12c] sm:$0xff] %v3001
        %3020 = vst [vmem:[#allocation6 + $0x134] sm:$0xf] %v3002
        %3021 = vst [vmem:[#allocation6 + $0x138] sm:$0xff] %v3004
        %3022 = vst [vmem:[#allocation6 + $0x140] sm:$0xf] %v3005
        %3023 = vst [vmem:[#allocation6 + $0x144] sm:$0xff] %v3007
        %3024 = vst [vmem:[#allocation6 + $0x14c] sm:$0xf] %v3008
        %v3025 = vld [vmem:[#allocation5] sm:$0xff]
        %v3026 = vld [vmem:[#allocation5 + $0x8] sm:$0xff]
        %v3027 = vld [vmem:[#allocation5 + $0x10] sm:$0xff]
        %v3028 = vld [vmem:[#allocation5 + $0x18] sm:$0xff]
        %v3029 = vld [vmem:[#allocation5 + $0x20] sm:$0xff]
        %v3030 = vld [vmem:[#allocation5 + $0x28] sm:$0xff]
        %v3031 = vld [vmem:[#allocation5 + $0x30] sm:$0xff]
        %v3032 = vld [vmem:[#allocation5 + $0x38] sm:$0xff]
        %3041 = vrot.lane.b32.xlu0 %v3025, 87
        %v3042 = vpop.permute.xlu0 %3041
        %3043 = vrot.lane.b32.xlu0 %v3026, 87
        %v3044 = vpop.permute.xlu0 %3043
        %3045 = vrot.lane.b32.xlu0 %v3027, 87
        %v3046 = vpop.permute.xlu0 %3045
        %3047 = vrot.lane.b32.xlu0 %v3028, 87
        %v3048 = vpop.permute.xlu0 %3047
        %3049 = vrot.lane.b32.xlu0 %v3029, 87
        %v3050 = vpop.permute.xlu0 %3049
        %3051 = vrot.lane.b32.xlu0 %v3030, 87
        %v3052 = vpop.permute.xlu0 %3051
        %3053 = vrot.lane.b32.xlu0 %v3031, 87
        %v3054 = vpop.permute.xlu0 %3053
        %3055 = vrot.lane.b32.xlu0 %v3032, 87
        %v3056 = vpop.permute.xlu0 %3055
        %v3057 = vrot.slane %v3042, 4
        %v3058 = vrot.slane %v3044, 4
        %v3059 = vrot.slane %v3046, 4
        %v3060 = vrot.slane %v3048, 4
        %v3061 = vrot.slane %v3050, 4
        %v3062 = vrot.slane %v3052, 4
        %v3063 = vrot.slane %v3054, 4
        %v3064 = vrot.slane %v3056, 4
        %v3065 = vsel %vm1103, %v3057, %v3058
        %v3066 = vsel %vm1663, %v3042, %v3065
        %v3067 = vsel %vm1663, %v3044, %v3058
        %v3068 = vsel %vm1103, %v3059, %v3060
        %v3069 = vsel %vm1663, %v3046, %v3068
        %v3070 = vsel %vm1663, %v3048, %v3060
        %v3071 = vsel %vm1103, %v3061, %v3062
        %v3072 = vsel %vm1663, %v3050, %v3071
        %v3073 = vsel %vm1663, %v3052, %v3062
        %v3074 = vsel %vm1103, %v3063, %v3064
        %v3075 = vsel %vm1663, %v3054, %v3074
        %v3076 = vsel %vm1663, %v3056, %v3064
        %3085 = vst [vmem:[#allocation6 + $0x150] sm:$0xff] %v3066
        %3086 = vst [vmem:[#allocation6 + $0x158] sm:$0xf] %v3067
        %3087 = vst [vmem:[#allocation6 + $0x15c] sm:$0xff] %v3069
        %3088 = vst [vmem:[#allocation6 + $0x164] sm:$0xf] %v3070
        %3089 = vst [vmem:[#allocation6 + $0x168] sm:$0xff] %v3072
        %3090 = vst [vmem:[#allocation6 + $0x170] sm:$0xf] %v3073
        %3091 = vst [vmem:[#allocation6 + $0x174] sm:$0xff] %v3075
        %3092 = vst [vmem:[#allocation6 + $0x17c] sm:$0xf] %v3076
        %v3093 = vld [vmem:[#allocation5] sm:$0xff]
        %v3094 = vld [vmem:[#allocation5 + $0x8] sm:$0xff]
        %v3095 = vld [vmem:[#allocation5 + $0x10] sm:$0xff]
        %v3096 = vld [vmem:[#allocation5 + $0x18] sm:$0xff]
        %v3097 = vld [vmem:[#allocation5 + $0x20] sm:$0xff]
        %v3098 = vld [vmem:[#allocation5 + $0x28] sm:$0xff]
        %v3099 = vld [vmem:[#allocation5 + $0x30] sm:$0xff]
        %v3100 = vld [vmem:[#allocation5 + $0x38] sm:$0xff]
        %3109 = vrot.lane.b32.xlu0 %v3093, 86
        %v3110 = vpop.permute.xlu0 %3109
        %3111 = vrot.lane.b32.xlu0 %v3094, 86
        %v3112 = vpop.permute.xlu0 %3111
        %3113 = vrot.lane.b32.xlu0 %v3095, 86
        %v3114 = vpop.permute.xlu0 %3113
        %3115 = vrot.lane.b32.xlu0 %v3096, 86
        %v3116 = vpop.permute.xlu0 %3115
        %3117 = vrot.lane.b32.xlu0 %v3097, 86
        %v3118 = vpop.permute.xlu0 %3117
        %3119 = vrot.lane.b32.xlu0 %v3098, 86
        %v3120 = vpop.permute.xlu0 %3119
        %3121 = vrot.lane.b32.xlu0 %v3099, 86
        %v3122 = vpop.permute.xlu0 %3121
        %3123 = vrot.lane.b32.xlu0 %v3100, 86
        %v3124 = vpop.permute.xlu0 %3123
        %v3125 = vrot.slane %v3110, 4
        %v3126 = vrot.slane %v3112, 4
        %v3127 = vrot.slane %v3114, 4
        %v3128 = vrot.slane %v3116, 4
        %v3129 = vrot.slane %v3118, 4
        %v3130 = vrot.slane %v3120, 4
        %v3131 = vrot.slane %v3122, 4
        %v3132 = vrot.slane %v3124, 4
        %v3133 = vsel %vm1103, %v3125, %v3126
        %v3134 = vsel %vm1756, %v3110, %v3133
        %v3135 = vsel %vm1756, %v3112, %v3126
        %v3136 = vsel %vm1103, %v3127, %v3128
        %v3137 = vsel %vm1756, %v3114, %v3136
        %v3138 = vsel %vm1756, %v3116, %v3128
        %v3139 = vsel %vm1103, %v3129, %v3130
        %v3140 = vsel %vm1756, %v3118, %v3139
        %v3141 = vsel %vm1756, %v3120, %v3130
        %v3142 = vsel %vm1103, %v3131, %v3132
        %v3143 = vsel %vm1756, %v3122, %v3142
        %v3144 = vsel %vm1756, %v3124, %v3132
        %3153 = vst [vmem:[#allocation6 + $0x180] sm:$0xff] %v3134
        %3154 = vst [vmem:[#allocation6 + $0x188] sm:$0xf] %v3135
        %3155 = vst [vmem:[#allocation6 + $0x18c] sm:$0xff] %v3137
        %3156 = vst [vmem:[#allocation6 + $0x194] sm:$0xf] %v3138
        %3157 = vst [vmem:[#allocation6 + $0x198] sm:$0xff] %v3140
        %3158 = vst [vmem:[#allocation6 + $0x1a0] sm:$0xf] %v3141
        %3159 = vst [vmem:[#allocation6 + $0x1a4] sm:$0xff] %v3143
        %3160 = vst [vmem:[#allocation6 + $0x1ac] sm:$0xf] %v3144
        %v3161 = vld [vmem:[%s5] sm:$0xff]
        %v3162 = vld [vmem:[%s5 + $0x8] sm:$0xf]
        %v3163 = vld [vmem:[%s5 + $0xc] sm:$0xff]
        %v3164 = vld [vmem:[%s5 + $0x14] sm:$0xf]
        %v3165 = vld [vmem:[%s5 + $0x18] sm:$0xff]
        %v3166 = vld [vmem:[%s5 + $0x20] sm:$0xf]
        %v3167 = vld [vmem:[%s5 + $0x24] sm:$0xff]
        %v3168 = vld [vmem:[%s5 + $0x2c] sm:$0xf]
        %v3169 = vld [vmem:[#allocation6] sm:$0xff]
        %v3170 = vld [vmem:[#allocation6 + $0x8] sm:$0xf]
        %v3171 = vld [vmem:[#allocation6 + $0xc] sm:$0xff]
        %v3172 = vld [vmem:[#allocation6 + $0x14] sm:$0xf]
        %v3173 = vld [vmem:[#allocation6 + $0x18] sm:$0xff]
        %v3174 = vld [vmem:[#allocation6 + $0x20] sm:$0xf]
        %v3175 = vld [vmem:[#allocation6 + $0x24] sm:$0xff]
        %v3176 = vld [vmem:[#allocation6 + $0x2c] sm:$0xf]
        %v3177 = vld [vmem:[#allocation6 + $0x30] sm:$0xff]
        %v3178 = vld [vmem:[#allocation6 + $0x38] sm:$0xf]
        %v3179 = vld [vmem:[#allocation6 + $0x3c] sm:$0xff]
        %v3180 = vld [vmem:[#allocation6 + $0x44] sm:$0xf]
        %v3181 = vld [vmem:[#allocation6 + $0x48] sm:$0xff]
        %v3182 = vld [vmem:[#allocation6 + $0x50] sm:$0xf]
        %v3183 = vld [vmem:[#allocation6 + $0x54] sm:$0xff]
        %v3184 = vld [vmem:[#allocation6 + $0x5c] sm:$0xf]
        %v3185 = vld [vmem:[#allocation6 + $0x60] sm:$0xff]
        %v3186 = vld [vmem:[#allocation6 + $0x68] sm:$0xf]
        %v3187 = vld [vmem:[#allocation6 + $0x6c] sm:$0xff]
        %v3188 = vld [vmem:[#allocation6 + $0x74] sm:$0xf]
        %v3189 = vld [vmem:[#allocation6 + $0x78] sm:$0xff]
        %v3190 = vld [vmem:[#allocation6 + $0x80] sm:$0xf]
        %v3191 = vld [vmem:[#allocation6 + $0x84] sm:$0xff]
        %v3192 = vld [vmem:[#allocation6 + $0x8c] sm:$0xf]
        %v3193 = vld [vmem:[#allocation6 + $0x90] sm:$0xff]
        %v3194 = vld [vmem:[#allocation6 + $0x98] sm:$0xf]
        %v3195 = vld [vmem:[#allocation6 + $0x9c] sm:$0xff]
        %v3196 = vld [vmem:[#allocation6 + $0xa4] sm:$0xf]
        %v3197 = vld [vmem:[#allocation6 + $0xa8] sm:$0xff]
        %v3198 = vld [vmem:[#allocation6 + $0xb0] sm:$0xf]
        %v3199 = vld [vmem:[#allocation6 + $0xb4] sm:$0xff]
        %v3200 = vld [vmem:[#allocation6 + $0xbc] sm:$0xf]
        %v3201 = vld [vmem:[#allocation6 + $0xc0] sm:$0xff]
        %v3202 = vld [vmem:[#allocation6 + $0xc8] sm:$0xf]
        %v3203 = vld [vmem:[#allocation6 + $0xcc] sm:$0xff]
        %v3204 = vld [vmem:[#allocation6 + $0xd4] sm:$0xf]
        %v3205 = vld [vmem:[#allocation6 + $0xd8] sm:$0xff]
        %v3206 = vld [vmem:[#allocation6 + $0xe0] sm:$0xf]
        %v3207 = vld [vmem:[#allocation6 + $0xe4] sm:$0xff]
        %v3208 = vld [vmem:[#allocation6 + $0xec] sm:$0xf]
        %v3209 = vld [vmem:[#allocation6 + $0xf0] sm:$0xff]
        %v3210 = vld [vmem:[#allocation6 + $0xf8] sm:$0xf]
        %v3211 = vld [vmem:[#allocation6 + $0xfc] sm:$0xff]
        %v3212 = vld [vmem:[#allocation6 + $0x104] sm:$0xf]
        %v3213 = vld [vmem:[#allocation6 + $0x108] sm:$0xff]
        %v3214 = vld [vmem:[#allocation6 + $0x110] sm:$0xf]
        %v3215 = vld [vmem:[#allocation6 + $0x114] sm:$0xff]
        %v3216 = vld [vmem:[#allocation6 + $0x11c] sm:$0xf]
        %v3217 = vld [vmem:[#allocation6 + $0x120] sm:$0xff]
        %v3218 = vld [vmem:[#allocation6 + $0x128] sm:$0xf]
        %v3219 = vld [vmem:[#allocation6 + $0x12c] sm:$0xff]
        %v3220 = vld [vmem:[#allocation6 + $0x134] sm:$0xf]
        %v3221 = vld [vmem:[#allocation6 + $0x138] sm:$0xff]
        %v3222 = vld [vmem:[#allocation6 + $0x140] sm:$0xf]
        %v3223 = vld [vmem:[#allocation6 + $0x144] sm:$0xff]
        %v3224 = vld [vmem:[#allocation6 + $0x14c] sm:$0xf]
        %v3225 = vld [vmem:[#allocation6 + $0x150] sm:$0xff]
        %v3226 = vld [vmem:[#allocation6 + $0x158] sm:$0xf]
        %v3227 = vld [vmem:[#allocation6 + $0x15c] sm:$0xff]
        %v3228 = vld [vmem:[#allocation6 + $0x164] sm:$0xf]
        %v3229 = vld [vmem:[#allocation6 + $0x168] sm:$0xff]
        %v3230 = vld [vmem:[#allocation6 + $0x170] sm:$0xf]
        %v3231 = vld [vmem:[#allocation6 + $0x174] sm:$0xff]
        %v3232 = vld [vmem:[#allocation6 + $0x17c] sm:$0xf]
        %v3233 = vld [vmem:[#allocation6 + $0x180] sm:$0xff]
        %v3234 = vld [vmem:[#allocation6 + $0x188] sm:$0xf]
        %v3235 = vld [vmem:[#allocation6 + $0x18c] sm:$0xff]
        %v3236 = vld [vmem:[#allocation6 + $0x194] sm:$0xf]
        %v3237 = vld [vmem:[#allocation6 + $0x198] sm:$0xff]
        %v3238 = vld [vmem:[#allocation6 + $0x1a0] sm:$0xf]
        %v3239 = vld [vmem:[#allocation6 + $0x1a4] sm:$0xff]
        %v3240 = vld [vmem:[#allocation6 + $0x1ac] sm:$0xf]
        %3241 = vset.pattern.permute.xlu0 2
        %3242 = vperm.xlu0 %3241, %v320
        %v3243 = vpop.permute.xlu0 %3242
        %3245 = vset.pattern.permute.xlu0 2
        %3246 = vperm.xlu0 %3245, %v321
        %v3247 = vpop.permute.xlu0 %3246
        %3249 = vset.pattern.permute.xlu0 2
        %3250 = vperm.xlu0 %3249, %v322
        %v3251 = vpop.permute.xlu0 %3250
        %3253 = vset.pattern.permute.xlu0 2
        %3254 = vperm.xlu0 %3253, %v323
        %v3255 = vpop.permute.xlu0 %3254
        %v3265 = vunpack.c.l.b16 %v3161
        %v3266 = vunpack.c.h.b16 %v3161
        %v3267 = vunpack.c.l.b16 %v3162
        %v3268 = vunpack.c.l.b16 %v3163
        %v3269 = vunpack.c.h.b16 %v3163
        %v3270 = vunpack.c.l.b16 %v3164
        %v3271 = vunpack.c.l.b16 %v3165
        %v3272 = vunpack.c.h.b16 %v3165
        %v3273 = vunpack.c.l.b16 %v3166
        %v3274 = vunpack.c.l.b16 %v3167
        %v3275 = vunpack.c.h.b16 %v3167
        %v3276 = vunpack.c.l.b16 %v3168
        %v3277 = vpack.c.b16 %v3268, %v3265
        %v3278 = vpack.c.b16 %v3269, %v3266
        %v3279 = vpack.c.b16 %v3270, %v3267
        %v3280 = vpack.c.b16 %v3274, %v3271
        %v3281 = vpack.c.b16 %v3275, %v3272
        %v3282 = vpack.c.b16 %v3276, %v3273
        %v3359 = vunpack.c.l.b16 %v3169
        %v3360 = vunpack.c.h.b16 %v3169
        %v3361 = vunpack.c.l.b16 %v3170
        %v3362 = vunpack.c.l.b16 %v3171
        %v3363 = vunpack.c.h.b16 %v3171
        %v3364 = vunpack.c.l.b16 %v3172
        %v3365 = vunpack.c.l.b16 %v3173
        %v3366 = vunpack.c.h.b16 %v3173
        %v3367 = vunpack.c.l.b16 %v3174
        %v3368 = vunpack.c.l.b16 %v3175
        %v3369 = vunpack.c.h.b16 %v3175
        %v3370 = vunpack.c.l.b16 %v3176
        %v3371 = vunpack.c.l.b16 %v3177
        %v3372 = vunpack.c.h.b16 %v3177
        %v3373 = vunpack.c.l.b16 %v3178
        %v3374 = vunpack.c.l.b16 %v3179
        %v3375 = vunpack.c.h.b16 %v3179
        %v3376 = vunpack.c.l.b16 %v3180
        %v3377 = vunpack.c.l.b16 %v3181
        %v3378 = vunpack.c.h.b16 %v3181
        %v3379 = vunpack.c.l.b16 %v3182
        %v3380 = vunpack.c.l.b16 %v3183
        %v3381 = vunpack.c.h.b16 %v3183
        %v3382 = vunpack.c.l.b16 %v3184
        %v3383 = vunpack.c.l.b16 %v3185
        %v3384 = vunpack.c.h.b16 %v3185
        %v3385 = vunpack.c.l.b16 %v3186
        %v3386 = vunpack.c.l.b16 %v3187
        %v3387 = vunpack.c.h.b16 %v3187
        %v3388 = vunpack.c.l.b16 %v3188
        %v3389 = vunpack.c.l.b16 %v3189
        %v3390 = vunpack.c.h.b16 %v3189
        %v3391 = vunpack.c.l.b16 %v3190
        %v3392 = vunpack.c.l.b16 %v3191
        %v3393 = vunpack.c.h.b16 %v3191
        %v3394 = vunpack.c.l.b16 %v3192
        %v3395 = vunpack.c.l.b16 %v3193
        %v3396 = vunpack.c.h.b16 %v3193
        %v3397 = vunpack.c.l.b16 %v3194
        %v3398 = vunpack.c.l.b16 %v3195
        %v3399 = vunpack.c.h.b16 %v3195
        %v3400 = vunpack.c.l.b16 %v3196
        %v3401 = vunpack.c.l.b16 %v3197
        %v3402 = vunpack.c.h.b16 %v3197
        %v3403 = vunpack.c.l.b16 %v3198
        %v3404 = vunpack.c.l.b16 %v3199
        %v3405 = vunpack.c.h.b16 %v3199
        %v3406 = vunpack.c.l.b16 %v3200
        %v3407 = vunpack.c.l.b16 %v3201
        %v3408 = vunpack.c.h.b16 %v3201
        %v3409 = vunpack.c.l.b16 %v3202
        %v3410 = vunpack.c.l.b16 %v3203
        %v3411 = vunpack.c.h.b16 %v3203
        %v3412 = vunpack.c.l.b16 %v3204
        %v3413 = vunpack.c.l.b16 %v3205
        %v3414 = vunpack.c.h.b16 %v3205
        %v3415 = vunpack.c.l.b16 %v3206
        %v3416 = vunpack.c.l.b16 %v3207
        %v3417 = vunpack.c.h.b16 %v3207
        %v3418 = vunpack.c.l.b16 %v3208
        %v3419 = vunpack.c.l.b16 %v3209
        %v3420 = vunpack.c.h.b16 %v3209
        %v3421 = vunpack.c.l.b16 %v3210
        %v3422 = vunpack.c.l.b16 %v3211
        %v3423 = vunpack.c.h.b16 %v3211
        %v3424 = vunpack.c.l.b16 %v3212
        %v3425 = vunpack.c.l.b16 %v3213
        %v3426 = vunpack.c.h.b16 %v3213
        %v3427 = vunpack.c.l.b16 %v3214
        %v3428 = vunpack.c.l.b16 %v3215
        %v3429 = vunpack.c.h.b16 %v3215
        %v3430 = vunpack.c.l.b16 %v3216
        %v3431 = vunpack.c.l.b16 %v3217
        %v3432 = vunpack.c.h.b16 %v3217
        %v3433 = vunpack.c.l.b16 %v3218
        %v3434 = vunpack.c.l.b16 %v3219
        %v3435 = vunpack.c.h.b16 %v3219
        %v3436 = vunpack.c.l.b16 %v3220
        %v3437 = vunpack.c.l.b16 %v3221
        %v3438 = vunpack.c.h.b16 %v3221
        %v3439 = vunpack.c.l.b16 %v3222
        %v3440 = vunpack.c.l.b16 %v3223
        %v3441 = vunpack.c.h.b16 %v3223
        %v3442 = vunpack.c.l.b16 %v3224
        %v3443 = vunpack.c.l.b16 %v3225
        %v3444 = vunpack.c.h.b16 %v3225
        %v3445 = vunpack.c.l.b16 %v3226
        %v3446 = vunpack.c.l.b16 %v3227
        %v3447 = vunpack.c.h.b16 %v3227
        %v3448 = vunpack.c.l.b16 %v3228
        %v3449 = vunpack.c.l.b16 %v3229
        %v3450 = vunpack.c.h.b16 %v3229
        %v3451 = vunpack.c.l.b16 %v3230
        %v3452 = vunpack.c.l.b16 %v3231
        %v3453 = vunpack.c.h.b16 %v3231
        %v3454 = vunpack.c.l.b16 %v3232
        %v3455 = vunpack.c.l.b16 %v3233
        %v3456 = vunpack.c.h.b16 %v3233
        %v3457 = vunpack.c.l.b16 %v3234
        %v3458 = vunpack.c.l.b16 %v3235
        %v3459 = vunpack.c.h.b16 %v3235
        %v3460 = vunpack.c.l.b16 %v3236
        %v3461 = vunpack.c.l.b16 %v3237
        %v3462 = vunpack.c.h.b16 %v3237
        %v3463 = vunpack.c.l.b16 %v3238
        %v3464 = vunpack.c.l.b16 %v3239
        %v3465 = vunpack.c.h.b16 %v3239
        %v3466 = vunpack.c.l.b16 %v3240
        %v3467 = vpack.c.b16 %v3362, %v3359
        %v3468 = vpack.c.b16 %v3363, %v3360
        %v3469 = vpack.c.b16 %v3364, %v3361
        %v3470 = vpack.c.b16 %v3368, %v3365
        %v3471 = vpack.c.b16 %v3369, %v3366
        %v3472 = vpack.c.b16 %v3370, %v3367
        %v3473 = vpack.c.b16 %v3374, %v3371
        %v3474 = vpack.c.b16 %v3375, %v3372
        %v3475 = vpack.c.b16 %v3376, %v3373
        %v3476 = vpack.c.b16 %v3380, %v3377
        %v3477 = vpack.c.b16 %v3381, %v3378
        %v3478 = vpack.c.b16 %v3382, %v3379
        %v3479 = vpack.c.b16 %v3386, %v3383
        %v3480 = vpack.c.b16 %v3387, %v3384
        %v3481 = vpack.c.b16 %v3388, %v3385
        %v3482 = vpack.c.b16 %v3392, %v3389
        %v3483 = vpack.c.b16 %v3393, %v3390
        %v3484 = vpack.c.b16 %v3394, %v3391
        %v3485 = vpack.c.b16 %v3398, %v3395
        %v3486 = vpack.c.b16 %v3399, %v3396
        %v3487 = vpack.c.b16 %v3400, %v3397
        %v3488 = vpack.c.b16 %v3404, %v3401
        %v3489 = vpack.c.b16 %v3405, %v3402
        %v3490 = vpack.c.b16 %v3406, %v3403
        %v3491 = vpack.c.b16 %v3410, %v3407
        %v3492 = vpack.c.b16 %v3411, %v3408
        %v3493 = vpack.c.b16 %v3412, %v3409
        %v3494 = vpack.c.b16 %v3416, %v3413
        %v3495 = vpack.c.b16 %v3417, %v3414
        %v3496 = vpack.c.b16 %v3418, %v3415
        %v3497 = vpack.c.b16 %v3422, %v3419
        %v3498 = vpack.c.b16 %v3423, %v3420
        %v3499 = vpack.c.b16 %v3424, %v3421
        %v3500 = vpack.c.b16 %v3428, %v3425
        %v3501 = vpack.c.b16 %v3429, %v3426
        %v3502 = vpack.c.b16 %v3430, %v3427
        %v3503 = vpack.c.b16 %v3434, %v3431
        %v3504 = vpack.c.b16 %v3435, %v3432
        %v3505 = vpack.c.b16 %v3436, %v3433
        %v3506 = vpack.c.b16 %v3440, %v3437
        %v3507 = vpack.c.b16 %v3441, %v3438
        %v3508 = vpack.c.b16 %v3442, %v3439
        %v3509 = vpack.c.b16 %v3446, %v3443
        %v3510 = vpack.c.b16 %v3447, %v3444
        %v3511 = vpack.c.b16 %v3448, %v3445
        %v3512 = vpack.c.b16 %v3452, %v3449
        %v3513 = vpack.c.b16 %v3453, %v3450
        %v3514 = vpack.c.b16 %v3454, %v3451
        %v3515 = vpack.c.b16 %v3458, %v3455
        %v3516 = vpack.c.b16 %v3459, %v3456
        %v3517 = vpack.c.b16 %v3460, %v3457
        %v3518 = vpack.c.b16 %v3464, %v3461
        %v3519 = vpack.c.b16 %v3465, %v3462
        %v3520 = vpack.c.b16 %v3466, %v3463
        %v3576 = vsel %vm374, %v3279, 0
        %v3579 = vsel %vm374, %v3282, 0
        %3581 = vmatprep.subr.bf16.mxu0 %v3489
        %3582 = vmatpush1.bf16.msra.mxu0 %v3488
        %3583 = vmatprep.subr.bf16.mxu0 %v3486
        %3584 = vmatpush1.bf16.msra.mxu0 %v3485
        %3585 = vmatprep.subr.bf16.mxu0 %v3483
        %3586 = vmatpush1.bf16.msra.mxu0 %v3482
        %3587 = vmatprep.subr.bf16.mxu0 %v3480
        %3588 = vmatpush1.bf16.msra.mxu0 %v3479
        %3589 = vmatprep.subr.bf16.mxu0 %v3477
        %3590 = vmatpush1.bf16.msra.mxu0 %v3476
        %3591 = vmatprep.subr.bf16.mxu0 %v3474
        %3592 = vmatpush1.bf16.msra.mxu0 %v3473
        %3593 = vmatprep.subr.bf16.mxu0 %v3471
        %3594 = vmatpush1.bf16.msra.mxu0 %v3470
        %3595 = vmatprep.subr.bf16.mxu0 %v3468
        %3596 = vmatpush1.bf16.msra.mxu0 %v3467
        %3597 = vmatprep.subr.bf16.mxu0 %v3513
        %3598 = vmatpush2.bf16.msra.mxu0 %v3512
        %3599 = vmatprep.subr.bf16.mxu0 %v3510
        %3600 = vmatpush2.bf16.msra.mxu0 %v3509
        %3601 = vmatprep.subr.bf16.mxu0 %v3507
        %3602 = vmatpush2.bf16.msra.mxu0 %v3506
        %3603 = vmatprep.subr.bf16.mxu0 %v3504
        %3604 = vmatpush2.bf16.msra.mxu0 %v3503
        %3605 = vmatprep.subr.bf16.mxu0 %v3501
        %3606 = vmatpush2.bf16.msra.mxu0 %v3500
        %3607 = vmatprep.subr.bf16.mxu0 %v3498
        %3608 = vmatpush2.bf16.msra.mxu0 %v3497
        %3609 = vmatprep.subr.bf16.mxu0 %v3495
        %3610 = vmatpush2.bf16.msra.mxu0 %v3494
        %3611 = vmatprep.subr.bf16.mxu0 %v3492
        %3612 = vmatpush2.bf16.msra.mxu0 %v3491
        %3613 = vmatprep.mubr.bf16.mxu0 %v3278
        %3614 = vmatmul.mubr.bf16.gmra.mxu0 %v3277
        %v3615 = vpop.f32.mrf.mxu0
        %v3616 = vadd.f32 %v3243, %v3615
        %v3617 = vpop.f32.mrf.mxu0
        %v3618 = vadd.f32 %v3243, %v3617
        %v3619 = vpop.f32.mrf.mxu0
        %v3620 = vadd.f32 %v3247, %v3619
        %v3621 = vpop.f32.mrf.mxu0
        %v3622 = vadd.f32 %v3247, %v3621
        %3623 = vmatprep.mubr.bf16.mxu0 %v3281
        %3624 = vmatmul.mubr.bf16.gmra.mxu0 %v3280
        %v3625 = vpop.f32.mrf.mxu0
        %v3626 = vadd.f32 %v3251, %v3625
        %v3627 = vpop.f32.mrf.mxu0
        %v3628 = vadd.f32 %v3251, %v3627
        %v3629 = vpop.f32.mrf.mxu0
        %v3630 = vadd.f32 %v3255, %v3629
        %v3631 = vpop.f32.mrf.mxu0
        %v3632 = vadd.f32 %v3255, %v3631
        %3633 = vdwg.mxu0
        %3634 = vmatprep.subr.bf16.mxu0 0
        %3635 = vmatpush1.bf16.msra.mxu0 0
        %3636 = vmatprep.subr.bf16.mxu0 0
        %3637 = vmatpush1.bf16.msra.mxu0 0
        %3638 = vmatprep.subr.bf16.mxu0 0
        %3639 = vmatpush1.bf16.msra.mxu0 0
        %3640 = vmatprep.subr.bf16.mxu0 0
        %3641 = vmatpush1.bf16.msra.mxu0 0
        %3642 = vmatprep.subr.bf16.mxu0 0
        %3643 = vmatpush1.bf16.msra.mxu0 0
        %3644 = vmatprep.subr.bf16.mxu0 0
        %3645 = vmatpush1.bf16.msra.mxu0 0
        %3646 = vmatprep.subr.bf16.mxu0 %v3519
        %3647 = vmatpush1.bf16.msra.mxu0 %v3518
        %3648 = vmatprep.subr.bf16.mxu0 %v3516
        %3649 = vmatpush1.bf16.msra.mxu0 %v3515
        %3650 = vmatprep.subr.bf16.mxu0 0
        %3651 = vmatpush2.bf16.msra.mxu0 0
        %3652 = vmatprep.subr.bf16.mxu0 0
        %3653 = vmatpush2.bf16.msra.mxu0 0
        %3654 = vmatprep.subr.bf16.mxu0 0
        %3655 = vmatpush2.bf16.msra.mxu0 0
        %3656 = vmatprep.subr.bf16.mxu0 0
        %3657 = vmatpush2.bf16.msra.mxu0 0
        %3658 = vmatprep.subr.bf16.mxu0 0
        %3659 = vmatpush2.bf16.msra.mxu0 0
        %3660 = vmatprep.subr.bf16.mxu0 0
        %3661 = vmatpush2.bf16.msra.mxu0 0
        %3662 = vmatprep.subr.bf16.mxu0 0
        %3663 = vmatpush2.bf16.msra.mxu0 0
        %3664 = vmatprep.subr.bf16.mxu0 0
        %3665 = vmatpush2.bf16.msra.mxu0 0
        %3666 = vmatprep.mubr.bf16.mxu0 0
        %3667 = vmatmul.mubr.bf16.gmra.mxu0 %v3576
        %v3668 = vpop.f32.mrf.mxu0
        %v3669 = vadd.f32 %v3616, %v3668
        %v3670 = vpop.f32.mrf.mxu0
        %v3671 = vadd.f32 %v3618, %v3670
        %v3672 = vpop.f32.mrf.mxu0
        %v3673 = vadd.f32 %v3620, %v3672
        %v3674 = vpop.f32.mrf.mxu0
        %v3675 = vadd.f32 %v3622, %v3674
        %3676 = vmatprep.mubr.bf16.mxu0 0
        %3677 = vmatmul.mubr.bf16.gmra.mxu0 %v3579
        %v3678 = vpop.f32.mrf.mxu0
        %v3679 = vadd.f32 %v3626, %v3678
        %v3680 = vpop.f32.mrf.mxu0
        %v3681 = vadd.f32 %v3628, %v3680
        %v3682 = vpop.f32.mrf.mxu0
        %v3683 = vadd.f32 %v3630, %v3682
        %v3684 = vpop.f32.mrf.mxu0
        %v3685 = vadd.f32 %v3632, %v3684
        %3686 = vdwg.mxu0
        %3687 = vmatprep.subr.bf16.mxu0 0
        %3688 = vmatpush1.bf16.msra.mxu0 %v3490
        %3689 = vmatprep.subr.bf16.mxu0 0
        %3690 = vmatpush1.bf16.msra.mxu0 %v3487
        %3691 = vmatprep.subr.bf16.mxu0 0
        %3692 = vmatpush1.bf16.msra.mxu0 %v3484
        %3693 = vmatprep.subr.bf16.mxu0 0
        %3694 = vmatpush1.bf16.msra.mxu0 %v3481
        %3695 = vmatprep.subr.bf16.mxu0 0
        %3696 = vmatpush1.bf16.msra.mxu0 %v3478
        %3697 = vmatprep.subr.bf16.mxu0 0
        %3698 = vmatpush1.bf16.msra.mxu0 %v3475
        %3699 = vmatprep.subr.bf16.mxu0 0
        %3700 = vmatpush1.bf16.msra.mxu0 %v3472
        %3701 = vmatprep.subr.bf16.mxu0 0
        %3702 = vmatpush1.bf16.msra.mxu0 %v3469
        %3703 = vmatprep.subr.bf16.mxu0 0
        %3704 = vmatpush2.bf16.msra.mxu0 %v3514
        %3705 = vmatprep.subr.bf16.mxu0 0
        %3706 = vmatpush2.bf16.msra.mxu0 %v3511
        %3707 = vmatprep.subr.bf16.mxu0 0
        %3708 = vmatpush2.bf16.msra.mxu0 %v3508
        %3709 = vmatprep.subr.bf16.mxu0 0
        %3710 = vmatpush2.bf16.msra.mxu0 %v3505
        %3711 = vmatprep.subr.bf16.mxu0 0
        %3712 = vmatpush2.bf16.msra.mxu0 %v3502
        %3713 = vmatprep.subr.bf16.mxu0 0
        %3714 = vmatpush2.bf16.msra.mxu0 %v3499
        %3715 = vmatprep.subr.bf16.mxu0 0
        %3716 = vmatpush2.bf16.msra.mxu0 %v3496
        %3717 = vmatprep.subr.bf16.mxu0 0
        %3718 = vmatpush2.bf16.msra.mxu0 %v3493
        %3719 = vmatprep.mubr.bf16.mxu0 %v3278
        %3720 = vmatmul.mubr.bf16.gmra.mxu0 %v3277
        %v3721 = vpop.f32.mrf.mxu0
        %v3722 = vadd.f32 %v3243, %v3721
        %v3723 = vpop.f32.mrf.mxu0
        %v3724 = vpop.f32.mrf.mxu0
        %v3725 = vadd.f32 %v3247, %v3724
        %v3726 = vpop.f32.mrf.mxu0
        %3727 = vmatprep.mubr.bf16.mxu0 %v3281
        %3728 = vmatmul.mubr.bf16.gmra.mxu0 %v3280
        %v3729 = vpop.f32.mrf.mxu0
        %v3730 = vadd.f32 %v3251, %v3729
        %v3731 = vpop.f32.mrf.mxu0
        %v3732 = vpop.f32.mrf.mxu0
        %v3733 = vadd.f32 %v3255, %v3732
        %v3734 = vpop.f32.mrf.mxu0
        %3735 = vdwg.mxu0
        %3736 = vmatprep.subr.bf16.mxu0 0
        %3737 = vmatpush1.bf16.msra.mxu0 0
        %3738 = vmatprep.subr.bf16.mxu0 0
        %3739 = vmatpush1.bf16.msra.mxu0 0
        %3740 = vmatprep.subr.bf16.mxu0 0
        %3741 = vmatpush1.bf16.msra.mxu0 0
        %3742 = vmatprep.subr.bf16.mxu0 0
        %3743 = vmatpush1.bf16.msra.mxu0 0
        %3744 = vmatprep.subr.bf16.mxu0 0
        %3745 = vmatpush1.bf16.msra.mxu0 0
        %3746 = vmatprep.subr.bf16.mxu0 0
        %3747 = vmatpush1.bf16.msra.mxu0 0
        %3748 = vmatprep.subr.bf16.mxu0 0
        %3749 = vmatpush1.bf16.msra.mxu0 %v3520
        %3750 = vmatprep.subr.bf16.mxu0 0
        %3751 = vmatpush1.bf16.msra.mxu0 %v3517
        %3752 = vmatprep.subr.bf16.mxu0 0
        %3753 = vmatpush2.bf16.msra.mxu0 0
        %3754 = vmatprep.subr.bf16.mxu0 0
        %3755 = vmatpush2.bf16.msra.mxu0 0
        %3756 = vmatprep.subr.bf16.mxu0 0
        %3757 = vmatpush2.bf16.msra.mxu0 0
        %3758 = vmatprep.subr.bf16.mxu0 0
        %3759 = vmatpush2.bf16.msra.mxu0 0
        %3760 = vmatprep.subr.bf16.mxu0 0
        %3761 = vmatpush2.bf16.msra.mxu0 0
        %3762 = vmatprep.subr.bf16.mxu0 0
        %3763 = vmatpush2.bf16.msra.mxu0 0
        %3764 = vmatprep.subr.bf16.mxu0 0
        %3765 = vmatpush2.bf16.msra.mxu0 0
        %3766 = vmatprep.subr.bf16.mxu0 0
        %3767 = vmatpush2.bf16.msra.mxu0 0
        %3768 = vmatprep.mubr.bf16.mxu0 0
        %3769 = vmatmul.mubr.bf16.gmra.mxu0 %v3576
        %v3770 = vpop.f32.mrf.mxu0
        %v3771 = vadd.f32 %v3722, %v3770
        %v3772 = vpop.f32.mrf.mxu0
        %v3773 = vpop.f32.mrf.mxu0
        %v3774 = vadd.f32 %v3725, %v3773
        %v3775 = vpop.f32.mrf.mxu0
        %3776 = vmatprep.mubr.bf16.mxu0 0
        %3777 = vmatmul.mubr.bf16.gmra.mxu0 %v3579
        %v3778 = vpop.f32.mrf.mxu0
        %v3779 = vadd.f32 %v3730, %v3778
        %v3780 = vpop.f32.mrf.mxu0
        %v3781 = vpop.f32.mrf.mxu0
        %v3782 = vadd.f32 %v3733, %v3781
        %v3783 = vpop.f32.mrf.mxu0
        %3784 = vdwg.mxu0
        %v3785 = vmax.f32 %v3669, 0.0
        %v3786 = vmax.f32 %v3671, 0.0
        %v3787 = vmax.f32 %v3771, 0.0
        %v3788 = vmax.f32 %v3673, 0.0
        %v3789 = vmax.f32 %v3675, 0.0
        %v3790 = vmax.f32 %v3774, 0.0
        %v3791 = vmax.f32 %v3679, 0.0
        %v3792 = vmax.f32 %v3681, 0.0
        %v3793 = vmax.f32 %v3779, 0.0
        %v3794 = vmax.f32 %v3683, 0.0
        %v3795 = vmax.f32 %v3685, 0.0
        %v3796 = vmax.f32 %v3782, 0.0
        %v3798 = vlaneseq
        %v3799 = vshrl.u32 %v3798, 7
        %v3800 = vsub.s32 0, %v3799
        %v3801 = vrot.slane %v327, %v3800
        %v3802 = vlaneseq
        %v3803 = vshrl.u32 %v3802, 7
        %v3804 = vsub.s32 1, %v3803
        %v3805 = vrot.slane %v327, %v3804
        %v3806 = vlaneseq
        %v3807 = vshrl.u32 %v3806, 7
        %v3808 = vsub.s32 2, %v3807
        %v3809 = vrot.slane %v327, %v3808
        %v3813 = vmul.f32 %v3785, %v3801
        %v3814 = vmul.f32 %v3786, %v3805
        %v3815 = vmul.f32 %v3787, %v3809
        %v3816 = vmul.f32 %v3788, %v3801
        %v3817 = vmul.f32 %v3789, %v3805
        %v3818 = vmul.f32 %v3790, %v3809
        %v3819 = vmul.f32 %v3791, %v3801
        %v3820 = vmul.f32 %v3792, %v3805
        %v3821 = vmul.f32 %v3793, %v3809
        %v3822 = vmul.f32 %v3794, %v3801
        %v3823 = vmul.f32 %v3795, %v3805
        %v3824 = vmul.f32 %v3796, %v3809
        %3825 = vset.pattern.permute.xlu0 3
        %3826 = vperm.xlu0 %3825, %v320
        %v3827 = vpop.permute.xlu0 %3826
        %3829 = vset.pattern.permute.xlu0 3
        %3830 = vperm.xlu0 %3829, %v321
        %v3831 = vpop.permute.xlu0 %3830
        %3833 = vset.pattern.permute.xlu0 3
        %3834 = vperm.xlu0 %3833, %v322
        %v3835 = vpop.permute.xlu0 %3834
        %3837 = vset.pattern.permute.xlu0 3
        %3838 = vperm.xlu0 %3837, %v323
        %v3839 = vpop.permute.xlu0 %3838
        %v3841 = vmul.f32 %v3813, %v3827
        %v3842 = vmul.f32 %v3814, %v3827
        %v3843 = vmul.f32 %v3815, %v3827
        %v3844 = vmul.f32 %v3816, %v3831
        %v3845 = vmul.f32 %v3817, %v3831
        %v3846 = vmul.f32 %v3818, %v3831
        %v3847 = vmul.f32 %v3819, %v3835
        %v3848 = vmul.f32 %v3820, %v3835
        %v3849 = vmul.f32 %v3821, %v3835
        %v3850 = vmul.f32 %v3822, %v3839
        %v3851 = vmul.f32 %v3823, %v3839
        %v3852 = vmul.f32 %v3824, %v3839
        %v3853 = vadd.f32 %v3841, %v3844
        %v3854 = vadd.f32 %v3853, %v3847
        %v3855 = vadd.f32 %v3854, %v3850
        %v3856 = vrot.slane %v3855, 4
        %v3857 = vadd.f32 %v3855, %v3856
        %v3858 = vrot.slane %v3857, 2
        %v3859 = vadd.f32 %v3857, %v3858
        %v3860 = vrot.slane %v3859, 1
        %v3861 = vadd.f32 %v3859, %v3860
        %v3862 = vadd.f32 %v3842, %v3845
        %v3863 = vadd.f32 %v3862, %v3848
        %v3864 = vadd.f32 %v3863, %v3851
        %v3865 = vrot.slane %v3864, 4
        %v3866 = vadd.f32 %v3864, %v3865
        %v3867 = vrot.slane %v3866, 2
        %v3868 = vadd.f32 %v3866, %v3867
        %v3869 = vrot.slane %v3868, 1
        %v3870 = vadd.f32 %v3868, %v3869
        %v3871 = vadd.f32 %v3843, %v3846
        %v3872 = vadd.f32 %v3871, %v3849
        %v3873 = vadd.f32 %v3872, %v3852
        %v3874 = vrot.slane %v3873, 4
        %v3875 = vadd.f32 %v3873, %v3874
        %v3876 = vrot.slane %v3875, 2
        %v3877 = vadd.f32 %v3875, %v3876
        %v3878 = vrot.slane %v3877, 1
        %v3879 = vadd.f32 %v3877, %v3878
        %3881 = vset.pattern.permute.xlu0 4
        %3882 = vperm.xlu0 %3881, %v324
        %v3883 = vpop.permute.xlu0 %3882
        %v3885 = vadd.f32 %v3861, %v3883
        %v3886 = vadd.f32 %v3870, %v3883
        %v3887 = vadd.f32 %v3879, %v3883
        %v3888 = vxor.u32 %v3885, 2147483648
        %v3889 = vxor.u32 %v3886, 2147483648
        %v3890 = vxor.u32 %v3887, 2147483648
        %v3891 = vmul.f32 %v3888, 1.442695
        %v3892 = vpow.pop %v3891
        %v3893 = vmul.f32 %v3889, 1.442695
        %v3894 = vpow.pop %v3893
        %v3895 = vmul.f32 %v3890, 1.442695
        %v3896 = vpow.pop %v3895
        %v3897 = vadd.f32 %v3892, 1.0
        %v3898 = vadd.f32 %v3894, 1.0
        %v3899 = vadd.f32 %v3896, 1.0
        %v3900 = vrcp.pop %v3897
        %v3901 = vmul.f32 1.0, %v3900
        %v3902 = vrcp.pop %v3898
        %v3903 = vmul.f32 1.0, %v3902
        %v3904 = vrcp.pop %v3899
        %v3905 = vmul.f32 1.0, %v3904
        %v3907 = vlaneseq
        %v3908 = vshrl.u32 %v3907, 7
        %v3909 = vsub.s32 0, %v3908
        %v3910 = vrot.slane %v329, %v3909
        %v3911 = vlaneseq
        %v3912 = vshrl.u32 %v3911, 7
        %v3913 = vsub.s32 1, %v3912
        %v3914 = vrot.slane %v329, %v3913
        %v3915 = vlaneseq
        %v3916 = vshrl.u32 %v3915, 7
        %v3917 = vsub.s32 2, %v3916
        %v3918 = vrot.slane %v329, %v3917
        %v3922 = vmul.f32 %v3901, %v3910
        %v3923 = vmul.f32 %v3903, %v3914
        %v3924 = vmul.f32 %v3905, %v3918
        %v3928 = vcombine.low %v3922, %v3923
        %v3930 = vunpack.c.l.s4 1966171168
        %v3931 = vunpack.c.0.s8 %v3930
        %v3932 = vlaneseq
        %v3933 = vshrl.u32 %v3932, 7
        %v3934 = vsub.s32 %v3931, %v3933
        %v3935 = vrot.slane %v3928, %v3934
        %v3937 = vunpack.c.l.s4 1966171168
        %v3938 = vunpack.c.0.s8 %v3937
        %v3939 = vlaneseq
        %v3940 = vshrl.u32 %v3939, 7
        %v3941 = vsub.s32 %v3938, %v3940
        %v3942 = vrot.slane %v3924, %v3941
        %v3943 = vcombine.low %v3935, %v3942
        %v3945 = vunpack.c.l.s4 1966171168
        %v3946 = vunpack.c.0.s8 %v3945
        %v3947 = vlaneseq
        %v3948 = vshrl.u32 %v3947, 7
        %v3949 = vsub.s32 %v3946, %v3948
        %v3950 = vrot.slane %v3943, %v3949
        %v3952 = vlaneseq
        %vm3953 = vcmp.ge.s32.totalorder %v3952, 0
        %vm3954 = vcmp.lt.s32.totalorder %v3952, 384
        %vm3955 = vmand %vm3953, %vm3954
        %3956 = vst.msk [vmem:[%s313] sm:$0x7] %vm3955, %v3950
        %s3957 = sand.u32 %s204, 1
        %s3958 = scalar_lea.sflag [#allocation9], %s3957
        %s3959 = sand.u32 %s204, 1
        %s3960 = smul.addr %s3959, 3
        %s3961 = scalar_lea.vmem [#allocation10], %s3960
        // Predicated region
        $region57: #{tpu_custom_call.1} parent=51 // pred_check
          %p3962 = pneg %p214
        $region58: #{tpu_custom_call.1} parent=51 // pred_check_branch
          %3964 = sbr.rel (%p3962) target = $region60
        $region59: #{tpu_custom_call.1} parent=51 // pred_region
          %s3966 = ssub.s32 48, 48
          %3967 = vsyncadd %s3958, %s3966
          %s3968 = smul.addr %s23, 3
          %s3969 = smul.addr %s3968, 16
          %s3970 = scalar_lea.hbm %s8, %s3969
          %s3972 = sshll.u32 %s3961, 4
          %s3973 = int_to_ptr.vmem [resolvable:$true] %s3972
          %3975 = dma.vmem_to_hbm [thread:$0]  %s3973, 48, %s3970, %s3958
        $region60: #{tpu_custom_call.1} parent=51 // pred_fallthru
          _
      $region52: #{tpu_custom_call.1} parent=5 // pred_fallthru
        _
      %p3976 = scmp.le.s32.totalorder 2, %s18
      // Predicated region
      $region61: #{tpu_custom_call.1} parent=5 // pred_check
        %p3977 = pneg %p3976
      $region62: #{tpu_custom_call.1} parent=5 // pred_check_branch
        %3979 = sbr.rel (%p3977) target = $region64
      $region63: #{tpu_custom_call.1} parent=5 // pred_region
        %s3980 = ssub.s32 %s18, 2
        // Predicated region
        $region65: #{tpu_custom_call.1} parent=63 // pred_check
          %p3981 = pneg %p220
        $region66: #{tpu_custom_call.1} parent=63 // pred_check_branch
          %3983 = sbr.rel (%p3981) target = $region68
        $region67: #{tpu_custom_call.1} parent=63 // pred_region
          %s3984 = sand.u32 %s205, 1
          %s3985 = scalar_lea.sflag [#allocation9], %s3984
          %s3986 = sand.u32 %s205, 1
          %s3987 = smul.addr %s3986, 3
          %s3988 = scalar_lea.vmem [#allocation10], %s3987
          %3989 = dma.done %s3985, 48
        $region68: #{tpu_custom_call.1} parent=63 // pred_fallthru
          _
      $region64: #{tpu_custom_call.1} parent=5 // pred_fallthru
        _
    $region6: #{tpu_custom_call.1} parent=1 // loop_footer
      %s22 = sadd.s32 1, %s18
    $region7: #{tpu_custom_call.1} parent=1 // loop_footer_branch
      %17 = sbr.rel target = $region3
    $region8: #{tpu_custom_call.1} parent=1 // loop_exit
      _
    %3990 = vsyncpa [#allocation8], 1
    %s3991 = scalar_lea.sflag [#allocation8], 1
    %3992 = vsyncpa %s3991, 1
    %3993 = vsyncpa [#allocation9], 1
    %s3994 = scalar_lea.sflag [#allocation9], 1
    %3995 = vsyncpa %s3994, 1

</llo_original>
